<compile_context>
chip_gen: v7x
topology: tpu7x:2x2x1
jax: 0.10.0
libtpu: 0.0.40
codegen_flags: <defaults>
</compile_context>

<pallas_src>
import math

import numpy as np
import jax
import jax.numpy as jnp
from jax.experimental import pallas as pl
from jax.experimental.pallas import tpu as pltpu

# ---- small config consistent with the module ----
BATCH = 2
NUM_IMAGES = 2
IN_CH = NUM_IMAGES * 3                       # 6
H = W = 16
PATCH = 8
NUM_PATCHES = (H // PATCH) * (W // PATCH)    # 4
CPP = 3 * PATCH * PATCH                      # 192 features per patch
PROJ_DIM = 128
NUM_HEADS = 4
HEAD_DIM = PROJ_DIM // NUM_HEADS             # 32
NUM_LAYERS = 2
MLP_DIM = 128

GROUPS = NUM_IMAGES * BATCH                  # independent attention groups
ROWS = GROUPS * NUM_PATCHES                  # 16 : all tokens (img,batch folded into M)
BN = BATCH * NUM_PATCHES                     # 8  : tokens per image
HROWS = NUM_HEADS * ROWS                     # 64 : heads stacked on sublanes


# ------------------------------------------------------------------
# The single fused kernel
# ------------------------------------------------------------------
def _vit_kernel(patches_ref, pew_ref, posb_ref, mask_ref,
                wqkv_ref, bqkv_ref, wo_ref, bo_ref,
                w1_ref, b1_ref, w2_ref, b2_ref, mean_ref,
                out_ref, aw_ref, qkv_s):
    f32, bf16 = jnp.float32, jnp.bfloat16
    dh = HEAD_DIM
    inv_heads = jnp.float32(1.0 / NUM_HEADS)

    # ---- patch embedding + (pos enc + conv bias) -> rows = (image, batch, patch)
    embeds = []
    for i in range(NUM_IMAGES):
        e = jnp.dot(patches_ref[i], pew_ref[i], preferred_element_type=f32)
        embeds.append(e + posb_ref[i])                           # (BN, D) f32
    x = jnp.concatenate(embeds, axis=0)                          # (ROWS, D) f32

    # ---- transformer layers (only self_attn is used by the reference) -------
    for l in range(NUM_LAYERS):
        xb = x.astype(bf16)

        # fused per-head QKV projection (scale already folded into q weights);
        # results land heads-on-sublanes in VMEM scratch (no concatenates).
        for h in range(NUM_HEADS):
            qkv_s[h * ROWS:(h + 1) * ROWS, :] = (
                jnp.dot(xb, wqkv_ref[l, h], preferred_element_type=f32)
                + bqkv_ref[l, h])
        qkv = qkv_s[...]                                         # (HROWS, 3*dh) f32
        qs = qkv[:, 0:dh]
        ks = qkv[:, dh:2 * dh]
        vs = qkv[:, 2 * dh:3 * dh]

        # one masked score matmul for all heads/images/batches
        s = jnp.dot(qs, ks.T, preferred_element_type=f32) + mask_ref[...]
        s = s - jnp.max(s, axis=-1, keepdims=True)
        p = jnp.exp(s)
        p = p / jnp.sum(p, axis=-1, keepdims=True)               # exact softmax

        ctx = jnp.dot(p, vs, preferred_element_type=f32)         # (HROWS, dh)

        # out-projection: contiguous accumulating dot chain (== concat(heads)@Wo)
        out = bo_ref[l] + jnp.dot(ctx[0:ROWS, :].astype(bf16), wo_ref[l, 0],
                                  preferred_element_type=f32)
        for h in range(1, NUM_HEADS):
            out = out + jnp.dot(ctx[h * ROWS:(h + 1) * ROWS, :].astype(bf16),
                                wo_ref[l, h], preferred_element_type=f32)
        x = out                                                  # (ROWS, D) f32

        # head-averaged attention weights: one (16,16) slab per layer; the
        # per-(image,batch) 4x4 diagonal blocks are extracted on the host.
        p_avg = p[0:ROWS, 0:ROWS]
        for h in range(1, NUM_HEADS):
            p_avg = p_avg + p[h * ROWS:(h + 1) * ROWS, h * ROWS:(h + 1) * ROWS]
        aw_ref[l] = p_avg * inv_heads

    # ---- head: concat over images, mean over patches, Linear->ReLU->Linear --
    t = jnp.dot(x[0:BN, :].astype(bf16), w1_ref[0], preferred_element_type=f32)
    for i in range(1, NUM_IMAGES):
        t = t + jnp.dot(x[i * BN:(i + 1) * BN, :].astype(bf16), w1_ref[i],
                        preferred_element_type=f32)              # (BN, MLP)
    hid = jnp.dot(mean_ref[...], t, preferred_element_type=f32) + b1_ref[...]
    hid = jnp.maximum(hid, 0.0)                                  # (B, MLP)
    out_ref[...] = jnp.sum(hid * w2_ref[...], axis=-1, keepdims=True) + b2_ref[...]


def _fused_forward(kp, patches):
    vmem = pl.BlockSpec(memory_space=pltpu.MemorySpace.VMEM)
    inputs = (patches, kp["pe_w"], kp["posb"], kp["mask"],
              kp["wqkv"], kp["bqkv"], kp["wo"], kp["bo"],
              kp["w1"], kp["b1"], kp["w2"], kp["b2"], kp["mean"])
    out_shape = (
        jax.ShapeDtypeStruct((BATCH, 1), jnp.float32),
        jax.ShapeDtypeStruct((NUM_LAYERS, ROWS, ROWS), jnp.float32),
    )
    return pl.pallas_call(
        _vit_kernel,
        out_shape=out_shape,
        in_specs=[vmem] * len(inputs),
        out_specs=(vmem, vmem),
        scratch_shapes=[pltpu.VMEM((HROWS, 3 * HEAD_DIM), jnp.float32)],
    )(*inputs)


# ------------------------------------------------------------------
# Plain-JAX layout plumbing: patch extraction + parameter preparation
# ------------------------------------------------------------------
def extract_patches(img, p):
    # img: (B, C, H, W) -> (B, num_patches, C*p*p), patch idx = hp*Wp + wp
    B, C, Hh, Ww = img.shape
    img = img.reshape(B, C, Hh // p, p, Ww // p, p)
    img = jnp.transpose(img, (0, 2, 4, 1, 3, 5))                 # (B,Hp,Wp,C,p,p)
    return img.reshape(B, (Hh // p) * (Ww // p), C * p * p)


def _nrm(key, shape, scale=0.02):
    return scale * jax.random.normal(key, shape, dtype=jnp.float32)


def init_params(key):
    # PyTorch-layout parameters (Conv2d weight, in_proj_weight/bias, out_proj,
    # nn.Linear weights) -- same structure as the reference module.
    D = PROJ_DIM
    keys = jax.random.split(key, 2 * NUM_IMAGES + 1 + 4 * NUM_LAYERS + 4)
    ki = iter(keys)
    params = {"pe_w": [], "pe_b": [], "layers": []}
    for _ in range(NUM_IMAGES):
        params["pe_w"].append(_nrm(next(ki), (D, 3, PATCH, PATCH)))
        params["pe_b"].append(_nrm(next(ki), (D,)))
    params["pos"] = _nrm(next(ki), (1, NUM_PATCHES, D))
    for _ in range(NUM_LAYERS):
        params["layers"].append(dict(
            in_proj_weight=_nrm(next(ki), (3 * D, D)),
            in_proj_bias=_nrm(next(ki), (3 * D,)),
            out_proj_weight=_nrm(next(ki), (D, D)),
            out_proj_bias=_nrm(next(ki), (D,))))
    params["w1"] = _nrm(next(ki), (MLP_DIM, D * NUM_IMAGES))
    params["b1"] = _nrm(next(ki), (MLP_DIM,))
    params["w2"] = _nrm(next(ki), (1, MLP_DIM))
    params["b2"] = _nrm(next(ki), (1,))
    return params


def prepare_params(params):
    # One-time conversion to kernel-ready layouts: fused per-head QKV weights
    # with the 1/sqrt(dh) scale folded in, bf16 weight storage, pre-added
    # positional/conv bias, precomputed additive mask and mean matrix.
    D, dh = PROJ_DIM, HEAD_DIM
    bf16 = jnp.bfloat16
    scale = 1.0 / math.sqrt(dh)

    pe_w = jnp.stack([w.reshape(D, -1).T for w in params["pe_w"]]).astype(bf16)  # (I,CPP,D)
    pos = jnp.tile(params["pos"][0], (BATCH, 1))                                  # (BN, D)
    posb = jnp.stack([pos + b.reshape(1, D) for b in params["pe_b"]])             # (I,BN,D)

    wqkv_l, bqkv_l, wo_l, bo_l = [], [], [], []
    for lp in params["layers"]:
        ipw, ipb = lp["in_proj_weight"], lp["in_proj_bias"]
        wq, wk, wv = ipw[:D].T * scale, ipw[D:2 * D].T, ipw[2 * D:].T   # (D, D)
        bq, bk, bv = ipb[:D] * scale, ipb[D:2 * D], ipb[2 * D:]
        wqkv_l.append(jnp.stack(
            [jnp.concatenate([wq[:, h * dh:(h + 1) * dh],
                              wk[:, h * dh:(h + 1) * dh],
                              wv[:, h * dh:(h + 1) * dh]], axis=1)
             for h in range(NUM_HEADS)]))                               # (H, D, 3dh)
        bqkv_l.append(jnp.stack(
            [jnp.concatenate([bq[h * dh:(h + 1) * dh],
                              bk[h * dh:(h + 1) * dh],
                              bv[h * dh:(h + 1) * dh]]).reshape(1, 3 * dh)
             for h in range(NUM_HEADS)]))                               # (H, 1, 3dh)
        wo_t = lp["out_proj_weight"].T                                   # (D, D)
        wo_l.append(jnp.stack([wo_t[h * dh:(h + 1) * dh] for h in range(NUM_HEADS)]))
        bo_l.append(lp["out_proj_bias"].reshape(1, D))

    wqkv = jnp.stack(wqkv_l).astype(bf16)          # (L, H, D, 3dh)
    bqkv = jnp.stack(bqkv_l)                       # (L, H, 1, 3dh) f32
    wo = jnp.stack(wo_l).astype(bf16)              # (L, H, dh, D)
    bo = jnp.stack(bo_l)                           # (L, 1, D) f32

    w1t = params["w1"].T                                                  # (D*I, MLP)
    w1 = jnp.stack([w1t[i * D:(i + 1) * D] for i in range(NUM_IMAGES)]).astype(bf16)
    mean = jnp.repeat(jnp.eye(BATCH, dtype=jnp.float32),
                      NUM_PATCHES, axis=1) / NUM_PATCHES                  # (B, BN)

    # block-diagonal additive mask: attend only within same (head, image, batch)
    idx = np.arange(HROWS) // NUM_PATCHES
    mask = jnp.asarray(np.where(idx[:, None] == idx[None, :], 0.0, -1e30),
                       dtype=jnp.float32)                                 # (64, 64)

    return dict(pe_w=pe_w, posb=posb, mask=mask,
                wqkv=wqkv, bqkv=bqkv, wo=wo, bo=bo,
                w1=w1, b1=params["b1"].reshape(1, MLP_DIM),
                w2=params["w2"].reshape(1, MLP_DIM),
                b2=params["b2"].reshape(1, 1), mean=mean)


@jax.jit
def _vit_forward_device(x, kp):
    patch_list = []
    for i in range(NUM_IMAGES):
        img = x[:, i * 3:(i + 1) * 3]
        patch_list.append(extract_patches(img, PATCH).reshape(BN, CPP))
    patches = jnp.stack(patch_list).astype(jnp.bfloat16)         # (I, B*N, CPP)
    return _fused_forward(kp, patches)                           # (output, aw_all)


def vit_forward(x, kp):
    output, aw_all = _vit_forward_device(x, kp)
    # Host-side extraction of per-(image,batch) 4x4 diagonal blocks (free
    # relative to the kernel; keeps the device program at a single launch).
    aw_np = np.asarray(jax.device_get(aw_all))                   # (L, 16, 16)
    attention_weights = []
    for l in range(NUM_LAYERS):
        per_layer = []
        for i in range(NUM_IMAGES):
            blocks = []
            for b in range(BATCH):
                g = i * BATCH + b
                sl = slice(g * NUM_PATCHES, (g + 1) * NUM_PATCHES)
                blocks.append(aw_np[l, sl, sl])
            per_layer.append(np.stack(blocks))                   # (B, N, N)
        attention_weights.append(per_layer)
    return output, attention_weights


if __name__ == "__main__":
    root = jax.random.PRNGKey(0)
    pkey, xkey = jax.random.split(root)
    params = init_params(pkey)
    kparams = prepare_params(params)
    x = jax.random.normal(xkey, (BATCH, IN_CH, H, W), dtype=jnp.float32)

    output, attn_weights = vit_forward(x, kparams)
    output = jax.block_until_ready(output)

    assert output.shape == (BATCH, 1)
    assert len(attn_weights) == NUM_LAYERS and len(attn_weights[0]) == NUM_IMAGES
    assert attn_weights[0][0].shape == (BATCH, NUM_PATCHES, NUM_PATCHES)
    print("KERNEL_OK")
</pallas_src>

<mosaic_0001>
module attributes {stable_mosaic.version = 11 : i64} {
  func.func @_vit_kernel(%arg0: memref<2x8x192xbf16, #tpu.memory_space<vmem>>, %arg1: memref<2x192x128xbf16, #tpu.memory_space<vmem>>, %arg2: memref<2x8x128xf32, #tpu.memory_space<vmem>>, %arg3: memref<64x64xf32, #tpu.memory_space<vmem>>, %arg4: memref<2x4x128x96xbf16, #tpu.memory_space<vmem>>, %arg5: memref<2x4x1x96xf32, #tpu.memory_space<vmem>>, %arg6: memref<2x4x32x128xbf16, #tpu.memory_space<vmem>>, %arg7: memref<2x1x128xf32, #tpu.memory_space<vmem>>, %arg8: memref<2x128x128xbf16, #tpu.memory_space<vmem>>, %arg9: memref<1x128xf32, #tpu.memory_space<vmem>>, %arg10: memref<1x128xf32, #tpu.memory_space<vmem>>, %arg11: memref<1x1xf32, #tpu.memory_space<vmem>>, %arg12: memref<2x8xf32, #tpu.memory_space<vmem>>, %arg13: memref<2x1xf32, #tpu.memory_space<vmem>>, %arg14: memref<2x16x16xf32, #tpu.memory_space<vmem>>, %arg15: memref<64x96xf32, #tpu.memory_space<vmem>>) attributes {dimension_semantics = [], scalar_prefetch = 0 : i64, scratch_operands = 1 : i64, tpu.core_type = #tpu.core_type<tc>} {
    %c0 = arith.constant 0 : index
    %c0_0 = arith.constant 0 : index
    %c0_1 = arith.constant 0 : index
    %0 = vector.load %arg0[%c0, %c0_0, %c0_1] : memref<2x8x192xbf16, #tpu.memory_space<vmem>>, vector<1x8x192xbf16>
    %1 = vector.shape_cast %0 : vector<1x8x192xbf16> to vector<8x192xbf16>
    %c0_2 = arith.constant 0 : index
    %c0_3 = arith.constant 0 : index
    %c0_4 = arith.constant 0 : index
    %2 = vector.load %arg1[%c0_2, %c0_3, %c0_4] : memref<2x192x128xbf16, #tpu.memory_space<vmem>>, vector<1x192x128xbf16>
    %3 = vector.shape_cast %2 : vector<1x192x128xbf16> to vector<192x128xbf16>
    %cst = arith.constant dense<0.000000e+00> : vector<8x128xf32>
    %4 = tpu.matmul %1, %3, %cst {dimension_numbers = #tpu.dot_dimension_numbers<[1], [0], [0], [1], [0, 0, 1, 1], [], []>} : vector<8x192xbf16>, vector<192x128xbf16>, vector<8x128xf32> -> vector<8x128xf32>
    %c0_5 = arith.constant 0 : index
    %c0_6 = arith.constant 0 : index
    %c0_7 = arith.constant 0 : index
    %5 = vector.load %arg2[%c0_5, %c0_6, %c0_7] : memref<2x8x128xf32, #tpu.memory_space<vmem>>, vector<1x8x128xf32>
    %6 = vector.shape_cast %5 : vector<1x8x128xf32> to vector<8x128xf32>
    %7 = arith.addf %4, %6 : vector<8x128xf32>
    %c1 = arith.constant 1 : index
    %c0_8 = arith.constant 0 : index
    %c0_9 = arith.constant 0 : index
    %8 = vector.load %arg0[%c1, %c0_8, %c0_9] : memref<2x8x192xbf16, #tpu.memory_space<vmem>>, vector<1x8x192xbf16>
    %9 = vector.shape_cast %8 : vector<1x8x192xbf16> to vector<8x192xbf16>
    %c1_10 = arith.constant 1 : index
    %c0_11 = arith.constant 0 : index
    %c0_12 = arith.constant 0 : index
    %10 = vector.load %arg1[%c1_10, %c0_11, %c0_12] : memref<2x192x128xbf16, #tpu.memory_space<vmem>>, vector<1x192x128xbf16>
    %11 = vector.shape_cast %10 : vector<1x192x128xbf16> to vector<192x128xbf16>
    %cst_13 = arith.constant dense<0.000000e+00> : vector<8x128xf32>
    %12 = tpu.matmul %9, %11, %cst_13 {dimension_numbers = #tpu.dot_dimension_numbers<[1], [0], [0], [1], [0, 0, 1, 1], [], []>} : vector<8x192xbf16>, vector<192x128xbf16>, vector<8x128xf32> -> vector<8x128xf32>
    %c1_14 = arith.constant 1 : index
    %c0_15 = arith.constant 0 : index
    %c0_16 = arith.constant 0 : index
    %13 = vector.load %arg2[%c1_14, %c0_15, %c0_16] : memref<2x8x128xf32, #tpu.memory_space<vmem>>, vector<1x8x128xf32>
    %14 = vector.shape_cast %13 : vector<1x8x128xf32> to vector<8x128xf32>
    %15 = arith.addf %12, %14 : vector<8x128xf32>
    %16 = tpu.concatenate %7, %15 in 0 : vector<8x128xf32>, vector<8x128xf32> -> vector<16x128xf32>
    %17 = arith.truncf %16 : vector<16x128xf32> to vector<16x128xbf16>
    %c0_17 = arith.constant 0 : index
    %c0_18 = arith.constant 0 : index
    %c0_19 = arith.constant 0 : index
    %c0_20 = arith.constant 0 : index
    %18 = vector.load %arg4[%c0_17, %c0_18, %c0_19, %c0_20] : memref<2x4x128x96xbf16, #tpu.memory_space<vmem>>, vector<1x1x128x96xbf16>
    %19 = vector.shape_cast %18 : vector<1x1x128x96xbf16> to vector<128x96xbf16>
    %cst_21 = arith.constant dense<0.000000e+00> : vector<16x96xf32>
    %20 = tpu.matmul %17, %19, %cst_21 {dimension_numbers = #tpu.dot_dimension_numbers<[1], [0], [0], [1], [0, 0, 1, 1], [], []>} : vector<16x128xbf16>, vector<128x96xbf16>, vector<16x96xf32> -> vector<16x96xf32>
    %c0_22 = arith.constant 0 : index
    %c0_23 = arith.constant 0 : index
    %c0_24 = arith.constant 0 : index
    %c0_25 = arith.constant 0 : index
    %21 = vector.load %arg5[%c0_22, %c0_23, %c0_24, %c0_25] : memref<2x4x1x96xf32, #tpu.memory_space<vmem>>, vector<1x1x1x96xf32>
    %22 = vector.shape_cast %21 : vector<1x1x1x96xf32> to vector<1x96xf32>
    %23 = vector.broadcast %22 : vector<1x96xf32> to vector<16x96xf32>
    %24 = arith.addf %20, %23 : vector<16x96xf32>
    %c0_26 = arith.constant 0 : index
    %c0_27 = arith.constant 0 : index
    %25 = vector.load %arg15[%c0_26, %c0_27] : memref<64x96xf32, #tpu.memory_space<vmem>>, vector<16x96xf32>
    tpu.vector_store %arg15[%c0_26, %c0_27], %24 {strides = array<i32>} : memref<64x96xf32, #tpu.memory_space<vmem>>, vector<16x96xf32>,
    %c0_28 = arith.constant 0 : index
    %c1_29 = arith.constant 1 : index
    %c0_30 = arith.constant 0 : index
    %c0_31 = arith.constant 0 : index
    %26 = vector.load %arg4[%c0_28, %c1_29, %c0_30, %c0_31] : memref<2x4x128x96xbf16, #tpu.memory_space<vmem>>, vector<1x1x128x96xbf16>
    %27 = vector.shape_cast %26 : vector<1x1x128x96xbf16> to vector<128x96xbf16>
    %cst_32 = arith.constant dense<0.000000e+00> : vector<16x96xf32>
    %28 = tpu.matmul %17, %27, %cst_32 {dimension_numbers = #tpu.dot_dimension_numbers<[1], [0], [0], [1], [0, 0, 1, 1], [], []>} : vector<16x128xbf16>, vector<128x96xbf16>, vector<16x96xf32> -> vector<16x96xf32>
    %c0_33 = arith.constant 0 : index
    %c1_34 = arith.constant 1 : index
    %c0_35 = arith.constant 0 : index
    %c0_36 = arith.constant 0 : index
    %29 = vector.load %arg5[%c0_33, %c1_34, %c0_35, %c0_36] : memref<2x4x1x96xf32, #tpu.memory_space<vmem>>, vector<1x1x1x96xf32>
    %30 = vector.shape_cast %29 : vector<1x1x1x96xf32> to vector<1x96xf32>
    %31 = vector.broadcast %30 : vector<1x96xf32> to vector<16x96xf32>
    %32 = arith.addf %28, %31 : vector<16x96xf32>
    %c16 = arith.constant 16 : index
    %c0_37 = arith.constant 0 : index
    %33 = vector.load %arg15[%c16, %c0_37] : memref<64x96xf32, #tpu.memory_space<vmem>>, vector<16x96xf32>
    tpu.vector_store %arg15[%c16, %c0_37], %32 {strides = array<i32>} : memref<64x96xf32, #tpu.memory_space<vmem>>, vector<16x96xf32>,
    %c0_38 = arith.constant 0 : index
    %c2 = arith.constant 2 : index
    %c0_39 = arith.constant 0 : index
    %c0_40 = arith.constant 0 : index
    %34 = vector.load %arg4[%c0_38, %c2, %c0_39, %c0_40] : memref<2x4x128x96xbf16, #tpu.memory_space<vmem>>, vector<1x1x128x96xbf16>
    %35 = vector.shape_cast %34 : vector<1x1x128x96xbf16> to vector<128x96xbf16>
    %cst_41 = arith.constant dense<0.000000e+00> : vector<16x96xf32>
    %36 = tpu.matmul %17, %35, %cst_41 {dimension_numbers = #tpu.dot_dimension_numbers<[1], [0], [0], [1], [0, 0, 1, 1], [], []>} : vector<16x128xbf16>, vector<128x96xbf16>, vector<16x96xf32> -> vector<16x96xf32>
    %c0_42 = arith.constant 0 : index
    %c2_43 = arith.constant 2 : index
    %c0_44 = arith.constant 0 : index
    %c0_45 = arith.constant 0 : index
    %37 = vector.load %arg5[%c0_42, %c2_43, %c0_44, %c0_45] : memref<2x4x1x96xf32, #tpu.memory_space<vmem>>, vector<1x1x1x96xf32>
    %38 = vector.shape_cast %37 : vector<1x1x1x96xf32> to vector<1x96xf32>
    %39 = vector.broadcast %38 : vector<1x96xf32> to vector<16x96xf32>
    %40 = arith.addf %36, %39 : vector<16x96xf32>
    %c32 = arith.constant 32 : index
    %c0_46 = arith.constant 0 : index
    %41 = vector.load %arg15[%c32, %c0_46] : memref<64x96xf32, #tpu.memory_space<vmem>>, vector<16x96xf32>
    tpu.vector_store %arg15[%c32, %c0_46], %40 {strides = array<i32>} : memref<64x96xf32, #tpu.memory_space<vmem>>, vector<16x96xf32>,
    %c0_47 = arith.constant 0 : index
    %c3 = arith.constant 3 : index
    %c0_48 = arith.constant 0 : index
    %c0_49 = arith.constant 0 : index
    %42 = vector.load %arg4[%c0_47, %c3, %c0_48, %c0_49] : memref<2x4x128x96xbf16, #tpu.memory_space<vmem>>, vector<1x1x128x96xbf16>
    %43 = vector.shape_cast %42 : vector<1x1x128x96xbf16> to vector<128x96xbf16>
    %cst_50 = arith.constant dense<0.000000e+00> : vector<16x96xf32>
    %44 = tpu.matmul %17, %43, %cst_50 {dimension_numbers = #tpu.dot_dimension_numbers<[1], [0], [0], [1], [0, 0, 1, 1], [], []>} : vector<16x128xbf16>, vector<128x96xbf16>, vector<16x96xf32> -> vector<16x96xf32>
    %c0_51 = arith.constant 0 : index
    %c3_52 = arith.constant 3 : index
    %c0_53 = arith.constant 0 : index
    %c0_54 = arith.constant 0 : index
    %45 = vector.load %arg5[%c0_51, %c3_52, %c0_53, %c0_54] : memref<2x4x1x96xf32, #tpu.memory_space<vmem>>, vector<1x1x1x96xf32>
    %46 = vector.shape_cast %45 : vector<1x1x1x96xf32> to vector<1x96xf32>
    %47 = vector.broadcast %46 : vector<1x96xf32> to vector<16x96xf32>
    %48 = arith.addf %44, %47 : vector<16x96xf32>
    %c48 = arith.constant 48 : index
    %c0_55 = arith.constant 0 : index
    %49 = vector.load %arg15[%c48, %c0_55] : memref<64x96xf32, #tpu.memory_space<vmem>>, vector<16x96xf32>
    tpu.vector_store %arg15[%c48, %c0_55], %48 {strides = array<i32>} : memref<64x96xf32, #tpu.memory_space<vmem>>, vector<16x96xf32>,
    %c0_56 = arith.constant 0 : index
    %c0_57 = arith.constant 0 : index
    %50 = vector.load %arg15[%c0_56, %c0_57] : memref<64x96xf32, #tpu.memory_space<vmem>>, vector<64x96xf32>
    %51 = vector.extract_strided_slice %50 {offsets = [0, 0], sizes = [64, 32], strides = [1, 1]} : vector<64x96xf32> to vector<64x32xf32>
    %52 = vector.extract_strided_slice %50 {offsets = [0, 32], sizes = [64, 32], strides = [1, 1]} : vector<64x96xf32> to vector<64x32xf32>
    %53 = vector.extract_strided_slice %50 {offsets = [0, 64], sizes = [64, 32], strides = [1, 1]} : vector<64x96xf32> to vector<64x32xf32>
    %54 = tpu.transpose %52, [1, 0] : vector<64x32xf32> -> vector<32x64xf32>
    %cst_58 = arith.constant dense<0.000000e+00> : vector<64x64xf32>
    %55 = tpu.matmul %51, %54, %cst_58 {dimension_numbers = #tpu.dot_dimension_numbers<[1], [0], [0], [1], [0, 0, 1, 1], [], []>} : vector<64x32xf32>, vector<32x64xf32>, vector<64x64xf32> -> vector<64x64xf32>
    %c0_59 = arith.constant 0 : index
    %c0_60 = arith.constant 0 : index
    %56 = vector.load %arg3[%c0_59, %c0_60] : memref<64x64xf32, #tpu.memory_space<vmem>>, vector<64x64xf32>
    %57 = arith.addf %55, %56 : vector<64x64xf32>
    %cst_61 = arith.constant dense<0xFF800000> : vector<64xf32>
    %58 = vector.multi_reduction <maximumf>, %57, %cst_61 [1] : vector<64x64xf32> to vector<64xf32>
    %59 = vector.shape_cast %58 : vector<64xf32> to vector<64x1xf32>
    %60 = vector.broadcast %59 : vector<64x1xf32> to vector<64x64xf32>
    %61 = arith.subf %57, %60 : vector<64x64xf32>
    %62 = math.exp %61 : vector<64x64xf32>
    %cst_62 = arith.constant dense<0.000000e+00> : vector<64xf32>
    %63 = vector.multi_reduction <add>, %62, %cst_62 [1] : vector<64x64xf32> to vector<64xf32>
    %64 = vector.shape_cast %63 : vector<64xf32> to vector<64x1xf32>
    %65 = vector.broadcast %64 : vector<64x1xf32> to vector<64x64xf32>
    %66 = arith.divf %62, %65 : vector<64x64xf32>
    %cst_63 = arith.constant dense<0.000000e+00> : vector<64x32xf32>
    %67 = tpu.matmul %66, %53, %cst_63 {dimension_numbers = #tpu.dot_dimension_numbers<[1], [0], [0], [1], [0, 0, 1, 1], [], []>} : vector<64x64xf32>, vector<64x32xf32>, vector<64x32xf32> -> vector<64x32xf32>
    %c0_64 = arith.constant 0 : index
    %c0_65 = arith.constant 0 : index
    %c0_66 = arith.constant 0 : index
    %68 = vector.load %arg7[%c0_64, %c0_65, %c0_66] : memref<2x1x128xf32, #tpu.memory_space<vmem>>, vector<1x1x128xf32>
    %69 = vector.shape_cast %68 : vector<1x1x128xf32> to vector<1x128xf32>
    %70 = vector.extract_strided_slice %67 {offsets = [0, 0], sizes = [16, 32], strides = [1, 1]} : vector<64x32xf32> to vector<16x32xf32>
    %71 = arith.truncf %70 : vector<16x32xf32> to vector<16x32xbf16>
    %c0_67 = arith.constant 0 : index
    %c0_68 = arith.constant 0 : index
    %c0_69 = arith.constant 0 : index
    %c0_70 = arith.constant 0 : index
    %72 = vector.load %arg6[%c0_67, %c0_68, %c0_69, %c0_70] : memref<2x4x32x128xbf16, #tpu.memory_space<vmem>>, vector<1x1x32x128xbf16>
    %73 = vector.shape_cast %72 : vector<1x1x32x128xbf16> to vector<32x128xbf16>
    %cst_71 = arith.constant dense<0.000000e+00> : vector<16x128xf32>
    %74 = tpu.matmul %71, %73, %cst_71 {dimension_numbers = #tpu.dot_dimension_numbers<[1], [0], [0], [1], [0, 0, 1, 1], [], []>} : vector<16x32xbf16>, vector<32x128xbf16>, vector<16x128xf32> -> vector<16x128xf32>
    %75 = vector.broadcast %69 : vector<1x128xf32> to vector<16x128xf32>
    %76 = arith.addf %75, %74 : vector<16x128xf32>
    %77 = vector.extract_strided_slice %67 {offsets = [16, 0], sizes = [16, 32], strides = [1, 1]} : vector<64x32xf32> to vector<16x32xf32>
    %78 = arith.truncf %77 : vector<16x32xf32> to vector<16x32xbf16>
    %c0_72 = arith.constant 0 : index
    %c1_73 = arith.constant 1 : index
    %c0_74 = arith.constant 0 : index
    %c0_75 = arith.constant 0 : index
    %79 = vector.load %arg6[%c0_72, %c1_73, %c0_74, %c0_75] : memref<2x4x32x128xbf16, #tpu.memory_space<vmem>>, vector<1x1x32x128xbf16>
    %80 = vector.shape_cast %79 : vector<1x1x32x128xbf16> to vector<32x128xbf16>
    %cst_76 = arith.constant dense<0.000000e+00> : vector<16x128xf32>
    %81 = tpu.matmul %78, %80, %cst_76 {dimension_numbers = #tpu.dot_dimension_numbers<[1], [0], [0], [1], [0, 0, 1, 1], [], []>} : vector<16x32xbf16>, vector<32x128xbf16>, vector<16x128xf32> -> vector<16x128xf32>
    %82 = arith.addf %76, %81 : vector<16x128xf32>
    %83 = vector.extract_strided_slice %67 {offsets = [32, 0], sizes = [16, 32], strides = [1, 1]} : vector<64x32xf32> to vector<16x32xf32>
    %84 = arith.truncf %83 : vector<16x32xf32> to vector<16x32xbf16>
    %c0_77 = arith.constant 0 : index
    %c2_78 = arith.constant 2 : index
    %c0_79 = arith.constant 0 : index
    %c0_80 = arith.constant 0 : index
    %85 = vector.load %arg6[%c0_77, %c2_78, %c0_79, %c0_80] : memref<2x4x32x128xbf16, #tpu.memory_space<vmem>>, vector<1x1x32x128xbf16>
    %86 = vector.shape_cast %85 : vector<1x1x32x128xbf16> to vector<32x128xbf16>
    %cst_81 = arith.constant dense<0.000000e+00> : vector<16x128xf32>
    %87 = tpu.matmul %84, %86, %cst_81 {dimension_numbers = #tpu.dot_dimension_numbers<[1], [0], [0], [1], [0, 0, 1, 1], [], []>} : vector<16x32xbf16>, vector<32x128xbf16>, vector<16x128xf32> -> vector<16x128xf32>
    %88 = arith.addf %82, %87 : vector<16x128xf32>
    %89 = vector.extract_strided_slice %67 {offsets = [48, 0], sizes = [16, 32], strides = [1, 1]} : vector<64x32xf32> to vector<16x32xf32>
    %90 = arith.truncf %89 : vector<16x32xf32> to vector<16x32xbf16>
    %c0_82 = arith.constant 0 : index
    %c3_83 = arith.constant 3 : index
    %c0_84 = arith.constant 0 : index
    %c0_85 = arith.constant 0 : index
    %91 = vector.load %arg6[%c0_82, %c3_83, %c0_84, %c0_85] : memref<2x4x32x128xbf16, #tpu.memory_space<vmem>>, vector<1x1x32x128xbf16>
    %92 = vector.shape_cast %91 : vector<1x1x32x128xbf16> to vector<32x128xbf16>
    %cst_86 = arith.constant dense<0.000000e+00> : vector<16x128xf32>
    %93 = tpu.matmul %90, %92, %cst_86 {dimension_numbers = #tpu.dot_dimension_numbers<[1], [0], [0], [1], [0, 0, 1, 1], [], []>} : vector<16x32xbf16>, vector<32x128xbf16>, vector<16x128xf32> -> vector<16x128xf32>
    %94 = arith.addf %88, %93 : vector<16x128xf32>
    %95 = vector.extract_strided_slice %66 {offsets = [0, 0], sizes = [16, 16], strides = [1, 1]} : vector<64x64xf32> to vector<16x16xf32>
    %96 = vector.extract_strided_slice %66 {offsets = [16, 16], sizes = [16, 16], strides = [1, 1]} : vector<64x64xf32> to vector<16x16xf32>
    %97 = arith.addf %95, %96 : vector<16x16xf32>
    %98 = vector.extract_strided_slice %66 {offsets = [32, 32], sizes = [16, 16], strides = [1, 1]} : vector<64x64xf32> to vector<16x16xf32>
    %99 = arith.addf %97, %98 : vector<16x16xf32>
    %100 = vector.extract_strided_slice %66 {offsets = [48, 48], sizes = [16, 16], strides = [1, 1]} : vector<64x64xf32> to vector<16x16xf32>
    %101 = arith.addf %99, %100 : vector<16x16xf32>
    %cst_87 = arith.constant 2.500000e-01 : f32
    %102 = vector.broadcast %cst_87 : f32 to vector<16x16xf32>
    %103 = arith.mulf %101, %102 : vector<16x16xf32>
    %c0_88 = arith.constant 0 : index
    %c0_89 = arith.constant 0 : index
    %c0_90 = arith.constant 0 : index
    %104 = vector.load %arg14[%c0_88, %c0_89, %c0_90] : memref<2x16x16xf32, #tpu.memory_space<vmem>>, vector<1x16x16xf32>
    %105 = vector.shape_cast %104 : vector<1x16x16xf32> to vector<16x16xf32>
    %106 = vector.shape_cast %103 : vector<16x16xf32> to vector<1x16x16xf32>
    tpu.vector_store %arg14[%c0_88, %c0_89, %c0_90], %106 {strides = array<i32>} : memref<2x16x16xf32, #tpu.memory_space<vmem>>, vector<1x16x16xf32>,
    %107 = arith.truncf %94 : vector<16x128xf32> to vector<16x128xbf16>
    %c1_91 = arith.constant 1 : index
    %c0_92 = arith.constant 0 : index
    %c0_93 = arith.constant 0 : index
    %c0_94 = arith.constant 0 : index
    %108 = vector.load %arg4[%c1_91, %c0_92, %c0_93, %c0_94] : memref<2x4x128x96xbf16, #tpu.memory_space<vmem>>, vector<1x1x128x96xbf16>
    %109 = vector.shape_cast %108 : vector<1x1x128x96xbf16> to vector<128x96xbf16>
    %cst_95 = arith.constant dense<0.000000e+00> : vector<16x96xf32>
    %110 = tpu.matmul %107, %109, %cst_95 {dimension_numbers = #tpu.dot_dimension_numbers<[1], [0], [0], [1], [0, 0, 1, 1], [], []>} : vector<16x128xbf16>, vector<128x96xbf16>, vector<16x96xf32> -> vector<16x96xf32>
    %c1_96 = arith.constant 1 : index
    %c0_97 = arith.constant 0 : index
    %c0_98 = arith.constant 0 : index
    %c0_99 = arith.constant 0 : index
    %111 = vector.load %arg5[%c1_96, %c0_97, %c0_98, %c0_99] : memref<2x4x1x96xf32, #tpu.memory_space<vmem>>, vector<1x1x1x96xf32>
    %112 = vector.shape_cast %111 : vector<1x1x1x96xf32> to vector<1x96xf32>
    %113 = vector.broadcast %112 : vector<1x96xf32> to vector<16x96xf32>
    %114 = arith.addf %110, %113 : vector<16x96xf32>
    %c0_100 = arith.constant 0 : index
    %c0_101 = arith.constant 0 : index
    %115 = vector.load %arg15[%c0_100, %c0_101] : memref<64x96xf32, #tpu.memory_space<vmem>>, vector<16x96xf32>
    tpu.vector_store %arg15[%c0_100, %c0_101], %114 {strides = array<i32>} : memref<64x96xf32, #tpu.memory_space<vmem>>, vector<16x96xf32>,
    %c1_102 = arith.constant 1 : index
    %c1_103 = arith.constant 1 : index
    %c0_104 = arith.constant 0 : index
    %c0_105 = arith.constant 0 : index
    %116 = vector.load %arg4[%c1_102, %c1_103, %c0_104, %c0_105] : memref<2x4x128x96xbf16, #tpu.memory_space<vmem>>, vector<1x1x128x96xbf16>
    %117 = vector.shape_cast %116 : vector<1x1x128x96xbf16> to vector<128x96xbf16>
    %cst_106 = arith.constant dense<0.000000e+00> : vector<16x96xf32>
    %118 = tpu.matmul %107, %117, %cst_106 {dimension_numbers = #tpu.dot_dimension_numbers<[1], [0], [0], [1], [0, 0, 1, 1], [], []>} : vector<16x128xbf16>, vector<128x96xbf16>, vector<16x96xf32> -> vector<16x96xf32>
    %c1_107 = arith.constant 1 : index
    %c1_108 = arith.constant 1 : index
    %c0_109 = arith.constant 0 : index
    %c0_110 = arith.constant 0 : index
    %119 = vector.load %arg5[%c1_107, %c1_108, %c0_109, %c0_110] : memref<2x4x1x96xf32, #tpu.memory_space<vmem>>, vector<1x1x1x96xf32>
    %120 = vector.shape_cast %119 : vector<1x1x1x96xf32> to vector<1x96xf32>
    %121 = vector.broadcast %120 : vector<1x96xf32> to vector<16x96xf32>
    %122 = arith.addf %118, %121 : vector<16x96xf32>
    %c16_111 = arith.constant 16 : index
    %c0_112 = arith.constant 0 : index
    %123 = vector.load %arg15[%c16_111, %c0_112] : memref<64x96xf32, #tpu.memory_space<vmem>>, vector<16x96xf32>
    tpu.vector_store %arg15[%c16_111, %c0_112], %122 {strides = array<i32>} : memref<64x96xf32, #tpu.memory_space<vmem>>, vector<16x96xf32>,
    %c1_113 = arith.constant 1 : index
    %c2_114 = arith.constant 2 : index
    %c0_115 = arith.constant 0 : index
    %c0_116 = arith.constant 0 : index
    %124 = vector.load %arg4[%c1_113, %c2_114, %c0_115, %c0_116] : memref<2x4x128x96xbf16, #tpu.memory_space<vmem>>, vector<1x1x128x96xbf16>
    %125 = vector.shape_cast %124 : vector<1x1x128x96xbf16> to vector<128x96xbf16>
    %cst_117 = arith.constant dense<0.000000e+00> : vector<16x96xf32>
    %126 = tpu.matmul %107, %125, %cst_117 {dimension_numbers = #tpu.dot_dimension_numbers<[1], [0], [0], [1], [0, 0, 1, 1], [], []>} : vector<16x128xbf16>, vector<128x96xbf16>, vector<16x96xf32> -> vector<16x96xf32>
    %c1_118 = arith.constant 1 : index
    %c2_119 = arith.constant 2 : index
    %c0_120 = arith.constant 0 : index
    %c0_121 = arith.constant 0 : index
    %127 = vector.load %arg5[%c1_118, %c2_119, %c0_120, %c0_121] : memref<2x4x1x96xf32, #tpu.memory_space<vmem>>, vector<1x1x1x96xf32>
    %128 = vector.shape_cast %127 : vector<1x1x1x96xf32> to vector<1x96xf32>
    %129 = vector.broadcast %128 : vector<1x96xf32> to vector<16x96xf32>
    %130 = arith.addf %126, %129 : vector<16x96xf32>
    %c32_122 = arith.constant 32 : index
    %c0_123 = arith.constant 0 : index
    %131 = vector.load %arg15[%c32_122, %c0_123] : memref<64x96xf32, #tpu.memory_space<vmem>>, vector<16x96xf32>
    tpu.vector_store %arg15[%c32_122, %c0_123], %130 {strides = array<i32>} : memref<64x96xf32, #tpu.memory_space<vmem>>, vector<16x96xf32>,
    %c1_124 = arith.constant 1 : index
    %c3_125 = arith.constant 3 : index
    %c0_126 = arith.constant 0 : index
    %c0_127 = arith.constant 0 : index
    %132 = vector.load %arg4[%c1_124, %c3_125, %c0_126, %c0_127] : memref<2x4x128x96xbf16, #tpu.memory_space<vmem>>, vector<1x1x128x96xbf16>
    %133 = vector.shape_cast %132 : vector<1x1x128x96xbf16> to vector<128x96xbf16>
    %cst_128 = arith.constant dense<0.000000e+00> : vector<16x96xf32>
    %134 = tpu.matmul %107, %133, %cst_128 {dimension_numbers = #tpu.dot_dimension_numbers<[1], [0], [0], [1], [0, 0, 1, 1], [], []>} : vector<16x128xbf16>, vector<128x96xbf16>, vector<16x96xf32> -> vector<16x96xf32>
    %c1_129 = arith.constant 1 : index
    %c3_130 = arith.constant 3 : index
    %c0_131 = arith.constant 0 : index
    %c0_132 = arith.constant 0 : index
    %135 = vector.load %arg5[%c1_129, %c3_130, %c0_131, %c0_132] : memref<2x4x1x96xf32, #tpu.memory_space<vmem>>, vector<1x1x1x96xf32>
    %136 = vector.shape_cast %135 : vector<1x1x1x96xf32> to vector<1x96xf32>
    %137 = vector.broadcast %136 : vector<1x96xf32> to vector<16x96xf32>
    %138 = arith.addf %134, %137 : vector<16x96xf32>
    %c48_133 = arith.constant 48 : index
    %c0_134 = arith.constant 0 : index
    %139 = vector.load %arg15[%c48_133, %c0_134] : memref<64x96xf32, #tpu.memory_space<vmem>>, vector<16x96xf32>
    tpu.vector_store %arg15[%c48_133, %c0_134], %138 {strides = array<i32>} : memref<64x96xf32, #tpu.memory_space<vmem>>, vector<16x96xf32>,
    %c0_135 = arith.constant 0 : index
    %c0_136 = arith.constant 0 : index
    %140 = vector.load %arg15[%c0_135, %c0_136] : memref<64x96xf32, #tpu.memory_space<vmem>>, vector<64x96xf32>
    %141 = vector.extract_strided_slice %140 {offsets = [0, 0], sizes = [64, 32], strides = [1, 1]} : vector<64x96xf32> to vector<64x32xf32>
    %142 = vector.extract_strided_slice %140 {offsets = [0, 32], sizes = [64, 32], strides = [1, 1]} : vector<64x96xf32> to vector<64x32xf32>
    %143 = vector.extract_strided_slice %140 {offsets = [0, 64], sizes = [64, 32], strides = [1, 1]} : vector<64x96xf32> to vector<64x32xf32>
    %144 = tpu.transpose %142, [1, 0] : vector<64x32xf32> -> vector<32x64xf32>
    %cst_137 = arith.constant dense<0.000000e+00> : vector<64x64xf32>
    %145 = tpu.matmul %141, %144, %cst_137 {dimension_numbers = #tpu.dot_dimension_numbers<[1], [0], [0], [1], [0, 0, 1, 1], [], []>} : vector<64x32xf32>, vector<32x64xf32>, vector<64x64xf32> -> vector<64x64xf32>
    %c0_138 = arith.constant 0 : index
    %c0_139 = arith.constant 0 : index
    %146 = vector.load %arg3[%c0_138, %c0_139] : memref<64x64xf32, #tpu.memory_space<vmem>>, vector<64x64xf32>
    %147 = arith.addf %145, %146 : vector<64x64xf32>
    %cst_140 = arith.constant dense<0xFF800000> : vector<64xf32>
    %148 = vector.multi_reduction <maximumf>, %147, %cst_140 [1] : vector<64x64xf32> to vector<64xf32>
    %149 = vector.shape_cast %148 : vector<64xf32> to vector<64x1xf32>
    %150 = vector.broadcast %149 : vector<64x1xf32> to vector<64x64xf32>
    %151 = arith.subf %147, %150 : vector<64x64xf32>
    %152 = math.exp %151 : vector<64x64xf32>
    %cst_141 = arith.constant dense<0.000000e+00> : vector<64xf32>
    %153 = vector.multi_reduction <add>, %152, %cst_141 [1] : vector<64x64xf32> to vector<64xf32>
    %154 = vector.shape_cast %153 : vector<64xf32> to vector<64x1xf32>
    %155 = vector.broadcast %154 : vector<64x1xf32> to vector<64x64xf32>
    %156 = arith.divf %152, %155 : vector<64x64xf32>
    %cst_142 = arith.constant dense<0.000000e+00> : vector<64x32xf32>
    %157 = tpu.matmul %156, %143, %cst_142 {dimension_numbers = #tpu.dot_dimension_numbers<[1], [0], [0], [1], [0, 0, 1, 1], [], []>} : vector<64x64xf32>, vector<64x32xf32>, vector<64x32xf32> -> vector<64x32xf32>
    %c1_143 = arith.constant 1 : index
    %c0_144 = arith.constant 0 : index
    %c0_145 = arith.constant 0 : index
    %158 = vector.load %arg7[%c1_143, %c0_144, %c0_145] : memref<2x1x128xf32, #tpu.memory_space<vmem>>, vector<1x1x128xf32>
    %159 = vector.shape_cast %158 : vector<1x1x128xf32> to vector<1x128xf32>
    %160 = vector.extract_strided_slice %157 {offsets = [0, 0], sizes = [16, 32], strides = [1, 1]} : vector<64x32xf32> to vector<16x32xf32>
    %161 = arith.truncf %160 : vector<16x32xf32> to vector<16x32xbf16>
    %c1_146 = arith.constant 1 : index
    %c0_147 = arith.constant 0 : index
    %c0_148 = arith.constant 0 : index
    %c0_149 = arith.constant 0 : index
    %162 = vector.load %arg6[%c1_146, %c0_147, %c0_148, %c0_149] : memref<2x4x32x128xbf16, #tpu.memory_space<vmem>>, vector<1x1x32x128xbf16>
    %163 = vector.shape_cast %162 : vector<1x1x32x128xbf16> to vector<32x128xbf16>
    %cst_150 = arith.constant dense<0.000000e+00> : vector<16x128xf32>
    %164 = tpu.matmul %161, %163, %cst_150 {dimension_numbers = #tpu.dot_dimension_numbers<[1], [0], [0], [1], [0, 0, 1, 1], [], []>} : vector<16x32xbf16>, vector<32x128xbf16>, vector<16x128xf32> -> vector<16x128xf32>
    %165 = vector.broadcast %159 : vector<1x128xf32> to vector<16x128xf32>
    %166 = arith.addf %165, %164 : vector<16x128xf32>
    %167 = vector.extract_strided_slice %157 {offsets = [16, 0], sizes = [16, 32], strides = [1, 1]} : vector<64x32xf32> to vector<16x32xf32>
    %168 = arith.truncf %167 : vector<16x32xf32> to vector<16x32xbf16>
    %c1_151 = arith.constant 1 : index
    %c1_152 = arith.constant 1 : index
    %c0_153 = arith.constant 0 : index
    %c0_154 = arith.constant 0 : index
    %169 = vector.load %arg6[%c1_151, %c1_152, %c0_153, %c0_154] : memref<2x4x32x128xbf16, #tpu.memory_space<vmem>>, vector<1x1x32x128xbf16>
    %170 = vector.shape_cast %169 : vector<1x1x32x128xbf16> to vector<32x128xbf16>
    %cst_155 = arith.constant dense<0.000000e+00> : vector<16x128xf32>
    %171 = tpu.matmul %168, %170, %cst_155 {dimension_numbers = #tpu.dot_dimension_numbers<[1], [0], [0], [1], [0, 0, 1, 1], [], []>} : vector<16x32xbf16>, vector<32x128xbf16>, vector<16x128xf32> -> vector<16x128xf32>
    %172 = arith.addf %166, %171 : vector<16x128xf32>
    %173 = vector.extract_strided_slice %157 {offsets = [32, 0], sizes = [16, 32], strides = [1, 1]} : vector<64x32xf32> to vector<16x32xf32>
    %174 = arith.truncf %173 : vector<16x32xf32> to vector<16x32xbf16>
    %c1_156 = arith.constant 1 : index
    %c2_157 = arith.constant 2 : index
    %c0_158 = arith.constant 0 : index
    %c0_159 = arith.constant 0 : index
    %175 = vector.load %arg6[%c1_156, %c2_157, %c0_158, %c0_159] : memref<2x4x32x128xbf16, #tpu.memory_space<vmem>>, vector<1x1x32x128xbf16>
    %176 = vector.shape_cast %175 : vector<1x1x32x128xbf16> to vector<32x128xbf16>
    %cst_160 = arith.constant dense<0.000000e+00> : vector<16x128xf32>
    %177 = tpu.matmul %174, %176, %cst_160 {dimension_numbers = #tpu.dot_dimension_numbers<[1], [0], [0], [1], [0, 0, 1, 1], [], []>} : vector<16x32xbf16>, vector<32x128xbf16>, vector<16x128xf32> -> vector<16x128xf32>
    %178 = arith.addf %172, %177 : vector<16x128xf32>
    %179 = vector.extract_strided_slice %157 {offsets = [48, 0], sizes = [16, 32], strides = [1, 1]} : vector<64x32xf32> to vector<16x32xf32>
    %180 = arith.truncf %179 : vector<16x32xf32> to vector<16x32xbf16>
    %c1_161 = arith.constant 1 : index
    %c3_162 = arith.constant 3 : index
    %c0_163 = arith.constant 0 : index
    %c0_164 = arith.constant 0 : index
    %181 = vector.load %arg6[%c1_161, %c3_162, %c0_163, %c0_164] : memref<2x4x32x128xbf16, #tpu.memory_space<vmem>>, vector<1x1x32x128xbf16>
    %182 = vector.shape_cast %181 : vector<1x1x32x128xbf16> to vector<32x128xbf16>
    %cst_165 = arith.constant dense<0.000000e+00> : vector<16x128xf32>
    %183 = tpu.matmul %180, %182, %cst_165 {dimension_numbers = #tpu.dot_dimension_numbers<[1], [0], [0], [1], [0, 0, 1, 1], [], []>} : vector<16x32xbf16>, vector<32x128xbf16>, vector<16x128xf32> -> vector<16x128xf32>
    %184 = arith.addf %178, %183 : vector<16x128xf32>
    %185 = vector.extract_strided_slice %156 {offsets = [0, 0], sizes = [16, 16], strides = [1, 1]} : vector<64x64xf32> to vector<16x16xf32>
    %186 = vector.extract_strided_slice %156 {offsets = [16, 16], sizes = [16, 16], strides = [1, 1]} : vector<64x64xf32> to vector<16x16xf32>
    %187 = arith.addf %185, %186 : vector<16x16xf32>
    %188 = vector.extract_strided_slice %156 {offsets = [32, 32], sizes = [16, 16], strides = [1, 1]} : vector<64x64xf32> to vector<16x16xf32>
    %189 = arith.addf %187, %188 : vector<16x16xf32>
    %190 = vector.extract_strided_slice %156 {offsets = [48, 48], sizes = [16, 16], strides = [1, 1]} : vector<64x64xf32> to vector<16x16xf32>
    %191 = arith.addf %189, %190 : vector<16x16xf32>
    %cst_166 = arith.constant 2.500000e-01 : f32
    %192 = vector.broadcast %cst_166 : f32 to vector<16x16xf32>
    %193 = arith.mulf %191, %192 : vector<16x16xf32>
    %c1_167 = arith.constant 1 : index
    %c0_168 = arith.constant 0 : index
    %c0_169 = arith.constant 0 : index
    %194 = vector.load %arg14[%c1_167, %c0_168, %c0_169] : memref<2x16x16xf32, #tpu.memory_space<vmem>>, vector<1x16x16xf32>
    %195 = vector.shape_cast %194 : vector<1x16x16xf32> to vector<16x16xf32>
    %196 = vector.shape_cast %193 : vector<16x16xf32> to vector<1x16x16xf32>
    tpu.vector_store %arg14[%c1_167, %c0_168, %c0_169], %196 {strides = array<i32>} : memref<2x16x16xf32, #tpu.memory_space<vmem>>, vector<1x16x16xf32>,
    %197 = vector.extract_strided_slice %184 {offsets = [0, 0], sizes = [8, 128], strides = [1, 1]} : vector<16x128xf32> to vector<8x128xf32>
    %198 = arith.truncf %197 : vector<8x128xf32> to vector<8x128xbf16>
    %c0_170 = arith.constant 0 : index
    %c0_171 = arith.constant 0 : index
    %c0_172 = arith.constant 0 : index
    %199 = vector.load %arg8[%c0_170, %c0_171, %c0_172] : memref<2x128x128xbf16, #tpu.memory_space<vmem>>, vector<1x128x128xbf16>
    %200 = vector.shape_cast %199 : vector<1x128x128xbf16> to vector<128x128xbf16>
    %cst_173 = arith.constant dense<0.000000e+00> : vector<8x128xf32>
    %201 = tpu.matmul %198, %200, %cst_173 {dimension_numbers = #tpu.dot_dimension_numbers<[1], [0], [0], [1], [0, 0, 1, 1], [], []>} : vector<8x128xbf16>, vector<128x128xbf16>, vector<8x128xf32> -> vector<8x128xf32>
    %202 = vector.extract_strided_slice %184 {offsets = [8, 0], sizes = [8, 128], strides = [1, 1]} : vector<16x128xf32> to vector<8x128xf32>
    %203 = arith.truncf %202 : vector<8x128xf32> to vector<8x128xbf16>
    %c1_174 = arith.constant 1 : index
    %c0_175 = arith.constant 0 : index
    %c0_176 = arith.constant 0 : index
    %204 = vector.load %arg8[%c1_174, %c0_175, %c0_176] : memref<2x128x128xbf16, #tpu.memory_space<vmem>>, vector<1x128x128xbf16>
    %205 = vector.shape_cast %204 : vector<1x128x128xbf16> to vector<128x128xbf16>
    %cst_177 = arith.constant dense<0.000000e+00> : vector<8x128xf32>
    %206 = tpu.matmul %203, %205, %cst_177 {dimension_numbers = #tpu.dot_dimension_numbers<[1], [0], [0], [1], [0, 0, 1, 1], [], []>} : vector<8x128xbf16>, vector<128x128xbf16>, vector<8x128xf32> -> vector<8x128xf32>
    %207 = arith.addf %201, %206 : vector<8x128xf32>
    %c0_178 = arith.constant 0 : index
    %c0_179 = arith.constant 0 : index
    %208 = vector.load %arg12[%c0_178, %c0_179] : memref<2x8xf32, #tpu.memory_space<vmem>>, vector<2x8xf32>
    %cst_180 = arith.constant dense<0.000000e+00> : vector<2x128xf32>
    %209 = tpu.matmul %208, %207, %cst_180 {dimension_numbers = #tpu.dot_dimension_numbers<[1], [0], [0], [1], [0, 0, 1, 1], [], []>} : vector<2x8xf32>, vector<8x128xf32>, vector<2x128xf32> -> vector<2x128xf32>
    %c0_181 = arith.constant 0 : index
    %c0_182 = arith.constant 0 : index
    %210 = vector.load %arg9[%c0_181, %c0_182] : memref<1x128xf32, #tpu.memory_space<vmem>>, vector<1x128xf32>
    %211 = vector.broadcast %210 : vector<1x128xf32> to vector<2x128xf32>
    %212 = arith.addf %209, %211 : vector<2x128xf32>
    %cst_183 = arith.constant 0.000000e+00 : f32
    %213 = vector.broadcast %cst_183 : f32 to vector<2x128xf32>
    %214 = arith.maximumf %212, %213 : vector<2x128xf32>
    %c0_184 = arith.constant 0 : index
    %c0_185 = arith.constant 0 : index
    %215 = vector.load %arg10[%c0_184, %c0_185] : memref<1x128xf32, #tpu.memory_space<vmem>>, vector<1x128xf32>
    %216 = vector.broadcast %215 : vector<1x128xf32> to vector<2x128xf32>
    %217 = arith.mulf %214, %216 : vector<2x128xf32>
    %cst_186 = arith.constant dense<0.000000e+00> : vector<2xf32>
    %218 = vector.multi_reduction <add>, %217, %cst_186 [1] : vector<2x128xf32> to vector<2xf32>
    %219 = vector.shape_cast %218 : vector<2xf32> to vector<2x1xf32>
    %c0_187 = arith.constant 0 : index
    %c0_188 = arith.constant 0 : index
    %220 = vector.load %arg11[%c0_187, %c0_188] : memref<1x1xf32, #tpu.memory_space<vmem>>, vector<1x1xf32>
    %221 = vector.broadcast %220 : vector<1x1xf32> to vector<2x1xf32>
    %222 = arith.addf %219, %221 : vector<2x1xf32>
    %c0_189 = arith.constant 0 : index
    %c0_190 = arith.constant 0 : index
    %223 = vector.load %arg13[%c0_189, %c0_190] : memref<2x1xf32, #tpu.memory_space<vmem>>, vector<2x1xf32>
    tpu.vector_store %arg13[%c0_189, %c0_190], %222 {strides = array<i32>} : memref<2x1xf32, #tpu.memory_space<vmem>>, vector<2x1xf32>,
    return
  }
}

</mosaic_0001>

<llo_original>
// kernel: _vit_forward_device.1
$region0: #{_vit_forward_device.1}
  #allocation0 [shape = 'u32[]', space=smem, size = 0x4, offset = 0x4, fixed_abs, tag = 'smem constant byte address 0x4 - core index']
  #allocation1 [shape = 'u32[144,128]{1,0:T(1,128)}', space=vmem, size = 0x12000, scoped, tag = 'internal scratch']
  #allocation2 [shape = 'f32[64,96]{1,0:T(8,128)}', space=vmem, size = 0x8000, scoped, tag = 'scratch operand']
  #allocation3 [shape = 'f32[1,1]{1,0:T(1,128)S(1)}', space=vmem, size = 0x200, scoped, tag = 'scoped memory for _vit_forward_device.1']
  %s0 = inlined_call_operand.vmem [shape: bf16[2,8,192], index: 0, kind: input, shape index: {}]
  %s1 = inlined_call_operand.vmem [shape: bf16[2,192,128], index: 1, kind: input, shape index: {}]
  %s2 = inlined_call_operand.vmem [shape: f32[2,8,128], index: 2, kind: input, shape index: {}]
  %s3 = inlined_call_operand.vmem [shape: f32[64,64], index: 3, kind: input, shape index: {}]
  %s4 = inlined_call_operand.vmem [shape: bf16[2,4,128,96], index: 4, kind: input, shape index: {}]
  %s5 = inlined_call_operand.vmem [shape: f32[2,4,1,96], index: 5, kind: input, shape index: {}]
  %s6 = inlined_call_operand.vmem [shape: bf16[2,4,32,128], index: 6, kind: input, shape index: {}]
  %s7 = inlined_call_operand.vmem [shape: f32[2,1,128], index: 7, kind: input, shape index: {}]
  %s8 = inlined_call_operand.vmem [shape: bf16[2,128,128], index: 8, kind: input, shape index: {}]
  %s9 = inlined_call_operand.vmem [shape: f32[1,128], index: 9, kind: input, shape index: {}]
  %s10 = inlined_call_operand.vmem [shape: f32[1,128], index: 10, kind: input, shape index: {}]
  %s11 = inlined_call_operand.<no memory space> [shape: f32[1,1], index: 11, kind: input, shape index: {}]
  %s12 = inlined_call_operand.vmem [shape: f32[2,8], index: 12, kind: input, shape index: {}]
  %s13 = inlined_call_operand.vmem [shape: f32[2,1], index: 13, kind: output, shape index: {0}]
  %s14 = inlined_call_operand.hbm [shape: f32[2,16,16], index: 14, kind: output, shape index: {1}]
  %15 = xla_tuple %s13, %s14
  %s16 = sld [smem:[#allocation0]]
  $region70: #{_vit_forward_device.1} parent=0
    _
  %s18 = ssub.s32 1, %s16
  %s19 = scalar_select 0, %s18, %s16
  %v20 = vstv %s11
  %21 = vst [vmem:[#allocation3] sm:$0x1] %v20
  $region1: #{_vit_forward_device.1} parent=0
    #allocation4 [shape = 'u8[16384]{0}', space=vmem, size = 0x4000, scoped, tag = 'output window, operand 1, single buffered']
    #allocation5 [shape = 's32[1]{0}', space=sflag, size = 0x4, scoped, tag = 'scoped memory for _vit_forward_device.1']
    %22 = vsyncpa [#allocation5], 0
    // Predicated region
    $region2: #{_vit_forward_device.1} parent=1 // pred_check
      _
    $region3: #{_vit_forward_device.1} parent=1 // pred_check_branch
      %24 = sbr.rel (0) target = $region5
    $region4: #{_vit_forward_device.1} parent=1 // pred_region
      _
    $region5: #{_vit_forward_device.1} parent=1 // pred_fallthru
      _
    // Predicated region
    $region6: #{_vit_forward_device.1} parent=1 // pred_check
      _
    $region7: #{_vit_forward_device.1} parent=1 // pred_check_branch
      %26 = sbr.rel (0) target = $region9
    $region8: #{_vit_forward_device.1} parent=1 // pred_region
      _
    $region9: #{_vit_forward_device.1} parent=1 // pred_fallthru
      _
    // Predicated region
    $region10: #{_vit_forward_device.1} parent=1 // pred_check
      _
    $region11: #{_vit_forward_device.1} parent=1 // pred_check_branch
      %28 = sbr.rel (0) target = $region13
    $region12: #{_vit_forward_device.1} parent=1 // pred_region
      _
    $region13: #{_vit_forward_device.1} parent=1 // pred_fallthru
      _
    // Predicated region
    $region14: #{_vit_forward_device.1} parent=1 // pred_check
      _
    $region15: #{_vit_forward_device.1} parent=1 // pred_check_branch
      %30 = sbr.rel (0) target = $region17
    $region16: #{_vit_forward_device.1} parent=1 // pred_region
      _
    $region17: #{_vit_forward_device.1} parent=1 // pred_fallthru
      _
    // Predicated region
    $region18: #{_vit_forward_device.1} parent=1 // pred_check
      _
    $region19: #{_vit_forward_device.1} parent=1 // pred_check_branch
      %32 = sbr.rel (0) target = $region21
    $region20: #{_vit_forward_device.1} parent=1 // pred_region
      _
    $region21: #{_vit_forward_device.1} parent=1 // pred_fallthru
      _
    // Predicated region
    $region22: #{_vit_forward_device.1} parent=1 // pred_check
      _
    $region23: #{_vit_forward_device.1} parent=1 // pred_check_branch
      %34 = sbr.rel (0) target = $region25
    $region24: #{_vit_forward_device.1} parent=1 // pred_region
      _
    $region25: #{_vit_forward_device.1} parent=1 // pred_fallthru
      _
    // Predicated region
    $region26: #{_vit_forward_device.1} parent=1 // pred_check
      _
    $region27: #{_vit_forward_device.1} parent=1 // pred_check_branch
      %36 = sbr.rel (0) target = $region29
    $region28: #{_vit_forward_device.1} parent=1 // pred_region
      _
    $region29: #{_vit_forward_device.1} parent=1 // pred_fallthru
      _
    // Predicated region
    $region30: #{_vit_forward_device.1} parent=1 // pred_check
      _
    $region31: #{_vit_forward_device.1} parent=1 // pred_check_branch
      %38 = sbr.rel (0) target = $region33
    $region32: #{_vit_forward_device.1} parent=1 // pred_region
      _
    $region33: #{_vit_forward_device.1} parent=1 // pred_fallthru
      _
    // Predicated region
    $region34: #{_vit_forward_device.1} parent=1 // pred_check
      _
    $region35: #{_vit_forward_device.1} parent=1 // pred_check_branch
      %40 = sbr.rel (0) target = $region37
    $region36: #{_vit_forward_device.1} parent=1 // pred_region
      _
    $region37: #{_vit_forward_device.1} parent=1 // pred_fallthru
      _
    // Predicated region
    $region38: #{_vit_forward_device.1} parent=1 // pred_check
      _
    $region39: #{_vit_forward_device.1} parent=1 // pred_check_branch
      %42 = sbr.rel (0) target = $region41
    $region40: #{_vit_forward_device.1} parent=1 // pred_region
      _
    $region41: #{_vit_forward_device.1} parent=1 // pred_fallthru
      _
    // Predicated region
    $region42: #{_vit_forward_device.1} parent=1 // pred_check
      _
    $region43: #{_vit_forward_device.1} parent=1 // pred_check_branch
      %44 = sbr.rel (0) target = $region45
    $region44: #{_vit_forward_device.1} parent=1 // pred_region
      _
    $region45: #{_vit_forward_device.1} parent=1 // pred_fallthru
      _
    // Predicated region
    $region46: #{_vit_forward_device.1} parent=1 // pred_check
      _
    $region47: #{_vit_forward_device.1} parent=1 // pred_check_branch
      %46 = sbr.rel (0) target = $region49
    $region48: #{_vit_forward_device.1} parent=1 // pred_region
      _
    $region49: #{_vit_forward_device.1} parent=1 // pred_fallthru
      _
    // Predicated region
    $region50: #{_vit_forward_device.1} parent=1 // pred_check
      _
    $region51: #{_vit_forward_device.1} parent=1 // pred_check_branch
      %48 = sbr.rel (0) target = $region53
    $region52: #{_vit_forward_device.1} parent=1 // pred_region
      _
    $region53: #{_vit_forward_device.1} parent=1 // pred_fallthru
      _
    %v50 = vld [vmem:[%s0] sm:$0xff]
    %v51 = vld [vmem:[%s1] sm:$0xf]
    %v52 = vld [vmem:[%s1 + $0x4] sm:$0xf]
    %v53 = vld [vmem:[%s1 + $0x8] sm:$0xf]
    %v54 = vld [vmem:[%s1 + $0xc] sm:$0xf]
    %v55 = vld [vmem:[%s1 + $0x10] sm:$0xf]
    %v56 = vld [vmem:[%s1 + $0x14] sm:$0xf]
    %v57 = vld [vmem:[%s1 + $0x18] sm:$0xf]
    %v58 = vld [vmem:[%s1 + $0x1c] sm:$0xf]
    %v59 = vld [vmem:[%s1 + $0x20] sm:$0xf]
    %v60 = vld [vmem:[%s1 + $0x24] sm:$0xf]
    %v61 = vld [vmem:[%s1 + $0x28] sm:$0xf]
    %v62 = vld [vmem:[%s1 + $0x2c] sm:$0xf]
    %v63 = vld [vmem:[%s1 + $0x30] sm:$0xf]
    %v64 = vld [vmem:[%s1 + $0x34] sm:$0xf]
    %v65 = vld [vmem:[%s1 + $0x38] sm:$0xf]
    %v66 = vld [vmem:[%s1 + $0x3c] sm:$0xf]
    %v67 = vld [vmem:[%s1 + $0x40] sm:$0xf]
    %v68 = vld [vmem:[%s1 + $0x44] sm:$0xf]
    %v69 = vld [vmem:[%s1 + $0x48] sm:$0xf]
    %v70 = vld [vmem:[%s1 + $0x4c] sm:$0xf]
    %v71 = vld [vmem:[%s1 + $0x50] sm:$0xf]
    %v72 = vld [vmem:[%s1 + $0x54] sm:$0xf]
    %v73 = vld [vmem:[%s1 + $0x58] sm:$0xf]
    %v74 = vld [vmem:[%s1 + $0x5c] sm:$0xf]
    %v75 = vld [vmem:[%s2] sm:$0xff]
    %v77 = vunpack.c.l.b16 %v50
    %v78 = vunpack.c.h.b16 %v50
    %v79 = vpack.c.b16 %v77, %v77
    %v80 = vpack.c.b16 %v78, %v78
    %v106 = vunpack.c.l.b16 %v51
    %v107 = vunpack.c.l.b16 %v52
    %v108 = vunpack.c.l.b16 %v53
    %v109 = vunpack.c.l.b16 %v54
    %v110 = vunpack.c.l.b16 %v55
    %v111 = vunpack.c.l.b16 %v56
    %v112 = vunpack.c.l.b16 %v57
    %v113 = vunpack.c.l.b16 %v58
    %v114 = vunpack.c.l.b16 %v59
    %v115 = vunpack.c.l.b16 %v60
    %v116 = vunpack.c.l.b16 %v61
    %v117 = vunpack.c.l.b16 %v62
    %v118 = vunpack.c.l.b16 %v63
    %v119 = vunpack.c.l.b16 %v64
    %v120 = vunpack.c.l.b16 %v65
    %v121 = vunpack.c.l.b16 %v66
    %v122 = vunpack.c.l.b16 %v67
    %v123 = vunpack.c.l.b16 %v68
    %v124 = vunpack.c.l.b16 %v69
    %v125 = vunpack.c.l.b16 %v70
    %v126 = vunpack.c.l.b16 %v71
    %v127 = vunpack.c.l.b16 %v72
    %v128 = vunpack.c.l.b16 %v73
    %v129 = vunpack.c.l.b16 %v74
    %v130 = vpack.c.b16 %v107, %v106
    %v131 = vpack.c.b16 %v109, %v108
    %v132 = vpack.c.b16 %v111, %v110
    %v133 = vpack.c.b16 %v113, %v112
    %v134 = vpack.c.b16 %v115, %v114
    %v135 = vpack.c.b16 %v117, %v116
    %v136 = vpack.c.b16 %v119, %v118
    %v137 = vpack.c.b16 %v121, %v120
    %v138 = vpack.c.b16 %v123, %v122
    %v139 = vpack.c.b16 %v125, %v124
    %v140 = vpack.c.b16 %v127, %v126
    %v141 = vpack.c.b16 %v129, %v128
    %vm154 = vcmask 523264
    %v156 = vsel %vm154, %v80, 0
    %158 = vmatprep.subr.bf16.mxu0 0
    %159 = vmatpush1.bf16.msra.mxu0 %v130
    %160 = vmatprep.subr.bf16.mxu0 0
    %161 = vmatpush1.bf16.msra.mxu0 %v131
    %162 = vmatprep.subr.bf16.mxu0 0
    %163 = vmatpush1.bf16.msra.mxu0 %v132
    %164 = vmatprep.subr.bf16.mxu0 0
    %165 = vmatpush1.bf16.msra.mxu0 %v133
    %166 = vmatprep.subr.bf16.mxu0 0
    %167 = vmatpush1.bf16.msra.mxu0 %v134
    %168 = vmatprep.subr.bf16.mxu0 0
    %169 = vmatpush1.bf16.msra.mxu0 %v135
    %170 = vmatprep.subr.bf16.mxu0 0
    %171 = vmatpush1.bf16.msra.mxu0 %v136
    %172 = vmatprep.subr.bf16.mxu0 0
    %173 = vmatpush1.bf16.msra.mxu0 %v137
    %174 = vmatprep.subr.bf16.mxu0 0
    %175 = vmatpush1.bf16.msra.mxu0 %v138
    %176 = vmatprep.subr.bf16.mxu0 0
    %177 = vmatpush1.bf16.msra.mxu0 %v139
    %178 = vmatprep.subr.bf16.mxu0 0
    %179 = vmatpush1.bf16.msra.mxu0 %v140
    %180 = vmatprep.subr.bf16.mxu0 0
    %181 = vmatpush1.bf16.msra.mxu0 %v141
    %182 = vmatprep.subr.bf16.mxu0 0
    %183 = vmatpush1.bf16.msra.mxu0 0
    %184 = vmatprep.subr.bf16.mxu0 0
    %185 = vmatpush1.bf16.msra.mxu0 0
    %186 = vmatprep.subr.bf16.mxu0 0
    %187 = vmatpush1.bf16.msra.mxu0 0
    %188 = vmatprep.subr.bf16.mxu0 0
    %189 = vmatpush1.bf16.msra.mxu0 0
    %190 = vmatprep.mubr.bf16.mxu0 %v156
    %191 = vmatmul.mubr.bf16.gmra.mrb[0].mxu0 %v79
    %v192 = vpop.f32.mrb[0].mxu0
    %v193 = vadd.f32 %v75, %v192
    %v194 = vpop.f32.mrb[0].mxu0
    %v195 = vpop.f32.mrb[0].mxu0
    %v196 = vpop.f32.mrb[0].mxu0
    %197 = vdwg.mxu0
    %s198 = scalar_lea.vmem %s0, 8
    %v199 = vld [vmem:[%s198] sm:$0xff]
    %s200 = scalar_lea.vmem %s1, 96
    %v201 = vld [vmem:[%s200] sm:$0xf]
    %v202 = vld [vmem:[%s200 + $0x4] sm:$0xf]
    %v203 = vld [vmem:[%s200 + $0x8] sm:$0xf]
    %v204 = vld [vmem:[%s200 + $0xc] sm:$0xf]
    %v205 = vld [vmem:[%s200 + $0x10] sm:$0xf]
    %v206 = vld [vmem:[%s200 + $0x14] sm:$0xf]
    %v207 = vld [vmem:[%s200 + $0x18] sm:$0xf]
    %v208 = vld [vmem:[%s200 + $0x1c] sm:$0xf]
    %v209 = vld [vmem:[%s200 + $0x20] sm:$0xf]
    %v210 = vld [vmem:[%s200 + $0x24] sm:$0xf]
    %v211 = vld [vmem:[%s200 + $0x28] sm:$0xf]
    %v212 = vld [vmem:[%s200 + $0x2c] sm:$0xf]
    %v213 = vld [vmem:[%s200 + $0x30] sm:$0xf]
    %v214 = vld [vmem:[%s200 + $0x34] sm:$0xf]
    %v215 = vld [vmem:[%s200 + $0x38] sm:$0xf]
    %v216 = vld [vmem:[%s200 + $0x3c] sm:$0xf]
    %v217 = vld [vmem:[%s200 + $0x40] sm:$0xf]
    %v218 = vld [vmem:[%s200 + $0x44] sm:$0xf]
    %v219 = vld [vmem:[%s200 + $0x48] sm:$0xf]
    %v220 = vld [vmem:[%s200 + $0x4c] sm:$0xf]
    %v221 = vld [vmem:[%s200 + $0x50] sm:$0xf]
    %v222 = vld [vmem:[%s200 + $0x54] sm:$0xf]
    %v223 = vld [vmem:[%s200 + $0x58] sm:$0xf]
    %v224 = vld [vmem:[%s200 + $0x5c] sm:$0xf]
    %s225 = scalar_lea.vmem %s2, 8
    %v226 = vld [vmem:[%s225] sm:$0xff]
    %v228 = vunpack.c.l.b16 %v199
    %v229 = vunpack.c.h.b16 %v199
    %v230 = vpack.c.b16 %v228, %v228
    %v231 = vpack.c.b16 %v229, %v229
    %v257 = vunpack.c.l.b16 %v201
    %v258 = vunpack.c.l.b16 %v202
    %v259 = vunpack.c.l.b16 %v203
    %v260 = vunpack.c.l.b16 %v204
    %v261 = vunpack.c.l.b16 %v205
    %v262 = vunpack.c.l.b16 %v206
    %v263 = vunpack.c.l.b16 %v207
    %v264 = vunpack.c.l.b16 %v208
    %v265 = vunpack.c.l.b16 %v209
    %v266 = vunpack.c.l.b16 %v210
    %v267 = vunpack.c.l.b16 %v211
    %v268 = vunpack.c.l.b16 %v212
    %v269 = vunpack.c.l.b16 %v213
    %v270 = vunpack.c.l.b16 %v214
    %v271 = vunpack.c.l.b16 %v215
    %v272 = vunpack.c.l.b16 %v216
    %v273 = vunpack.c.l.b16 %v217
    %v274 = vunpack.c.l.b16 %v218
    %v275 = vunpack.c.l.b16 %v219
    %v276 = vunpack.c.l.b16 %v220
    %v277 = vunpack.c.l.b16 %v221
    %v278 = vunpack.c.l.b16 %v222
    %v279 = vunpack.c.l.b16 %v223
    %v280 = vunpack.c.l.b16 %v224
    %v281 = vpack.c.b16 %v258, %v257
    %v282 = vpack.c.b16 %v260, %v259
    %v283 = vpack.c.b16 %v262, %v261
    %v284 = vpack.c.b16 %v264, %v263
    %v285 = vpack.c.b16 %v266, %v265
    %v286 = vpack.c.b16 %v268, %v267
    %v287 = vpack.c.b16 %v270, %v269
    %v288 = vpack.c.b16 %v272, %v271
    %v289 = vpack.c.b16 %v274, %v273
    %v290 = vpack.c.b16 %v276, %v275
    %v291 = vpack.c.b16 %v278, %v277
    %v292 = vpack.c.b16 %v280, %v279
    %v306 = vsel %vm154, %v231, 0
    %308 = vmatprep.subr.bf16.mxu0 0
    %309 = vmatpush1.bf16.msra.mxu0 %v281
    %310 = vmatprep.subr.bf16.mxu0 0
    %311 = vmatpush1.bf16.msra.mxu0 %v282
    %312 = vmatprep.subr.bf16.mxu0 0
    %313 = vmatpush1.bf16.msra.mxu0 %v283
    %314 = vmatprep.subr.bf16.mxu0 0
    %315 = vmatpush1.bf16.msra.mxu0 %v284
    %316 = vmatprep.subr.bf16.mxu0 0
    %317 = vmatpush1.bf16.msra.mxu0 %v285
    %318 = vmatprep.subr.bf16.mxu0 0
    %319 = vmatpush1.bf16.msra.mxu0 %v286
    %320 = vmatprep.subr.bf16.mxu0 0
    %321 = vmatpush1.bf16.msra.mxu0 %v287
    %322 = vmatprep.subr.bf16.mxu0 0
    %323 = vmatpush1.bf16.msra.mxu0 %v288
    %324 = vmatprep.subr.bf16.mxu0 0
    %325 = vmatpush1.bf16.msra.mxu0 %v289
    %326 = vmatprep.subr.bf16.mxu0 0
    %327 = vmatpush1.bf16.msra.mxu0 %v290
    %328 = vmatprep.subr.bf16.mxu0 0
    %329 = vmatpush1.bf16.msra.mxu0 %v291
    %330 = vmatprep.subr.bf16.mxu0 0
    %331 = vmatpush1.bf16.msra.mxu0 %v292
    %332 = vmatprep.subr.bf16.mxu0 0
    %333 = vmatpush1.bf16.msra.mxu0 0
    %334 = vmatprep.subr.bf16.mxu0 0
    %335 = vmatpush1.bf16.msra.mxu0 0
    %336 = vmatprep.subr.bf16.mxu0 0
    %337 = vmatpush1.bf16.msra.mxu0 0
    %338 = vmatprep.subr.bf16.mxu0 0
    %339 = vmatpush1.bf16.msra.mxu0 0
    %340 = vmatprep.mubr.bf16.mxu0 %v306
    %341 = vmatmul.mubr.bf16.gmra.mrb[0].mxu0 %v230
    %v342 = vpop.f32.mrb[0].mxu0
    %v343 = vadd.f32 %v226, %v342
    %v344 = vpop.f32.mrb[0].mxu0
    %v345 = vpop.f32.mrb[0].mxu0
    %v346 = vpop.f32.mrb[0].mxu0
    %347 = vdwg.mxu0
    %v348 = vpack.c.bf16 %v343, %v193
    %v349 = vld [vmem:[%s4] sm:$0xf]
    %v350 = vld [vmem:[%s4 + $0x4] sm:$0xf]
    %v351 = vld [vmem:[%s4 + $0x8] sm:$0xf]
    %v352 = vld [vmem:[%s4 + $0xc] sm:$0xf]
    %v353 = vld [vmem:[%s4 + $0x10] sm:$0xf]
    %v354 = vld [vmem:[%s4 + $0x14] sm:$0xf]
    %v355 = vld [vmem:[%s4 + $0x18] sm:$0xf]
    %v356 = vld [vmem:[%s4 + $0x1c] sm:$0xf]
    %v357 = vld [vmem:[%s4 + $0x20] sm:$0xf]
    %v358 = vld [vmem:[%s4 + $0x24] sm:$0xf]
    %v359 = vld [vmem:[%s4 + $0x28] sm:$0xf]
    %v360 = vld [vmem:[%s4 + $0x2c] sm:$0xf]
    %v361 = vld [vmem:[%s4 + $0x30] sm:$0xf]
    %v362 = vld [vmem:[%s4 + $0x34] sm:$0xf]
    %v363 = vld [vmem:[%s4 + $0x38] sm:$0xf]
    %v364 = vld [vmem:[%s4 + $0x3c] sm:$0xf]
    %v365 = vld [vmem:[%s5] sm:$0x1]
    %v367 = vlaneseq
    %v368 = vshrl.u32 %v367, 7
    %v369 = vsub.s32 0, %v368
    %v370 = vrot.slane %v365, %v369
    %v388 = vunpack.c.l.b16 %v349
    %v389 = vunpack.c.l.b16 %v350
    %v390 = vunpack.c.l.b16 %v351
    %v391 = vunpack.c.l.b16 %v352
    %v392 = vunpack.c.l.b16 %v353
    %v393 = vunpack.c.l.b16 %v354
    %v394 = vunpack.c.l.b16 %v355
    %v395 = vunpack.c.l.b16 %v356
    %v396 = vunpack.c.l.b16 %v357
    %v397 = vunpack.c.l.b16 %v358
    %v398 = vunpack.c.l.b16 %v359
    %v399 = vunpack.c.l.b16 %v360
    %v400 = vunpack.c.l.b16 %v361
    %v401 = vunpack.c.l.b16 %v362
    %v402 = vunpack.c.l.b16 %v363
    %v403 = vunpack.c.l.b16 %v364
    %v404 = vpack.c.b16 %v389, %v388
    %v405 = vpack.c.b16 %v391, %v390
    %v406 = vpack.c.b16 %v393, %v392
    %v407 = vpack.c.b16 %v395, %v394
    %v408 = vpack.c.b16 %v397, %v396
    %v409 = vpack.c.b16 %v399, %v398
    %v410 = vpack.c.b16 %v401, %v400
    %v411 = vpack.c.b16 %v403, %v402
    %420 = vmatprep.subr.bf16.mxu0 0
    %421 = vmatpush1.bf16.msra.mxu0 %v404
    %422 = vmatprep.subr.bf16.mxu0 0
    %423 = vmatpush1.bf16.msra.mxu0 %v405
    %424 = vmatprep.subr.bf16.mxu0 0
    %425 = vmatpush1.bf16.msra.mxu0 %v406
    %426 = vmatprep.subr.bf16.mxu0 0
    %427 = vmatpush1.bf16.msra.mxu0 %v407
    %428 = vmatprep.subr.bf16.mxu0 0
    %429 = vmatpush1.bf16.msra.mxu0 %v408
    %430 = vmatprep.subr.bf16.mxu0 0
    %431 = vmatpush1.bf16.msra.mxu0 %v409
    %432 = vmatprep.subr.bf16.mxu0 0
    %433 = vmatpush1.bf16.msra.mxu0 %v410
    %434 = vmatprep.subr.bf16.mxu0 0
    %435 = vmatpush1.bf16.msra.mxu0 %v411
    %436 = vmatprep.subr.bf16.mxu0 0
    %437 = vmatpush1.bf16.msra.mxu0 0
    %438 = vmatprep.subr.bf16.mxu0 0
    %439 = vmatpush1.bf16.msra.mxu0 0
    %440 = vmatprep.subr.bf16.mxu0 0
    %441 = vmatpush1.bf16.msra.mxu0 0
    %442 = vmatprep.subr.bf16.mxu0 0
    %443 = vmatpush1.bf16.msra.mxu0 0
    %444 = vmatprep.subr.bf16.mxu0 0
    %445 = vmatpush1.bf16.msra.mxu0 0
    %446 = vmatprep.subr.bf16.mxu0 0
    %447 = vmatpush1.bf16.msra.mxu0 0
    %448 = vmatprep.subr.bf16.mxu0 0
    %449 = vmatpush1.bf16.msra.mxu0 0
    %450 = vmatprep.subr.bf16.mxu0 0
    %451 = vmatpush1.bf16.msra.mxu0 0
    %452 = vmatprep.mubr.bf16.mxu0 0
    %453 = vmatmul.mubr.bf16.gmra.mrb[0].mxu0 %v348
    %v454 = vpop.f32.mrb[0].mxu0
    %v455 = vadd.f32 %v370, %v454
    %v456 = vpop.f32.mrb[0].mxu0
    %v457 = vpop.f32.mrb[0].mxu0
    %v458 = vadd.f32 %v370, %v457
    %v459 = vpop.f32.mrb[0].mxu0
    %460 = vdwg.mxu0
    %vm461 = vcmask 785408
    %462 = vst.msk [vmem:[#allocation2] sm:$0xff] %vm461, %v455
    %463 = vst.msk [vmem:[#allocation2 + $0x8] sm:$0xff] %vm461, %v458
    %s464 = scalar_lea.vmem %s4, 64
    %v465 = vld [vmem:[%s464] sm:$0xf]
    %v466 = vld [vmem:[%s464 + $0x4] sm:$0xf]
    %v467 = vld [vmem:[%s464 + $0x8] sm:$0xf]
    %v468 = vld [vmem:[%s464 + $0xc] sm:$0xf]
    %v469 = vld [vmem:[%s464 + $0x10] sm:$0xf]
    %v470 = vld [vmem:[%s464 + $0x14] sm:$0xf]
    %v471 = vld [vmem:[%s464 + $0x18] sm:$0xf]
    %v472 = vld [vmem:[%s464 + $0x1c] sm:$0xf]
    %v473 = vld [vmem:[%s464 + $0x20] sm:$0xf]
    %v474 = vld [vmem:[%s464 + $0x24] sm:$0xf]
    %v475 = vld [vmem:[%s464 + $0x28] sm:$0xf]
    %v476 = vld [vmem:[%s464 + $0x2c] sm:$0xf]
    %v477 = vld [vmem:[%s464 + $0x30] sm:$0xf]
    %v478 = vld [vmem:[%s464 + $0x34] sm:$0xf]
    %v479 = vld [vmem:[%s464 + $0x38] sm:$0xf]
    %v480 = vld [vmem:[%s464 + $0x3c] sm:$0xf]
    %s481 = scalar_lea.vmem %s5, 1
    %v482 = vld [vmem:[%s481] sm:$0x1]
    %v484 = vlaneseq
    %v485 = vshrl.u32 %v484, 7
    %v486 = vsub.s32 0, %v485
    %v487 = vrot.slane %v482, %v486
    %v505 = vunpack.c.l.b16 %v465
    %v506 = vunpack.c.l.b16 %v466
    %v507 = vunpack.c.l.b16 %v467
    %v508 = vunpack.c.l.b16 %v468
    %v509 = vunpack.c.l.b16 %v469
    %v510 = vunpack.c.l.b16 %v470
    %v511 = vunpack.c.l.b16 %v471
    %v512 = vunpack.c.l.b16 %v472
    %v513 = vunpack.c.l.b16 %v473
    %v514 = vunpack.c.l.b16 %v474
    %v515 = vunpack.c.l.b16 %v475
    %v516 = vunpack.c.l.b16 %v476
    %v517 = vunpack.c.l.b16 %v477
    %v518 = vunpack.c.l.b16 %v478
    %v519 = vunpack.c.l.b16 %v479
    %v520 = vunpack.c.l.b16 %v480
    %v521 = vpack.c.b16 %v506, %v505
    %v522 = vpack.c.b16 %v508, %v507
    %v523 = vpack.c.b16 %v510, %v509
    %v524 = vpack.c.b16 %v512, %v511
    %v525 = vpack.c.b16 %v514, %v513
    %v526 = vpack.c.b16 %v516, %v515
    %v527 = vpack.c.b16 %v518, %v517
    %v528 = vpack.c.b16 %v520, %v519
    %537 = vmatprep.subr.bf16.mxu0 0
    %538 = vmatpush1.bf16.msra.mxu0 %v521
    %539 = vmatprep.subr.bf16.mxu0 0
    %540 = vmatpush1.bf16.msra.mxu0 %v522
    %541 = vmatprep.subr.bf16.mxu0 0
    %542 = vmatpush1.bf16.msra.mxu0 %v523
    %543 = vmatprep.subr.bf16.mxu0 0
    %544 = vmatpush1.bf16.msra.mxu0 %v524
    %545 = vmatprep.subr.bf16.mxu0 0
    %546 = vmatpush1.bf16.msra.mxu0 %v525
    %547 = vmatprep.subr.bf16.mxu0 0
    %548 = vmatpush1.bf16.msra.mxu0 %v526
    %549 = vmatprep.subr.bf16.mxu0 0
    %550 = vmatpush1.bf16.msra.mxu0 %v527
    %551 = vmatprep.subr.bf16.mxu0 0
    %552 = vmatpush1.bf16.msra.mxu0 %v528
    %553 = vmatprep.subr.bf16.mxu0 0
    %554 = vmatpush1.bf16.msra.mxu0 0
    %555 = vmatprep.subr.bf16.mxu0 0
    %556 = vmatpush1.bf16.msra.mxu0 0
    %557 = vmatprep.subr.bf16.mxu0 0
    %558 = vmatpush1.bf16.msra.mxu0 0
    %559 = vmatprep.subr.bf16.mxu0 0
    %560 = vmatpush1.bf16.msra.mxu0 0
    %561 = vmatprep.subr.bf16.mxu0 0
    %562 = vmatpush1.bf16.msra.mxu0 0
    %563 = vmatprep.subr.bf16.mxu0 0
    %564 = vmatpush1.bf16.msra.mxu0 0
    %565 = vmatprep.subr.bf16.mxu0 0
    %566 = vmatpush1.bf16.msra.mxu0 0
    %567 = vmatprep.subr.bf16.mxu0 0
    %568 = vmatpush1.bf16.msra.mxu0 0
    %569 = vmatprep.mubr.bf16.mxu0 0
    %570 = vmatmul.mubr.bf16.gmra.mrb[0].mxu0 %v348
    %v571 = vpop.f32.mrb[0].mxu0
    %v572 = vadd.f32 %v487, %v571
    %v573 = vpop.f32.mrb[0].mxu0
    %v574 = vpop.f32.mrb[0].mxu0
    %v575 = vadd.f32 %v487, %v574
    %v576 = vpop.f32.mrb[0].mxu0
    %577 = vdwg.mxu0
    %578 = vst.msk [vmem:[#allocation2 + $0x10] sm:$0xff] %vm461, %v572
    %579 = vst.msk [vmem:[#allocation2 + $0x18] sm:$0xff] %vm461, %v575
    %s580 = scalar_lea.vmem %s4, 128
    %v581 = vld [vmem:[%s580] sm:$0xf]
    %v582 = vld [vmem:[%s580 + $0x4] sm:$0xf]
    %v583 = vld [vmem:[%s580 + $0x8] sm:$0xf]
    %v584 = vld [vmem:[%s580 + $0xc] sm:$0xf]
    %v585 = vld [vmem:[%s580 + $0x10] sm:$0xf]
    %v586 = vld [vmem:[%s580 + $0x14] sm:$0xf]
    %v587 = vld [vmem:[%s580 + $0x18] sm:$0xf]
    %v588 = vld [vmem:[%s580 + $0x1c] sm:$0xf]
    %v589 = vld [vmem:[%s580 + $0x20] sm:$0xf]
    %v590 = vld [vmem:[%s580 + $0x24] sm:$0xf]
    %v591 = vld [vmem:[%s580 + $0x28] sm:$0xf]
    %v592 = vld [vmem:[%s580 + $0x2c] sm:$0xf]
    %v593 = vld [vmem:[%s580 + $0x30] sm:$0xf]
    %v594 = vld [vmem:[%s580 + $0x34] sm:$0xf]
    %v595 = vld [vmem:[%s580 + $0x38] sm:$0xf]
    %v596 = vld [vmem:[%s580 + $0x3c] sm:$0xf]
    %s597 = scalar_lea.vmem %s5, 2
    %v598 = vld [vmem:[%s597] sm:$0x1]
    %v600 = vlaneseq
    %v601 = vshrl.u32 %v600, 7
    %v602 = vsub.s32 0, %v601
    %v603 = vrot.slane %v598, %v602
    %v621 = vunpack.c.l.b16 %v581
    %v622 = vunpack.c.l.b16 %v582
    %v623 = vunpack.c.l.b16 %v583
    %v624 = vunpack.c.l.b16 %v584
    %v625 = vunpack.c.l.b16 %v585
    %v626 = vunpack.c.l.b16 %v586
    %v627 = vunpack.c.l.b16 %v587
    %v628 = vunpack.c.l.b16 %v588
    %v629 = vunpack.c.l.b16 %v589
    %v630 = vunpack.c.l.b16 %v590
    %v631 = vunpack.c.l.b16 %v591
    %v632 = vunpack.c.l.b16 %v592
    %v633 = vunpack.c.l.b16 %v593
    %v634 = vunpack.c.l.b16 %v594
    %v635 = vunpack.c.l.b16 %v595
    %v636 = vunpack.c.l.b16 %v596
    %v637 = vpack.c.b16 %v622, %v621
    %v638 = vpack.c.b16 %v624, %v623
    %v639 = vpack.c.b16 %v626, %v625
    %v640 = vpack.c.b16 %v628, %v627
    %v641 = vpack.c.b16 %v630, %v629
    %v642 = vpack.c.b16 %v632, %v631
    %v643 = vpack.c.b16 %v634, %v633
    %v644 = vpack.c.b16 %v636, %v635
    %653 = vmatprep.subr.bf16.mxu0 0
    %654 = vmatpush1.bf16.msra.mxu0 %v637
    %655 = vmatprep.subr.bf16.mxu0 0
    %656 = vmatpush1.bf16.msra.mxu0 %v638
    %657 = vmatprep.subr.bf16.mxu0 0
    %658 = vmatpush1.bf16.msra.mxu0 %v639
    %659 = vmatprep.subr.bf16.mxu0 0
    %660 = vmatpush1.bf16.msra.mxu0 %v640
    %661 = vmatprep.subr.bf16.mxu0 0
    %662 = vmatpush1.bf16.msra.mxu0 %v641
    %663 = vmatprep.subr.bf16.mxu0 0
    %664 = vmatpush1.bf16.msra.mxu0 %v642
    %665 = vmatprep.subr.bf16.mxu0 0
    %666 = vmatpush1.bf16.msra.mxu0 %v643
    %667 = vmatprep.subr.bf16.mxu0 0
    %668 = vmatpush1.bf16.msra.mxu0 %v644
    %669 = vmatprep.subr.bf16.mxu0 0
    %670 = vmatpush1.bf16.msra.mxu0 0
    %671 = vmatprep.subr.bf16.mxu0 0
    %672 = vmatpush1.bf16.msra.mxu0 0
    %673 = vmatprep.subr.bf16.mxu0 0
    %674 = vmatpush1.bf16.msra.mxu0 0
    %675 = vmatprep.subr.bf16.mxu0 0
    %676 = vmatpush1.bf16.msra.mxu0 0
    %677 = vmatprep.subr.bf16.mxu0 0
    %678 = vmatpush1.bf16.msra.mxu0 0
    %679 = vmatprep.subr.bf16.mxu0 0
    %680 = vmatpush1.bf16.msra.mxu0 0
    %681 = vmatprep.subr.bf16.mxu0 0
    %682 = vmatpush1.bf16.msra.mxu0 0
    %683 = vmatprep.subr.bf16.mxu0 0
    %684 = vmatpush1.bf16.msra.mxu0 0
    %685 = vmatprep.mubr.bf16.mxu0 0
    %686 = vmatmul.mubr.bf16.gmra.mrb[0].mxu0 %v348
    %v687 = vpop.f32.mrb[0].mxu0
    %v688 = vadd.f32 %v603, %v687
    %v689 = vpop.f32.mrb[0].mxu0
    %v690 = vpop.f32.mrb[0].mxu0
    %v691 = vadd.f32 %v603, %v690
    %v692 = vpop.f32.mrb[0].mxu0
    %693 = vdwg.mxu0
    %694 = vst.msk [vmem:[#allocation2 + $0x20] sm:$0xff] %vm461, %v688
    %695 = vst.msk [vmem:[#allocation2 + $0x28] sm:$0xff] %vm461, %v691
    %s696 = scalar_lea.vmem %s4, 192
    %v697 = vld [vmem:[%s696] sm:$0xf]
    %v698 = vld [vmem:[%s696 + $0x4] sm:$0xf]
    %v699 = vld [vmem:[%s696 + $0x8] sm:$0xf]
    %v700 = vld [vmem:[%s696 + $0xc] sm:$0xf]
    %v701 = vld [vmem:[%s696 + $0x10] sm:$0xf]
    %v702 = vld [vmem:[%s696 + $0x14] sm:$0xf]
    %v703 = vld [vmem:[%s696 + $0x18] sm:$0xf]
    %v704 = vld [vmem:[%s696 + $0x1c] sm:$0xf]
    %v705 = vld [vmem:[%s696 + $0x20] sm:$0xf]
    %v706 = vld [vmem:[%s696 + $0x24] sm:$0xf]
    %v707 = vld [vmem:[%s696 + $0x28] sm:$0xf]
    %v708 = vld [vmem:[%s696 + $0x2c] sm:$0xf]
    %v709 = vld [vmem:[%s696 + $0x30] sm:$0xf]
    %v710 = vld [vmem:[%s696 + $0x34] sm:$0xf]
    %v711 = vld [vmem:[%s696 + $0x38] sm:$0xf]
    %v712 = vld [vmem:[%s696 + $0x3c] sm:$0xf]
    %s713 = scalar_lea.vmem %s5, 3
    %v714 = vld [vmem:[%s713] sm:$0x1]
    %v716 = vlaneseq
    %v717 = vshrl.u32 %v716, 7
    %v718 = vsub.s32 0, %v717
    %v719 = vrot.slane %v714, %v718
    %v737 = vunpack.c.l.b16 %v697
    %v738 = vunpack.c.l.b16 %v698
    %v739 = vunpack.c.l.b16 %v699
    %v740 = vunpack.c.l.b16 %v700
    %v741 = vunpack.c.l.b16 %v701
    %v742 = vunpack.c.l.b16 %v702
    %v743 = vunpack.c.l.b16 %v703
    %v744 = vunpack.c.l.b16 %v704
    %v745 = vunpack.c.l.b16 %v705
    %v746 = vunpack.c.l.b16 %v706
    %v747 = vunpack.c.l.b16 %v707
    %v748 = vunpack.c.l.b16 %v708
    %v749 = vunpack.c.l.b16 %v709
    %v750 = vunpack.c.l.b16 %v710
    %v751 = vunpack.c.l.b16 %v711
    %v752 = vunpack.c.l.b16 %v712
    %v753 = vpack.c.b16 %v738, %v737
    %v754 = vpack.c.b16 %v740, %v739
    %v755 = vpack.c.b16 %v742, %v741
    %v756 = vpack.c.b16 %v744, %v743
    %v757 = vpack.c.b16 %v746, %v745
    %v758 = vpack.c.b16 %v748, %v747
    %v759 = vpack.c.b16 %v750, %v749
    %v760 = vpack.c.b16 %v752, %v751
    %769 = vmatprep.subr.bf16.mxu0 0
    %770 = vmatpush1.bf16.msra.mxu0 %v753
    %771 = vmatprep.subr.bf16.mxu0 0
    %772 = vmatpush1.bf16.msra.mxu0 %v754
    %773 = vmatprep.subr.bf16.mxu0 0
    %774 = vmatpush1.bf16.msra.mxu0 %v755
    %775 = vmatprep.subr.bf16.mxu0 0
    %776 = vmatpush1.bf16.msra.mxu0 %v756
    %777 = vmatprep.subr.bf16.mxu0 0
    %778 = vmatpush1.bf16.msra.mxu0 %v757
    %779 = vmatprep.subr.bf16.mxu0 0
    %780 = vmatpush1.bf16.msra.mxu0 %v758
    %781 = vmatprep.subr.bf16.mxu0 0
    %782 = vmatpush1.bf16.msra.mxu0 %v759
    %783 = vmatprep.subr.bf16.mxu0 0
    %784 = vmatpush1.bf16.msra.mxu0 %v760
    %785 = vmatprep.subr.bf16.mxu0 0
    %786 = vmatpush1.bf16.msra.mxu0 0
    %787 = vmatprep.subr.bf16.mxu0 0
    %788 = vmatpush1.bf16.msra.mxu0 0
    %789 = vmatprep.subr.bf16.mxu0 0
    %790 = vmatpush1.bf16.msra.mxu0 0
    %791 = vmatprep.subr.bf16.mxu0 0
    %792 = vmatpush1.bf16.msra.mxu0 0
    %793 = vmatprep.subr.bf16.mxu0 0
    %794 = vmatpush1.bf16.msra.mxu0 0
    %795 = vmatprep.subr.bf16.mxu0 0
    %796 = vmatpush1.bf16.msra.mxu0 0
    %797 = vmatprep.subr.bf16.mxu0 0
    %798 = vmatpush1.bf16.msra.mxu0 0
    %799 = vmatprep.subr.bf16.mxu0 0
    %800 = vmatpush1.bf16.msra.mxu0 0
    %801 = vmatprep.mubr.bf16.mxu0 0
    %802 = vmatmul.mubr.bf16.gmra.mrb[0].mxu0 %v348
    %v803 = vpop.f32.mrb[0].mxu0
    %v804 = vadd.f32 %v719, %v803
    %v805 = vpop.f32.mrb[0].mxu0
    %v806 = vpop.f32.mrb[0].mxu0
    %v807 = vadd.f32 %v719, %v806
    %v808 = vpop.f32.mrb[0].mxu0
    %809 = vdwg.mxu0
    %810 = vst.msk [vmem:[#allocation2 + $0x30] sm:$0xff] %vm461, %v804
    %811 = vst.msk [vmem:[#allocation2 + $0x38] sm:$0xff] %vm461, %v807
    %v812 = vld [vmem:[#allocation2] sm:$0xff]
    %v813 = vld [vmem:[#allocation2 + $0x8] sm:$0xff]
    %v814 = vld [vmem:[#allocation2 + $0x10] sm:$0xff]
    %v815 = vld [vmem:[#allocation2 + $0x18] sm:$0xff]
    %v816 = vld [vmem:[#allocation2 + $0x20] sm:$0xff]
    %v817 = vld [vmem:[#allocation2 + $0x28] sm:$0xff]
    %v818 = vld [vmem:[#allocation2 + $0x30] sm:$0xff]
    %v819 = vld [vmem:[#allocation2 + $0x38] sm:$0xff]
    %v820 = vld [vmem:[%s3] sm:$0xff]
    %v821 = vld [vmem:[%s3 + $0x8] sm:$0xff]
    %v822 = vld [vmem:[%s3 + $0x10] sm:$0xff]
    %v823 = vld [vmem:[%s3 + $0x18] sm:$0xff]
    %v824 = vld [vmem:[%s3 + $0x20] sm:$0xff]
    %v825 = vld [vmem:[%s3 + $0x28] sm:$0xff]
    %v826 = vld [vmem:[%s3 + $0x30] sm:$0xff]
    %v827 = vld [vmem:[%s3 + $0x38] sm:$0xff]
    %836 = vrot.lane.b32.xlu0 %v812, 96
    %v837 = vpop.permute.xlu0 %836
    %838 = vrot.lane.b32.xlu0 %v813, 96
    %v839 = vpop.permute.xlu0 %838
    %840 = vrot.lane.b32.xlu0 %v814, 96
    %v841 = vpop.permute.xlu0 %840
    %842 = vrot.lane.b32.xlu0 %v815, 96
    %v843 = vpop.permute.xlu0 %842
    %844 = vrot.lane.b32.xlu0 %v816, 96
    %v845 = vpop.permute.xlu0 %844
    %846 = vrot.lane.b32.xlu0 %v817, 96
    %v847 = vpop.permute.xlu0 %846
    %848 = vrot.lane.b32.xlu0 %v818, 96
    %v849 = vpop.permute.xlu0 %848
    %850 = vrot.lane.b32.xlu0 %v819, 96
    %v851 = vpop.permute.xlu0 %850
    %vm852 = vcmask 261120
    %v853 = vsel %vm852, %v812, 0
    %v855 = vsel %vm852, %v813, 0
    %v857 = vsel %vm852, %v814, 0
    %v859 = vsel %vm852, %v815, 0
    %v861 = vsel %vm852, %v816, 0
    %v863 = vsel %vm852, %v817, 0
    %v865 = vsel %vm852, %v818, 0
    %v867 = vsel %vm852, %v819, 0
    %v869 = vsel %vm852, %v837, 0
    %v871 = vsel %vm852, %v839, 0
    %v873 = vsel %vm852, %v841, 0
    %v875 = vsel %vm852, %v843, 0
    %v877 = vsel %vm852, %v845, 0
    %v879 = vsel %vm852, %v847, 0
    %v881 = vsel %vm852, %v849, 0
    %v883 = vsel %vm852, %v851, 0
    %885 = vmatprep.subr.mxu0 0.0
    %886 = vmatpush1.xpose.msra.mxu0 %v869
    %887 = vmatprep.subr.mxu0 0.0
    %888 = vmatpush1.xpose.msra.mxu0 %v871
    %889 = vmatprep.subr.mxu0 0.0
    %890 = vmatpush1.xpose.msra.mxu0 %v873
    %891 = vmatprep.subr.mxu0 0.0
    %892 = vmatpush1.xpose.msra.mxu0 %v875
    %893 = vmatprep.subr.mxu0 0.0
    %894 = vmatpush1.xpose.msra.mxu0 %v877
    %895 = vmatprep.subr.mxu0 0.0
    %896 = vmatpush1.xpose.msra.mxu0 %v879
    %897 = vmatprep.subr.mxu0 0.0
    %898 = vmatpush1.xpose.msra.mxu0 %v881
    %899 = vmatprep.subr.mxu0 0.0
    %900 = vmatpush1.xpose.msra.mxu0 %v883
    %901 = vmatprep.subr.mxu0 0.0
    %902 = vmatpush1.xpose.msra.mxu0 0.0
    %903 = vmatprep.subr.mxu0 0.0
    %904 = vmatpush1.xpose.msra.mxu0 0.0
    %905 = vmatprep.subr.mxu0 0.0
    %906 = vmatpush1.xpose.msra.mxu0 0.0
    %907 = vmatprep.subr.mxu0 0.0
    %908 = vmatpush1.xpose.msra.mxu0 0.0
    %909 = vmatprep.subr.mxu0 0.0
    %910 = vmatpush1.xpose.msra.mxu0 0.0
    %911 = vmatprep.subr.mxu0 0.0
    %912 = vmatpush1.xpose.msra.mxu0 0.0
    %913 = vmatprep.subr.mxu0 0.0
    %914 = vmatpush1.xpose.msra.mxu0 0.0
    %915 = vmatprep.subr.mxu0 0.0
    %916 = vmatpush1.xpose.msra.mxu0 0.0
    %917 = vmatprep.subr.mxu0 0.0
    %918 = vmatpush1.xpose.msra.mxu0 0.0
    %919 = vmatprep.subr.mxu0 0.0
    %920 = vmatpush1.xpose.msra.mxu0 0.0
    %921 = vmatprep.subr.mxu0 0.0
    %922 = vmatpush1.xpose.msra.mxu0 0.0
    %923 = vmatprep.subr.mxu0 0.0
    %924 = vmatpush1.xpose.msra.mxu0 0.0
    %925 = vmatprep.subr.mxu0 0.0
    %926 = vmatpush1.xpose.msra.mxu0 0.0
    %927 = vmatprep.subr.mxu0 0.0
    %928 = vmatpush1.xpose.msra.mxu0 0.0
    %929 = vmatprep.subr.mxu0 0.0
    %930 = vmatpush1.xpose.msra.mxu0 0.0
    %931 = vmatprep.subr.mxu0 0.0
    %932 = vmatpush1.xpose.msra.mxu0 0.0
    %933 = vmatprep.subr.mxu0 0.0
    %934 = vmatpush1.xpose.msra.mxu0 0.0
    %935 = vmatprep.subr.mxu0 0.0
    %936 = vmatpush1.xpose.msra.mxu0 0.0
    %937 = vmatprep.subr.mxu0 0.0
    %938 = vmatpush1.xpose.msra.mxu0 0.0
    %939 = vmatprep.subr.mxu0 0.0
    %940 = vmatpush1.xpose.msra.mxu0 0.0
    %941 = vmatprep.subr.mxu0 0.0
    %942 = vmatpush1.xpose.msra.mxu0 0.0
    %943 = vmatprep.subr.mxu0 0.0
    %944 = vmatpush1.xpose.msra.mxu0 0.0
    %945 = vmatprep.subr.mxu0 0.0
    %946 = vmatpush1.xpose.msra.mxu0 0.0
    %947 = vmatprep.subr.mxu0 0.0
    %948 = vmatpush1.xpose.msra.mxu0 0.0
    %949 = vmatprep.mubr.f32.mxu0 0.0
    %950 = vmatmul.mubr.f32.gmra.mrb[0].mxu0 %v853
    %v951 = vpop.f32.mrb[0].mxu0
    %v952 = vadd.f32 %v820, %v951
    %v953 = vpop.f32.mrb[0].mxu0
    %954 = vmatprep.mubr.f32.mxu0 0.0
    %955 = vmatmul.mubr.f32.gmra.mrb[0].mxu0 %v855
    %v956 = vpop.f32.mrb[0].mxu0
    %v957 = vadd.f32 %v821, %v956
    %v958 = vpop.f32.mrb[0].mxu0
    %959 = vmatprep.mubr.f32.mxu0 0.0
    %960 = vmatmul.mubr.f32.gmra.mrb[0].mxu0 %v857
    %v961 = vpop.f32.mrb[0].mxu0
    %v962 = vadd.f32 %v822, %v961
    %v963 = vpop.f32.mrb[0].mxu0
    %964 = vmatprep.mubr.f32.mxu0 0.0
    %965 = vmatmul.mubr.f32.gmra.mrb[0].mxu0 %v859
    %v966 = vpop.f32.mrb[0].mxu0
    %v967 = vadd.f32 %v823, %v966
    %v968 = vpop.f32.mrb[0].mxu0
    %969 = vmatprep.mubr.f32.mxu0 0.0
    %970 = vmatmul.mubr.f32.gmra.mrb[0].mxu0 %v861
    %v971 = vpop.f32.mrb[0].mxu0
    %v972 = vadd.f32 %v824, %v971
    %v973 = vpop.f32.mrb[0].mxu0
    %974 = vmatprep.mubr.f32.mxu0 0.0
    %975 = vmatmul.mubr.f32.gmra.mrb[0].mxu0 %v863
    %v976 = vpop.f32.mrb[0].mxu0
    %v977 = vadd.f32 %v825, %v976
    %v978 = vpop.f32.mrb[0].mxu0
    %979 = vmatprep.mubr.f32.mxu0 0.0
    %980 = vmatmul.mubr.f32.gmra.mrb[0].mxu0 %v865
    %v981 = vpop.f32.mrb[0].mxu0
    %v982 = vadd.f32 %v826, %v981
    %v983 = vpop.f32.mrb[0].mxu0
    %984 = vmatprep.mubr.f32.mxu0 0.0
    %985 = vmatmul.mubr.f32.gmra.mrb[0].mxu0 %v867
    %v986 = vpop.f32.mrb[0].mxu0
    %v987 = vadd.f32 %v827, %v986
    %v988 = vpop.f32.mrb[0].mxu0
    %989 = vdwg.mxu0
    %v990 = vsel %vm154, %v952, -inf
    %991 = vmax.xlane.f32.xlu0 %v990
    %v992 = vpop.xlane.xlu0 %991
    %v993 = vsel %vm154, %v957, -inf
    %994 = vmax.xlane.f32.xlu0 %v993
    %v995 = vpop.xlane.xlu0 %994
    %v996 = vsel %vm154, %v962, -inf
    %997 = vmax.xlane.f32.xlu0 %v996
    %v998 = vpop.xlane.xlu0 %997
    %v999 = vsel %vm154, %v967, -inf
    %1000 = vmax.xlane.f32.xlu0 %v999
    %v1001 = vpop.xlane.xlu0 %1000
    %v1002 = vsel %vm154, %v972, -inf
    %1003 = vmax.xlane.f32.xlu0 %v1002
    %v1004 = vpop.xlane.xlu0 %1003
    %v1005 = vsel %vm154, %v977, -inf
    %1006 = vmax.xlane.f32.xlu0 %v1005
    %v1007 = vpop.xlane.xlu0 %1006
    %v1008 = vsel %vm154, %v982, -inf
    %1009 = vmax.xlane.f32.xlu0 %v1008
    %v1010 = vpop.xlane.xlu0 %1009
    %v1011 = vsel %vm154, %v987, -inf
    %1012 = vmax.xlane.f32.xlu0 %v1011
    %v1013 = vpop.xlane.xlu0 %1012
    %v1014 = vsub.f32 %v952, %v992
    %v1015 = vsub.f32 %v957, %v995
    %v1016 = vsub.f32 %v962, %v998
    %v1017 = vsub.f32 %v967, %v1001
    %v1018 = vsub.f32 %v972, %v1004
    %v1019 = vsub.f32 %v977, %v1007
    %v1020 = vsub.f32 %v982, %v1010
    %v1021 = vsub.f32 %v987, %v1013
    %v1022 = vmul.f32 %v1014, 1.442695
    %v1023 = vpow.pop %v1022
    %v1024 = vmul.f32 %v1015, 1.442695
    %v1025 = vpow.pop %v1024
    %v1026 = vmul.f32 %v1016, 1.442695
    %v1027 = vpow.pop %v1026
    %v1028 = vmul.f32 %v1017, 1.442695
    %v1029 = vpow.pop %v1028
    %v1030 = vmul.f32 %v1018, 1.442695
    %v1031 = vpow.pop %v1030
    %v1032 = vmul.f32 %v1019, 1.442695
    %v1033 = vpow.pop %v1032
    %v1034 = vmul.f32 %v1020, 1.442695
    %v1035 = vpow.pop %v1034
    %v1036 = vmul.f32 %v1021, 1.442695
    %v1037 = vpow.pop %v1036
    %v1038 = vsel %vm154, %v1023, 0.0
    %1039 = vadd.xlane.f32.xlu0 %v1038
    %v1040 = vpop.xlane.xlu0 %1039
    %v1041 = vsel %vm154, %v1025, 0.0
    %1042 = vadd.xlane.f32.xlu0 %v1041
    %v1043 = vpop.xlane.xlu0 %1042
    %v1044 = vsel %vm154, %v1027, 0.0
    %1045 = vadd.xlane.f32.xlu0 %v1044
    %v1046 = vpop.xlane.xlu0 %1045
    %v1047 = vsel %vm154, %v1029, 0.0
    %1048 = vadd.xlane.f32.xlu0 %v1047
    %v1049 = vpop.xlane.xlu0 %1048
    %v1050 = vsel %vm154, %v1031, 0.0
    %1051 = vadd.xlane.f32.xlu0 %v1050
    %v1052 = vpop.xlane.xlu0 %1051
    %v1053 = vsel %vm154, %v1033, 0.0
    %1054 = vadd.xlane.f32.xlu0 %v1053
    %v1055 = vpop.xlane.xlu0 %1054
    %v1056 = vsel %vm154, %v1035, 0.0
    %1057 = vadd.xlane.f32.xlu0 %v1056
    %v1058 = vpop.xlane.xlu0 %1057
    %v1059 = vsel %vm154, %v1037, 0.0
    %1060 = vadd.xlane.f32.xlu0 %v1059
    %v1061 = vpop.xlane.xlu0 %1060
    %v1062 = vrcp.pop %v1040
    %v1063 = vmul.f32 %v1023, %v1062
    %v1064 = vrcp.pop %v1043
    %v1065 = vmul.f32 %v1025, %v1064
    %v1066 = vrcp.pop %v1046
    %v1067 = vmul.f32 %v1027, %v1066
    %v1068 = vrcp.pop %v1049
    %v1069 = vmul.f32 %v1029, %v1068
    %v1070 = vrcp.pop %v1052
    %v1071 = vmul.f32 %v1031, %v1070
    %v1072 = vrcp.pop %v1055
    %v1073 = vmul.f32 %v1033, %v1072
    %v1074 = vrcp.pop %v1058
    %v1075 = vmul.f32 %v1035, %v1074
    %v1076 = vrcp.pop %v1061
    %v1077 = vmul.f32 %v1037, %v1076
    %1078 = vrot.lane.b32.xlu0 %v812, 64
    %v1079 = vpop.permute.xlu0 %1078
    %1080 = vrot.lane.b32.xlu0 %v813, 64
    %v1081 = vpop.permute.xlu0 %1080
    %1082 = vrot.lane.b32.xlu0 %v814, 64
    %v1083 = vpop.permute.xlu0 %1082
    %1084 = vrot.lane.b32.xlu0 %v815, 64
    %v1085 = vpop.permute.xlu0 %1084
    %1086 = vrot.lane.b32.xlu0 %v816, 64
    %v1087 = vpop.permute.xlu0 %1086
    %1088 = vrot.lane.b32.xlu0 %v817, 64
    %v1089 = vpop.permute.xlu0 %1088
    %1090 = vrot.lane.b32.xlu0 %v818, 64
    %v1091 = vpop.permute.xlu0 %1090
    %1092 = vrot.lane.b32.xlu0 %v819, 64
    %v1093 = vpop.permute.xlu0 %1092
    %v1103 = vsel %vm154, %v1063, 0
    %v1106 = vsel %vm154, %v1065, 0
    %v1109 = vsel %vm154, %v1067, 0
    %v1112 = vsel %vm154, %v1069, 0
    %v1115 = vsel %vm154, %v1071, 0
    %v1118 = vsel %vm154, %v1073, 0
    %v1121 = vsel %vm154, %v1075, 0
    %v1124 = vsel %vm154, %v1077, 0
    %1126 = vmatprep.subr.mxu0 0.0
    %1127 = vmatpush1.msra.mxu0 %v1079
    %1128 = vmatprep.subr.mxu0 0.0
    %1129 = vmatpush1.msra.mxu0 %v1081
    %1130 = vmatprep.subr.mxu0 0.0
    %1131 = vmatpush1.msra.mxu0 %v1083
    %1132 = vmatprep.subr.mxu0 0.0
    %1133 = vmatpush1.msra.mxu0 %v1085
    %1134 = vmatprep.subr.mxu0 0.0
    %1135 = vmatpush1.msra.mxu0 %v1087
    %1136 = vmatprep.subr.mxu0 0.0
    %1137 = vmatpush1.msra.mxu0 %v1089
    %1138 = vmatprep.subr.mxu0 0.0
    %1139 = vmatpush1.msra.mxu0 %v1091
    %1140 = vmatprep.subr.mxu0 0.0
    %1141 = vmatpush1.msra.mxu0 %v1093
    %1142 = vmatprep.subr.mxu0 0.0
    %1143 = vmatpush1.msra.mxu0 0.0
    %1144 = vmatprep.subr.mxu0 0.0
    %1145 = vmatpush1.msra.mxu0 0.0
    %1146 = vmatprep.subr.mxu0 0.0
    %1147 = vmatpush1.msra.mxu0 0.0
    %1148 = vmatprep.subr.mxu0 0.0
    %1149 = vmatpush1.msra.mxu0 0.0
    %1150 = vmatprep.subr.mxu0 0.0
    %1151 = vmatpush1.msra.mxu0 0.0
    %1152 = vmatprep.subr.mxu0 0.0
    %1153 = vmatpush1.msra.mxu0 0.0
    %1154 = vmatprep.subr.mxu0 0.0
    %1155 = vmatpush1.msra.mxu0 0.0
    %1156 = vmatprep.subr.mxu0 0.0
    %1157 = vmatpush1.msra.mxu0 0.0
    %1158 = vmatprep.subr.mxu0 0.0
    %1159 = vmatpush1.msra.mxu0 0.0
    %1160 = vmatprep.subr.mxu0 0.0
    %1161 = vmatpush1.msra.mxu0 0.0
    %1162 = vmatprep.subr.mxu0 0.0
    %1163 = vmatpush1.msra.mxu0 0.0
    %1164 = vmatprep.subr.mxu0 0.0
    %1165 = vmatpush1.msra.mxu0 0.0
    %1166 = vmatprep.subr.mxu0 0.0
    %1167 = vmatpush1.msra.mxu0 0.0
    %1168 = vmatprep.subr.mxu0 0.0
    %1169 = vmatpush1.msra.mxu0 0.0
    %1170 = vmatprep.subr.mxu0 0.0
    %1171 = vmatpush1.msra.mxu0 0.0
    %1172 = vmatprep.subr.mxu0 0.0
    %1173 = vmatpush1.msra.mxu0 0.0
    %1174 = vmatprep.subr.mxu0 0.0
    %1175 = vmatpush1.msra.mxu0 0.0
    %1176 = vmatprep.subr.mxu0 0.0
    %1177 = vmatpush1.msra.mxu0 0.0
    %1178 = vmatprep.subr.mxu0 0.0
    %1179 = vmatpush1.msra.mxu0 0.0
    %1180 = vmatprep.subr.mxu0 0.0
    %1181 = vmatpush1.msra.mxu0 0.0
    %1182 = vmatprep.subr.mxu0 0.0
    %1183 = vmatpush1.msra.mxu0 0.0
    %1184 = vmatprep.subr.mxu0 0.0
    %1185 = vmatpush1.msra.mxu0 0.0
    %1186 = vmatprep.subr.mxu0 0.0
    %1187 = vmatpush1.msra.mxu0 0.0
    %1188 = vmatprep.subr.mxu0 0.0
    %1189 = vmatpush1.msra.mxu0 0.0
    %1190 = vmatprep.mubr.f32.mxu0 0.0
    %1191 = vmatmul.mubr.f32.gmra.mrb[0].mxu0 %v1103
    %v1192 = vpop.f32.mrb[0].mxu0
    %v1193 = vadd.f32 0.0, %v1192
    %v1194 = vpop.f32.mrb[0].mxu0
    %1195 = vmatprep.mubr.f32.mxu0 0.0
    %1196 = vmatmul.mubr.f32.gmra.mrb[0].mxu0 %v1106
    %v1197 = vpop.f32.mrb[0].mxu0
    %v1198 = vadd.f32 0.0, %v1197
    %v1199 = vpop.f32.mrb[0].mxu0
    %1200 = vmatprep.mubr.f32.mxu0 0.0
    %1201 = vmatmul.mubr.f32.gmra.mrb[0].mxu0 %v1109
    %v1202 = vpop.f32.mrb[0].mxu0
    %v1203 = vadd.f32 0.0, %v1202
    %v1204 = vpop.f32.mrb[0].mxu0
    %1205 = vmatprep.mubr.f32.mxu0 0.0
    %1206 = vmatmul.mubr.f32.gmra.mrb[0].mxu0 %v1112
    %v1207 = vpop.f32.mrb[0].mxu0
    %v1208 = vadd.f32 0.0, %v1207
    %v1209 = vpop.f32.mrb[0].mxu0
    %1210 = vmatprep.mubr.f32.mxu0 0.0
    %1211 = vmatmul.mubr.f32.gmra.mrb[0].mxu0 %v1115
    %v1212 = vpop.f32.mrb[0].mxu0
    %v1213 = vadd.f32 0.0, %v1212
    %v1214 = vpop.f32.mrb[0].mxu0
    %1215 = vmatprep.mubr.f32.mxu0 0.0
    %1216 = vmatmul.mubr.f32.gmra.mrb[0].mxu0 %v1118
    %v1217 = vpop.f32.mrb[0].mxu0
    %v1218 = vadd.f32 0.0, %v1217
    %v1219 = vpop.f32.mrb[0].mxu0
    %1220 = vmatprep.mubr.f32.mxu0 0.0
    %1221 = vmatmul.mubr.f32.gmra.mrb[0].mxu0 %v1121
    %v1222 = vpop.f32.mrb[0].mxu0
    %v1223 = vadd.f32 0.0, %v1222
    %v1224 = vpop.f32.mrb[0].mxu0
    %1225 = vmatprep.mubr.f32.mxu0 0.0
    %1226 = vmatmul.mubr.f32.gmra.mrb[0].mxu0 %v1124
    %v1227 = vpop.f32.mrb[0].mxu0
    %v1228 = vadd.f32 0.0, %v1227
    %v1229 = vpop.f32.mrb[0].mxu0
    %1230 = vdwg.mxu0
    %v1231 = vld [vmem:[%s7] sm:$0x1]
    %v1232 = vpack.c.bf16 %v1198, %v1193
    %v1233 = vld [vmem:[%s6] sm:$0xf]
    %v1234 = vld [vmem:[%s6 + $0x4] sm:$0xf]
    %v1235 = vld [vmem:[%s6 + $0x8] sm:$0xf]
    %v1236 = vld [vmem:[%s6 + $0xc] sm:$0xf]
    %v1241 = vunpack.c.l.b16 %v1233
    %v1242 = vunpack.c.l.b16 %v1234
    %v1243 = vunpack.c.l.b16 %v1235
    %v1244 = vunpack.c.l.b16 %v1236
    %v1245 = vpack.c.b16 %v1242, %v1241
    %v1246 = vpack.c.b16 %v1244, %v1243
    %v1250 = vsel %vm852, %v1232, 0
    %1252 = vmatprep.subr.bf16.mxu0 0
    %1253 = vmatpush1.bf16.msra.mxu0 %v1245
    %1254 = vmatprep.subr.bf16.mxu0 0
    %1255 = vmatpush1.bf16.msra.mxu0 %v1246
    %1256 = vmatprep.subr.bf16.mxu0 0
    %1257 = vmatpush1.bf16.msra.mxu0 0
    %1258 = vmatprep.subr.bf16.mxu0 0
    %1259 = vmatpush1.bf16.msra.mxu0 0
    %1260 = vmatprep.subr.bf16.mxu0 0
    %1261 = vmatpush1.bf16.msra.mxu0 0
    %1262 = vmatprep.subr.bf16.mxu0 0
    %1263 = vmatpush1.bf16.msra.mxu0 0
    %1264 = vmatprep.subr.bf16.mxu0 0
    %1265 = vmatpush1.bf16.msra.mxu0 0
    %1266 = vmatprep.subr.bf16.mxu0 0
    %1267 = vmatpush1.bf16.msra.mxu0 0
    %1268 = vmatprep.subr.bf16.mxu0 0
    %1269 = vmatpush1.bf16.msra.mxu0 0
    %1270 = vmatprep.subr.bf16.mxu0 0
    %1271 = vmatpush1.bf16.msra.mxu0 0
    %1272 = vmatprep.subr.bf16.mxu0 0
    %1273 = vmatpush1.bf16.msra.mxu0 0
    %1274 = vmatprep.subr.bf16.mxu0 0
    %1275 = vmatpush1.bf16.msra.mxu0 0
    %1276 = vmatprep.subr.bf16.mxu0 0
    %1277 = vmatpush1.bf16.msra.mxu0 0
    %1278 = vmatprep.subr.bf16.mxu0 0
    %1279 = vmatpush1.bf16.msra.mxu0 0
    %1280 = vmatprep.subr.bf16.mxu0 0
    %1281 = vmatpush1.bf16.msra.mxu0 0
    %1282 = vmatprep.subr.bf16.mxu0 0
    %1283 = vmatpush1.bf16.msra.mxu0 0
    %1284 = vmatprep.mubr.bf16.mxu0 0
    %1285 = vmatmul.mubr.bf16.gmra.mrb[0].mxu0 %v1250
    %v1286 = vpop.f32.mrb[0].mxu0
    %v1287 = vadd.f32 0.0, %v1286
    %v1288 = vpop.f32.mrb[0].mxu0
    %v1289 = vpop.f32.mrb[0].mxu0
    %v1290 = vadd.f32 0.0, %v1289
    %v1291 = vpop.f32.mrb[0].mxu0
    %1292 = vdwg.mxu0
    %v1294 = vlaneseq
    %v1295 = vshrl.u32 %v1294, 7
    %v1296 = vsub.s32 0, %v1295
    %v1297 = vrot.slane %v1231, %v1296
    %v1299 = vadd.f32 %v1297, %v1287
    %v1300 = vadd.f32 %v1297, %v1290
    %v1301 = vpack.c.bf16 %v1208, %v1203
    %s1302 = scalar_lea.vmem %s6, 16
    %v1303 = vld [vmem:[%s1302] sm:$0xf]
    %v1304 = vld [vmem:[%s1302 + $0x4] sm:$0xf]
    %v1305 = vld [vmem:[%s1302 + $0x8] sm:$0xf]
    %v1306 = vld [vmem:[%s1302 + $0xc] sm:$0xf]
    %v1311 = vunpack.c.l.b16 %v1303
    %v1312 = vunpack.c.l.b16 %v1304
    %v1313 = vunpack.c.l.b16 %v1305
    %v1314 = vunpack.c.l.b16 %v1306
    %v1315 = vpack.c.b16 %v1312, %v1311
    %v1316 = vpack.c.b16 %v1314, %v1313
    %v1320 = vsel %vm852, %v1301, 0
    %1322 = vmatprep.subr.bf16.mxu0 0
    %1323 = vmatpush1.bf16.msra.mxu0 %v1315
    %1324 = vmatprep.subr.bf16.mxu0 0
    %1325 = vmatpush1.bf16.msra.mxu0 %v1316
    %1326 = vmatprep.subr.bf16.mxu0 0
    %1327 = vmatpush1.bf16.msra.mxu0 0
    %1328 = vmatprep.subr.bf16.mxu0 0
    %1329 = vmatpush1.bf16.msra.mxu0 0
    %1330 = vmatprep.subr.bf16.mxu0 0
    %1331 = vmatpush1.bf16.msra.mxu0 0
    %1332 = vmatprep.subr.bf16.mxu0 0
    %1333 = vmatpush1.bf16.msra.mxu0 0
    %1334 = vmatprep.subr.bf16.mxu0 0
    %1335 = vmatpush1.bf16.msra.mxu0 0
    %1336 = vmatprep.subr.bf16.mxu0 0
    %1337 = vmatpush1.bf16.msra.mxu0 0
    %1338 = vmatprep.subr.bf16.mxu0 0
    %1339 = vmatpush1.bf16.msra.mxu0 0
    %1340 = vmatprep.subr.bf16.mxu0 0
    %1341 = vmatpush1.bf16.msra.mxu0 0
    %1342 = vmatprep.subr.bf16.mxu0 0
    %1343 = vmatpush1.bf16.msra.mxu0 0
    %1344 = vmatprep.subr.bf16.mxu0 0
    %1345 = vmatpush1.bf16.msra.mxu0 0
    %1346 = vmatprep.subr.bf16.mxu0 0
    %1347 = vmatpush1.bf16.msra.mxu0 0
    %1348 = vmatprep.subr.bf16.mxu0 0
    %1349 = vmatpush1.bf16.msra.mxu0 0
    %1350 = vmatprep.subr.bf16.mxu0 0
    %1351 = vmatpush1.bf16.msra.mxu0 0
    %1352 = vmatprep.subr.bf16.mxu0 0
    %1353 = vmatpush1.bf16.msra.mxu0 0
    %1354 = vmatprep.mubr.bf16.mxu0 0
    %1355 = vmatmul.mubr.bf16.gmra.mrb[0].mxu0 %v1320
    %v1356 = vpop.f32.mrb[0].mxu0
    %v1357 = vadd.f32 0.0, %v1356
    %v1358 = vpop.f32.mrb[0].mxu0
    %v1359 = vpop.f32.mrb[0].mxu0
    %v1360 = vadd.f32 0.0, %v1359
    %v1361 = vpop.f32.mrb[0].mxu0
    %1362 = vdwg.mxu0
    %v1363 = vadd.f32 %v1299, %v1357
    %v1364 = vadd.f32 %v1300, %v1360
    %v1365 = vpack.c.bf16 %v1218, %v1213
    %s1366 = scalar_lea.vmem %s6, 32
    %v1367 = vld [vmem:[%s1366] sm:$0xf]
    %v1368 = vld [vmem:[%s1366 + $0x4] sm:$0xf]
    %v1369 = vld [vmem:[%s1366 + $0x8] sm:$0xf]
    %v1370 = vld [vmem:[%s1366 + $0xc] sm:$0xf]
    %v1375 = vunpack.c.l.b16 %v1367
    %v1376 = vunpack.c.l.b16 %v1368
    %v1377 = vunpack.c.l.b16 %v1369
    %v1378 = vunpack.c.l.b16 %v1370
    %v1379 = vpack.c.b16 %v1376, %v1375
    %v1380 = vpack.c.b16 %v1378, %v1377
    %v1384 = vsel %vm852, %v1365, 0
    %1386 = vmatprep.subr.bf16.mxu0 0
    %1387 = vmatpush1.bf16.msra.mxu0 %v1379
    %1388 = vmatprep.subr.bf16.mxu0 0
    %1389 = vmatpush1.bf16.msra.mxu0 %v1380
    %1390 = vmatprep.subr.bf16.mxu0 0
    %1391 = vmatpush1.bf16.msra.mxu0 0
    %1392 = vmatprep.subr.bf16.mxu0 0
    %1393 = vmatpush1.bf16.msra.mxu0 0
    %1394 = vmatprep.subr.bf16.mxu0 0
    %1395 = vmatpush1.bf16.msra.mxu0 0
    %1396 = vmatprep.subr.bf16.mxu0 0
    %1397 = vmatpush1.bf16.msra.mxu0 0
    %1398 = vmatprep.subr.bf16.mxu0 0
    %1399 = vmatpush1.bf16.msra.mxu0 0
    %1400 = vmatprep.subr.bf16.mxu0 0
    %1401 = vmatpush1.bf16.msra.mxu0 0
    %1402 = vmatprep.subr.bf16.mxu0 0
    %1403 = vmatpush1.bf16.msra.mxu0 0
    %1404 = vmatprep.subr.bf16.mxu0 0
    %1405 = vmatpush1.bf16.msra.mxu0 0
    %1406 = vmatprep.subr.bf16.mxu0 0
    %1407 = vmatpush1.bf16.msra.mxu0 0
    %1408 = vmatprep.subr.bf16.mxu0 0
    %1409 = vmatpush1.bf16.msra.mxu0 0
    %1410 = vmatprep.subr.bf16.mxu0 0
    %1411 = vmatpush1.bf16.msra.mxu0 0
    %1412 = vmatprep.subr.bf16.mxu0 0
    %1413 = vmatpush1.bf16.msra.mxu0 0
    %1414 = vmatprep.subr.bf16.mxu0 0
    %1415 = vmatpush1.bf16.msra.mxu0 0
    %1416 = vmatprep.subr.bf16.mxu0 0
    %1417 = vmatpush1.bf16.msra.mxu0 0
    %1418 = vmatprep.mubr.bf16.mxu0 0
    %1419 = vmatmul.mubr.bf16.gmra.mrb[0].mxu0 %v1384
    %v1420 = vpop.f32.mrb[0].mxu0
    %v1421 = vadd.f32 0.0, %v1420
    %v1422 = vpop.f32.mrb[0].mxu0
    %v1423 = vpop.f32.mrb[0].mxu0
    %v1424 = vadd.f32 0.0, %v1423
    %v1425 = vpop.f32.mrb[0].mxu0
    %1426 = vdwg.mxu0
    %v1427 = vadd.f32 %v1363, %v1421
    %v1428 = vadd.f32 %v1364, %v1424
    %v1429 = vpack.c.bf16 %v1228, %v1223
    %s1430 = scalar_lea.vmem %s6, 48
    %v1431 = vld [vmem:[%s1430] sm:$0xf]
    %v1432 = vld [vmem:[%s1430 + $0x4] sm:$0xf]
    %v1433 = vld [vmem:[%s1430 + $0x8] sm:$0xf]
    %v1434 = vld [vmem:[%s1430 + $0xc] sm:$0xf]
    %v1439 = vunpack.c.l.b16 %v1431
    %v1440 = vunpack.c.l.b16 %v1432
    %v1441 = vunpack.c.l.b16 %v1433
    %v1442 = vunpack.c.l.b16 %v1434
    %v1443 = vpack.c.b16 %v1440, %v1439
    %v1444 = vpack.c.b16 %v1442, %v1441
    %v1448 = vsel %vm852, %v1429, 0
    %1450 = vmatprep.subr.bf16.mxu0 0
    %1451 = vmatpush1.bf16.msra.mxu0 %v1443
    %1452 = vmatprep.subr.bf16.mxu0 0
    %1453 = vmatpush1.bf16.msra.mxu0 %v1444
    %1454 = vmatprep.subr.bf16.mxu0 0
    %1455 = vmatpush1.bf16.msra.mxu0 0
    %1456 = vmatprep.subr.bf16.mxu0 0
    %1457 = vmatpush1.bf16.msra.mxu0 0
    %1458 = vmatprep.subr.bf16.mxu0 0
    %1459 = vmatpush1.bf16.msra.mxu0 0
    %1460 = vmatprep.subr.bf16.mxu0 0
    %1461 = vmatpush1.bf16.msra.mxu0 0
    %1462 = vmatprep.subr.bf16.mxu0 0
    %1463 = vmatpush1.bf16.msra.mxu0 0
    %1464 = vmatprep.subr.bf16.mxu0 0
    %1465 = vmatpush1.bf16.msra.mxu0 0
    %1466 = vmatprep.subr.bf16.mxu0 0
    %1467 = vmatpush1.bf16.msra.mxu0 0
    %1468 = vmatprep.subr.bf16.mxu0 0
    %1469 = vmatpush1.bf16.msra.mxu0 0
    %1470 = vmatprep.subr.bf16.mxu0 0
    %1471 = vmatpush1.bf16.msra.mxu0 0
    %1472 = vmatprep.subr.bf16.mxu0 0
    %1473 = vmatpush1.bf16.msra.mxu0 0
    %1474 = vmatprep.subr.bf16.mxu0 0
    %1475 = vmatpush1.bf16.msra.mxu0 0
    %1476 = vmatprep.subr.bf16.mxu0 0
    %1477 = vmatpush1.bf16.msra.mxu0 0
    %1478 = vmatprep.subr.bf16.mxu0 0
    %1479 = vmatpush1.bf16.msra.mxu0 0
    %1480 = vmatprep.subr.bf16.mxu0 0
    %1481 = vmatpush1.bf16.msra.mxu0 0
    %1482 = vmatprep.mubr.bf16.mxu0 0
    %1483 = vmatmul.mubr.bf16.gmra.mrb[0].mxu0 %v1448
    %v1484 = vpop.f32.mrb[0].mxu0
    %v1485 = vadd.f32 0.0, %v1484
    %v1486 = vpop.f32.mrb[0].mxu0
    %v1487 = vpop.f32.mrb[0].mxu0
    %v1488 = vadd.f32 0.0, %v1487
    %v1489 = vpop.f32.mrb[0].mxu0
    %1490 = vdwg.mxu0
    %v1491 = vadd.f32 %v1427, %v1485
    %v1492 = vadd.f32 %v1428, %v1488
    %1493 = vrot.lane.b32.xlu0 %v1067, 112
    %v1494 = vpop.permute.xlu0 %1493
    %1495 = vrot.lane.b32.xlu0 %v1069, 112
    %v1496 = vpop.permute.xlu0 %1495
    %v1499 = vadd.f32 %v1063, %v1494
    %v1500 = vadd.f32 %v1065, %v1496
    %1501 = vrot.lane.b32.xlu0 %v1071, 96
    %v1502 = vpop.permute.xlu0 %1501
    %1503 = vrot.lane.b32.xlu0 %v1073, 96
    %v1504 = vpop.permute.xlu0 %1503
    %v1507 = vadd.f32 %v1499, %v1502
    %v1508 = vadd.f32 %v1500, %v1504
    %1509 = vrot.lane.b32.xlu0 %v1075, 80
    %v1510 = vpop.permute.xlu0 %1509
    %1511 = vrot.lane.b32.xlu0 %v1077, 80
    %v1512 = vpop.permute.xlu0 %1511
    %v1515 = vadd.f32 %v1507, %v1510
    %v1516 = vadd.f32 %v1508, %v1512
    %v1517 = vmul.f32 %v1515, 0.25
    %v1518 = vmul.f32 %v1516, 0.25
    %vm1519 = vcmask 130048
    %1520 = vst.msk [vmem:[#allocation4] sm:$0xff] %vm1519, %v1517
    %1521 = vst.msk [vmem:[#allocation4 + $0x8] sm:$0xff] %vm1519, %v1518
    %v1522 = vpack.c.bf16 %v1492, %v1491
    %s1523 = scalar_lea.vmem %s4, 256
    %v1524 = vld [vmem:[%s1523] sm:$0xf]
    %v1525 = vld [vmem:[%s1523 + $0x4] sm:$0xf]
    %v1526 = vld [vmem:[%s1523 + $0x8] sm:$0xf]
    %v1527 = vld [vmem:[%s1523 + $0xc] sm:$0xf]
    %v1528 = vld [vmem:[%s1523 + $0x10] sm:$0xf]
    %v1529 = vld [vmem:[%s1523 + $0x14] sm:$0xf]
    %v1530 = vld [vmem:[%s1523 + $0x18] sm:$0xf]
    %v1531 = vld [vmem:[%s1523 + $0x1c] sm:$0xf]
    %v1532 = vld [vmem:[%s1523 + $0x20] sm:$0xf]
    %v1533 = vld [vmem:[%s1523 + $0x24] sm:$0xf]
    %v1534 = vld [vmem:[%s1523 + $0x28] sm:$0xf]
    %v1535 = vld [vmem:[%s1523 + $0x2c] sm:$0xf]
    %v1536 = vld [vmem:[%s1523 + $0x30] sm:$0xf]
    %v1537 = vld [vmem:[%s1523 + $0x34] sm:$0xf]
    %v1538 = vld [vmem:[%s1523 + $0x38] sm:$0xf]
    %v1539 = vld [vmem:[%s1523 + $0x3c] sm:$0xf]
    %s1540 = scalar_lea.vmem %s5, 4
    %v1541 = vld [vmem:[%s1540] sm:$0x1]
    %v1543 = vlaneseq
    %v1544 = vshrl.u32 %v1543, 7
    %v1545 = vsub.s32 0, %v1544
    %v1546 = vrot.slane %v1541, %v1545
    %v1564 = vunpack.c.l.b16 %v1524
    %v1565 = vunpack.c.l.b16 %v1525
    %v1566 = vunpack.c.l.b16 %v1526
    %v1567 = vunpack.c.l.b16 %v1527
    %v1568 = vunpack.c.l.b16 %v1528
    %v1569 = vunpack.c.l.b16 %v1529
    %v1570 = vunpack.c.l.b16 %v1530
    %v1571 = vunpack.c.l.b16 %v1531
    %v1572 = vunpack.c.l.b16 %v1532
    %v1573 = vunpack.c.l.b16 %v1533
    %v1574 = vunpack.c.l.b16 %v1534
    %v1575 = vunpack.c.l.b16 %v1535
    %v1576 = vunpack.c.l.b16 %v1536
    %v1577 = vunpack.c.l.b16 %v1537
    %v1578 = vunpack.c.l.b16 %v1538
    %v1579 = vunpack.c.l.b16 %v1539
    %v1580 = vpack.c.b16 %v1565, %v1564
    %v1581 = vpack.c.b16 %v1567, %v1566
    %v1582 = vpack.c.b16 %v1569, %v1568
    %v1583 = vpack.c.b16 %v1571, %v1570
    %v1584 = vpack.c.b16 %v1573, %v1572
    %v1585 = vpack.c.b16 %v1575, %v1574
    %v1586 = vpack.c.b16 %v1577, %v1576
    %v1587 = vpack.c.b16 %v1579, %v1578
    %1596 = vmatprep.subr.bf16.mxu0 0
    %1597 = vmatpush1.bf16.msra.mxu0 %v1580
    %1598 = vmatprep.subr.bf16.mxu0 0
    %1599 = vmatpush1.bf16.msra.mxu0 %v1581
    %1600 = vmatprep.subr.bf16.mxu0 0
    %1601 = vmatpush1.bf16.msra.mxu0 %v1582
    %1602 = vmatprep.subr.bf16.mxu0 0
    %1603 = vmatpush1.bf16.msra.mxu0 %v1583
    %1604 = vmatprep.subr.bf16.mxu0 0
    %1605 = vmatpush1.bf16.msra.mxu0 %v1584
    %1606 = vmatprep.subr.bf16.mxu0 0
    %1607 = vmatpush1.bf16.msra.mxu0 %v1585
    %1608 = vmatprep.subr.bf16.mxu0 0
    %1609 = vmatpush1.bf16.msra.mxu0 %v1586
    %1610 = vmatprep.subr.bf16.mxu0 0
    %1611 = vmatpush1.bf16.msra.mxu0 %v1587
    %1612 = vmatprep.subr.bf16.mxu0 0
    %1613 = vmatpush1.bf16.msra.mxu0 0
    %1614 = vmatprep.subr.bf16.mxu0 0
    %1615 = vmatpush1.bf16.msra.mxu0 0
    %1616 = vmatprep.subr.bf16.mxu0 0
    %1617 = vmatpush1.bf16.msra.mxu0 0
    %1618 = vmatprep.subr.bf16.mxu0 0
    %1619 = vmatpush1.bf16.msra.mxu0 0
    %1620 = vmatprep.subr.bf16.mxu0 0
    %1621 = vmatpush1.bf16.msra.mxu0 0
    %1622 = vmatprep.subr.bf16.mxu0 0
    %1623 = vmatpush1.bf16.msra.mxu0 0
    %1624 = vmatprep.subr.bf16.mxu0 0
    %1625 = vmatpush1.bf16.msra.mxu0 0
    %1626 = vmatprep.subr.bf16.mxu0 0
    %1627 = vmatpush1.bf16.msra.mxu0 0
    %1628 = vmatprep.mubr.bf16.mxu0 0
    %1629 = vmatmul.mubr.bf16.gmra.mrb[0].mxu0 %v1522
    %v1630 = vpop.f32.mrb[0].mxu0
    %v1631 = vadd.f32 %v1546, %v1630
    %v1632 = vpop.f32.mrb[0].mxu0
    %v1633 = vpop.f32.mrb[0].mxu0
    %v1634 = vadd.f32 %v1546, %v1633
    %v1635 = vpop.f32.mrb[0].mxu0
    %1636 = vdwg.mxu0
    %1637 = vst.msk [vmem:[#allocation2] sm:$0xff] %vm461, %v1631
    %1638 = vst.msk [vmem:[#allocation2 + $0x8] sm:$0xff] %vm461, %v1634
    %s1639 = scalar_lea.vmem %s4, 320
    %v1640 = vld [vmem:[%s1639] sm:$0xf]
    %v1641 = vld [vmem:[%s1639 + $0x4] sm:$0xf]
    %v1642 = vld [vmem:[%s1639 + $0x8] sm:$0xf]
    %v1643 = vld [vmem:[%s1639 + $0xc] sm:$0xf]
    %v1644 = vld [vmem:[%s1639 + $0x10] sm:$0xf]
    %v1645 = vld [vmem:[%s1639 + $0x14] sm:$0xf]
    %v1646 = vld [vmem:[%s1639 + $0x18] sm:$0xf]
    %v1647 = vld [vmem:[%s1639 + $0x1c] sm:$0xf]
    %v1648 = vld [vmem:[%s1639 + $0x20] sm:$0xf]
    %v1649 = vld [vmem:[%s1639 + $0x24] sm:$0xf]
    %v1650 = vld [vmem:[%s1639 + $0x28] sm:$0xf]
    %v1651 = vld [vmem:[%s1639 + $0x2c] sm:$0xf]
    %v1652 = vld [vmem:[%s1639 + $0x30] sm:$0xf]
    %v1653 = vld [vmem:[%s1639 + $0x34] sm:$0xf]
    %v1654 = vld [vmem:[%s1639 + $0x38] sm:$0xf]
    %v1655 = vld [vmem:[%s1639 + $0x3c] sm:$0xf]
    %s1656 = scalar_lea.vmem %s5, 5
    %v1657 = vld [vmem:[%s1656] sm:$0x1]
    %v1659 = vlaneseq
    %v1660 = vshrl.u32 %v1659, 7
    %v1661 = vsub.s32 0, %v1660
    %v1662 = vrot.slane %v1657, %v1661
    %v1680 = vunpack.c.l.b16 %v1640
    %v1681 = vunpack.c.l.b16 %v1641
    %v1682 = vunpack.c.l.b16 %v1642
    %v1683 = vunpack.c.l.b16 %v1643
    %v1684 = vunpack.c.l.b16 %v1644
    %v1685 = vunpack.c.l.b16 %v1645
    %v1686 = vunpack.c.l.b16 %v1646
    %v1687 = vunpack.c.l.b16 %v1647
    %v1688 = vunpack.c.l.b16 %v1648
    %v1689 = vunpack.c.l.b16 %v1649
    %v1690 = vunpack.c.l.b16 %v1650
    %v1691 = vunpack.c.l.b16 %v1651
    %v1692 = vunpack.c.l.b16 %v1652
    %v1693 = vunpack.c.l.b16 %v1653
    %v1694 = vunpack.c.l.b16 %v1654
    %v1695 = vunpack.c.l.b16 %v1655
    %v1696 = vpack.c.b16 %v1681, %v1680
    %v1697 = vpack.c.b16 %v1683, %v1682
    %v1698 = vpack.c.b16 %v1685, %v1684
    %v1699 = vpack.c.b16 %v1687, %v1686
    %v1700 = vpack.c.b16 %v1689, %v1688
    %v1701 = vpack.c.b16 %v1691, %v1690
    %v1702 = vpack.c.b16 %v1693, %v1692
    %v1703 = vpack.c.b16 %v1695, %v1694
    %1712 = vmatprep.subr.bf16.mxu0 0
    %1713 = vmatpush1.bf16.msra.mxu0 %v1696
    %1714 = vmatprep.subr.bf16.mxu0 0
    %1715 = vmatpush1.bf16.msra.mxu0 %v1697
    %1716 = vmatprep.subr.bf16.mxu0 0
    %1717 = vmatpush1.bf16.msra.mxu0 %v1698
    %1718 = vmatprep.subr.bf16.mxu0 0
    %1719 = vmatpush1.bf16.msra.mxu0 %v1699
    %1720 = vmatprep.subr.bf16.mxu0 0
    %1721 = vmatpush1.bf16.msra.mxu0 %v1700
    %1722 = vmatprep.subr.bf16.mxu0 0
    %1723 = vmatpush1.bf16.msra.mxu0 %v1701
    %1724 = vmatprep.subr.bf16.mxu0 0
    %1725 = vmatpush1.bf16.msra.mxu0 %v1702
    %1726 = vmatprep.subr.bf16.mxu0 0
    %1727 = vmatpush1.bf16.msra.mxu0 %v1703
    %1728 = vmatprep.subr.bf16.mxu0 0
    %1729 = vmatpush1.bf16.msra.mxu0 0
    %1730 = vmatprep.subr.bf16.mxu0 0
    %1731 = vmatpush1.bf16.msra.mxu0 0
    %1732 = vmatprep.subr.bf16.mxu0 0
    %1733 = vmatpush1.bf16.msra.mxu0 0
    %1734 = vmatprep.subr.bf16.mxu0 0
    %1735 = vmatpush1.bf16.msra.mxu0 0
    %1736 = vmatprep.subr.bf16.mxu0 0
    %1737 = vmatpush1.bf16.msra.mxu0 0
    %1738 = vmatprep.subr.bf16.mxu0 0
    %1739 = vmatpush1.bf16.msra.mxu0 0
    %1740 = vmatprep.subr.bf16.mxu0 0
    %1741 = vmatpush1.bf16.msra.mxu0 0
    %1742 = vmatprep.subr.bf16.mxu0 0
    %1743 = vmatpush1.bf16.msra.mxu0 0
    %1744 = vmatprep.mubr.bf16.mxu0 0
    %1745 = vmatmul.mubr.bf16.gmra.mrb[0].mxu0 %v1522
    %v1746 = vpop.f32.mrb[0].mxu0
    %v1747 = vadd.f32 %v1662, %v1746
    %v1748 = vpop.f32.mrb[0].mxu0
    %v1749 = vpop.f32.mrb[0].mxu0
    %v1750 = vadd.f32 %v1662, %v1749
    %v1751 = vpop.f32.mrb[0].mxu0
    %1752 = vdwg.mxu0
    %1753 = vst.msk [vmem:[#allocation2 + $0x10] sm:$0xff] %vm461, %v1747
    %1754 = vst.msk [vmem:[#allocation2 + $0x18] sm:$0xff] %vm461, %v1750
    %s1755 = scalar_lea.vmem %s4, 384
    %v1756 = vld [vmem:[%s1755] sm:$0xf]
    %v1757 = vld [vmem:[%s1755 + $0x4] sm:$0xf]
    %v1758 = vld [vmem:[%s1755 + $0x8] sm:$0xf]
    %v1759 = vld [vmem:[%s1755 + $0xc] sm:$0xf]
    %v1760 = vld [vmem:[%s1755 + $0x10] sm:$0xf]
    %v1761 = vld [vmem:[%s1755 + $0x14] sm:$0xf]
    %v1762 = vld [vmem:[%s1755 + $0x18] sm:$0xf]
    %v1763 = vld [vmem:[%s1755 + $0x1c] sm:$0xf]
    %v1764 = vld [vmem:[%s1755 + $0x20] sm:$0xf]
    %v1765 = vld [vmem:[%s1755 + $0x24] sm:$0xf]
    %v1766 = vld [vmem:[%s1755 + $0x28] sm:$0xf]
    %v1767 = vld [vmem:[%s1755 + $0x2c] sm:$0xf]
    %v1768 = vld [vmem:[%s1755 + $0x30] sm:$0xf]
    %v1769 = vld [vmem:[%s1755 + $0x34] sm:$0xf]
    %v1770 = vld [vmem:[%s1755 + $0x38] sm:$0xf]
    %v1771 = vld [vmem:[%s1755 + $0x3c] sm:$0xf]
    %s1772 = scalar_lea.vmem %s5, 6
    %v1773 = vld [vmem:[%s1772] sm:$0x1]
    %v1775 = vlaneseq
    %v1776 = vshrl.u32 %v1775, 7
    %v1777 = vsub.s32 0, %v1776
    %v1778 = vrot.slane %v1773, %v1777
    %v1796 = vunpack.c.l.b16 %v1756
    %v1797 = vunpack.c.l.b16 %v1757
    %v1798 = vunpack.c.l.b16 %v1758
    %v1799 = vunpack.c.l.b16 %v1759
    %v1800 = vunpack.c.l.b16 %v1760
    %v1801 = vunpack.c.l.b16 %v1761
    %v1802 = vunpack.c.l.b16 %v1762
    %v1803 = vunpack.c.l.b16 %v1763
    %v1804 = vunpack.c.l.b16 %v1764
    %v1805 = vunpack.c.l.b16 %v1765
    %v1806 = vunpack.c.l.b16 %v1766
    %v1807 = vunpack.c.l.b16 %v1767
    %v1808 = vunpack.c.l.b16 %v1768
    %v1809 = vunpack.c.l.b16 %v1769
    %v1810 = vunpack.c.l.b16 %v1770
    %v1811 = vunpack.c.l.b16 %v1771
    %v1812 = vpack.c.b16 %v1797, %v1796
    %v1813 = vpack.c.b16 %v1799, %v1798
    %v1814 = vpack.c.b16 %v1801, %v1800
    %v1815 = vpack.c.b16 %v1803, %v1802
    %v1816 = vpack.c.b16 %v1805, %v1804
    %v1817 = vpack.c.b16 %v1807, %v1806
    %v1818 = vpack.c.b16 %v1809, %v1808
    %v1819 = vpack.c.b16 %v1811, %v1810
    %1828 = vmatprep.subr.bf16.mxu0 0
    %1829 = vmatpush1.bf16.msra.mxu0 %v1812
    %1830 = vmatprep.subr.bf16.mxu0 0
    %1831 = vmatpush1.bf16.msra.mxu0 %v1813
    %1832 = vmatprep.subr.bf16.mxu0 0
    %1833 = vmatpush1.bf16.msra.mxu0 %v1814
    %1834 = vmatprep.subr.bf16.mxu0 0
    %1835 = vmatpush1.bf16.msra.mxu0 %v1815
    %1836 = vmatprep.subr.bf16.mxu0 0
    %1837 = vmatpush1.bf16.msra.mxu0 %v1816
    %1838 = vmatprep.subr.bf16.mxu0 0
    %1839 = vmatpush1.bf16.msra.mxu0 %v1817
    %1840 = vmatprep.subr.bf16.mxu0 0
    %1841 = vmatpush1.bf16.msra.mxu0 %v1818
    %1842 = vmatprep.subr.bf16.mxu0 0
    %1843 = vmatpush1.bf16.msra.mxu0 %v1819
    %1844 = vmatprep.subr.bf16.mxu0 0
    %1845 = vmatpush1.bf16.msra.mxu0 0
    %1846 = vmatprep.subr.bf16.mxu0 0
    %1847 = vmatpush1.bf16.msra.mxu0 0
    %1848 = vmatprep.subr.bf16.mxu0 0
    %1849 = vmatpush1.bf16.msra.mxu0 0
    %1850 = vmatprep.subr.bf16.mxu0 0
    %1851 = vmatpush1.bf16.msra.mxu0 0
    %1852 = vmatprep.subr.bf16.mxu0 0
    %1853 = vmatpush1.bf16.msra.mxu0 0
    %1854 = vmatprep.subr.bf16.mxu0 0
    %1855 = vmatpush1.bf16.msra.mxu0 0
    %1856 = vmatprep.subr.bf16.mxu0 0
    %1857 = vmatpush1.bf16.msra.mxu0 0
    %1858 = vmatprep.subr.bf16.mxu0 0
    %1859 = vmatpush1.bf16.msra.mxu0 0
    %1860 = vmatprep.mubr.bf16.mxu0 0
    %1861 = vmatmul.mubr.bf16.gmra.mrb[0].mxu0 %v1522
    %v1862 = vpop.f32.mrb[0].mxu0
    %v1863 = vadd.f32 %v1778, %v1862
    %v1864 = vpop.f32.mrb[0].mxu0
    %v1865 = vpop.f32.mrb[0].mxu0
    %v1866 = vadd.f32 %v1778, %v1865
    %v1867 = vpop.f32.mrb[0].mxu0
    %1868 = vdwg.mxu0
    %1869 = vst.msk [vmem:[#allocation2 + $0x20] sm:$0xff] %vm461, %v1863
    %1870 = vst.msk [vmem:[#allocation2 + $0x28] sm:$0xff] %vm461, %v1866
    %s1871 = scalar_lea.vmem %s4, 448
    %v1872 = vld [vmem:[%s1871] sm:$0xf]
    %v1873 = vld [vmem:[%s1871 + $0x4] sm:$0xf]
    %v1874 = vld [vmem:[%s1871 + $0x8] sm:$0xf]
    %v1875 = vld [vmem:[%s1871 + $0xc] sm:$0xf]
    %v1876 = vld [vmem:[%s1871 + $0x10] sm:$0xf]
    %v1877 = vld [vmem:[%s1871 + $0x14] sm:$0xf]
    %v1878 = vld [vmem:[%s1871 + $0x18] sm:$0xf]
    %v1879 = vld [vmem:[%s1871 + $0x1c] sm:$0xf]
    %v1880 = vld [vmem:[%s1871 + $0x20] sm:$0xf]
    %v1881 = vld [vmem:[%s1871 + $0x24] sm:$0xf]
    %v1882 = vld [vmem:[%s1871 + $0x28] sm:$0xf]
    %v1883 = vld [vmem:[%s1871 + $0x2c] sm:$0xf]
    %v1884 = vld [vmem:[%s1871 + $0x30] sm:$0xf]
    %v1885 = vld [vmem:[%s1871 + $0x34] sm:$0xf]
    %v1886 = vld [vmem:[%s1871 + $0x38] sm:$0xf]
    %v1887 = vld [vmem:[%s1871 + $0x3c] sm:$0xf]
    %s1888 = scalar_lea.vmem %s5, 7
    %v1889 = vld [vmem:[%s1888] sm:$0x1]
    %v1891 = vlaneseq
    %v1892 = vshrl.u32 %v1891, 7
    %v1893 = vsub.s32 0, %v1892
    %v1894 = vrot.slane %v1889, %v1893
    %v1912 = vunpack.c.l.b16 %v1872
    %v1913 = vunpack.c.l.b16 %v1873
    %v1914 = vunpack.c.l.b16 %v1874
    %v1915 = vunpack.c.l.b16 %v1875
    %v1916 = vunpack.c.l.b16 %v1876
    %v1917 = vunpack.c.l.b16 %v1877
    %v1918 = vunpack.c.l.b16 %v1878
    %v1919 = vunpack.c.l.b16 %v1879
    %v1920 = vunpack.c.l.b16 %v1880
    %v1921 = vunpack.c.l.b16 %v1881
    %v1922 = vunpack.c.l.b16 %v1882
    %v1923 = vunpack.c.l.b16 %v1883
    %v1924 = vunpack.c.l.b16 %v1884
    %v1925 = vunpack.c.l.b16 %v1885
    %v1926 = vunpack.c.l.b16 %v1886
    %v1927 = vunpack.c.l.b16 %v1887
    %v1928 = vpack.c.b16 %v1913, %v1912
    %v1929 = vpack.c.b16 %v1915, %v1914
    %v1930 = vpack.c.b16 %v1917, %v1916
    %v1931 = vpack.c.b16 %v1919, %v1918
    %v1932 = vpack.c.b16 %v1921, %v1920
    %v1933 = vpack.c.b16 %v1923, %v1922
    %v1934 = vpack.c.b16 %v1925, %v1924
    %v1935 = vpack.c.b16 %v1927, %v1926
    %1944 = vmatprep.subr.bf16.mxu0 0
    %1945 = vmatpush1.bf16.msra.mxu0 %v1928
    %1946 = vmatprep.subr.bf16.mxu0 0
    %1947 = vmatpush1.bf16.msra.mxu0 %v1929
    %1948 = vmatprep.subr.bf16.mxu0 0
    %1949 = vmatpush1.bf16.msra.mxu0 %v1930
    %1950 = vmatprep.subr.bf16.mxu0 0
    %1951 = vmatpush1.bf16.msra.mxu0 %v1931
    %1952 = vmatprep.subr.bf16.mxu0 0
    %1953 = vmatpush1.bf16.msra.mxu0 %v1932
    %1954 = vmatprep.subr.bf16.mxu0 0
    %1955 = vmatpush1.bf16.msra.mxu0 %v1933
    %1956 = vmatprep.subr.bf16.mxu0 0
    %1957 = vmatpush1.bf16.msra.mxu0 %v1934
    %1958 = vmatprep.subr.bf16.mxu0 0
    %1959 = vmatpush1.bf16.msra.mxu0 %v1935
    %1960 = vmatprep.subr.bf16.mxu0 0
    %1961 = vmatpush1.bf16.msra.mxu0 0
    %1962 = vmatprep.subr.bf16.mxu0 0
    %1963 = vmatpush1.bf16.msra.mxu0 0
    %1964 = vmatprep.subr.bf16.mxu0 0
    %1965 = vmatpush1.bf16.msra.mxu0 0
    %1966 = vmatprep.subr.bf16.mxu0 0
    %1967 = vmatpush1.bf16.msra.mxu0 0
    %1968 = vmatprep.subr.bf16.mxu0 0
    %1969 = vmatpush1.bf16.msra.mxu0 0
    %1970 = vmatprep.subr.bf16.mxu0 0
    %1971 = vmatpush1.bf16.msra.mxu0 0
    %1972 = vmatprep.subr.bf16.mxu0 0
    %1973 = vmatpush1.bf16.msra.mxu0 0
    %1974 = vmatprep.subr.bf16.mxu0 0
    %1975 = vmatpush1.bf16.msra.mxu0 0
    %1976 = vmatprep.mubr.bf16.mxu0 0
    %1977 = vmatmul.mubr.bf16.gmra.mrb[0].mxu0 %v1522
    %v1978 = vpop.f32.mrb[0].mxu0
    %v1979 = vadd.f32 %v1894, %v1978
    %v1980 = vpop.f32.mrb[0].mxu0
    %v1981 = vpop.f32.mrb[0].mxu0
    %v1982 = vadd.f32 %v1894, %v1981
    %v1983 = vpop.f32.mrb[0].mxu0
    %1984 = vdwg.mxu0
    %1985 = vst.msk [vmem:[#allocation2 + $0x30] sm:$0xff] %vm461, %v1979
    %1986 = vst.msk [vmem:[#allocation2 + $0x38] sm:$0xff] %vm461, %v1982
    %v1987 = vld [vmem:[#allocation2] sm:$0xff]
    %v1988 = vld [vmem:[#allocation2 + $0x8] sm:$0xff]
    %v1989 = vld [vmem:[#allocation2 + $0x10] sm:$0xff]
    %v1990 = vld [vmem:[#allocation2 + $0x18] sm:$0xff]
    %v1991 = vld [vmem:[#allocation2 + $0x20] sm:$0xff]
    %v1992 = vld [vmem:[#allocation2 + $0x28] sm:$0xff]
    %v1993 = vld [vmem:[#allocation2 + $0x30] sm:$0xff]
    %v1994 = vld [vmem:[#allocation2 + $0x38] sm:$0xff]
    %v1995 = vld [vmem:[%s3] sm:$0xff]
    %v1996 = vld [vmem:[%s3 + $0x8] sm:$0xff]
    %v1997 = vld [vmem:[%s3 + $0x10] sm:$0xff]
    %v1998 = vld [vmem:[%s3 + $0x18] sm:$0xff]
    %v1999 = vld [vmem:[%s3 + $0x20] sm:$0xff]
    %v2000 = vld [vmem:[%s3 + $0x28] sm:$0xff]
    %v2001 = vld [vmem:[%s3 + $0x30] sm:$0xff]
    %v2002 = vld [vmem:[%s3 + $0x38] sm:$0xff]
    %2011 = vrot.lane.b32.xlu0 %v1987, 96
    %v2012 = vpop.permute.xlu0 %2011
    %2013 = vrot.lane.b32.xlu0 %v1988, 96
    %v2014 = vpop.permute.xlu0 %2013
    %2015 = vrot.lane.b32.xlu0 %v1989, 96
    %v2016 = vpop.permute.xlu0 %2015
    %2017 = vrot.lane.b32.xlu0 %v1990, 96
    %v2018 = vpop.permute.xlu0 %2017
    %2019 = vrot.lane.b32.xlu0 %v1991, 96
    %v2020 = vpop.permute.xlu0 %2019
    %2021 = vrot.lane.b32.xlu0 %v1992, 96
    %v2022 = vpop.permute.xlu0 %2021
    %2023 = vrot.lane.b32.xlu0 %v1993, 96
    %v2024 = vpop.permute.xlu0 %2023
    %2025 = vrot.lane.b32.xlu0 %v1994, 96
    %v2026 = vpop.permute.xlu0 %2025
    %v2027 = vsel %vm852, %v1987, 0
    %v2029 = vsel %vm852, %v1988, 0
    %v2031 = vsel %vm852, %v1989, 0
    %v2033 = vsel %vm852, %v1990, 0
    %v2035 = vsel %vm852, %v1991, 0
    %v2037 = vsel %vm852, %v1992, 0
    %v2039 = vsel %vm852, %v1993, 0
    %v2041 = vsel %vm852, %v1994, 0
    %v2043 = vsel %vm852, %v2012, 0
    %v2045 = vsel %vm852, %v2014, 0
    %v2047 = vsel %vm852, %v2016, 0
    %v2049 = vsel %vm852, %v2018, 0
    %v2051 = vsel %vm852, %v2020, 0
    %v2053 = vsel %vm852, %v2022, 0
    %v2055 = vsel %vm852, %v2024, 0
    %v2057 = vsel %vm852, %v2026, 0
    %2059 = vmatprep.subr.mxu0 0.0
    %2060 = vmatpush1.xpose.msra.mxu0 %v2043
    %2061 = vmatprep.subr.mxu0 0.0
    %2062 = vmatpush1.xpose.msra.mxu0 %v2045
    %2063 = vmatprep.subr.mxu0 0.0
    %2064 = vmatpush1.xpose.msra.mxu0 %v2047
    %2065 = vmatprep.subr.mxu0 0.0
    %2066 = vmatpush1.xpose.msra.mxu0 %v2049
    %2067 = vmatprep.subr.mxu0 0.0
    %2068 = vmatpush1.xpose.msra.mxu0 %v2051
    %2069 = vmatprep.subr.mxu0 0.0
    %2070 = vmatpush1.xpose.msra.mxu0 %v2053
    %2071 = vmatprep.subr.mxu0 0.0
    %2072 = vmatpush1.xpose.msra.mxu0 %v2055
    %2073 = vmatprep.subr.mxu0 0.0
    %2074 = vmatpush1.xpose.msra.mxu0 %v2057
    %2075 = vmatprep.subr.mxu0 0.0
    %2076 = vmatpush1.xpose.msra.mxu0 0.0
    %2077 = vmatprep.subr.mxu0 0.0
    %2078 = vmatpush1.xpose.msra.mxu0 0.0
    %2079 = vmatprep.subr.mxu0 0.0
    %2080 = vmatpush1.xpose.msra.mxu0 0.0
    %2081 = vmatprep.subr.mxu0 0.0
    %2082 = vmatpush1.xpose.msra.mxu0 0.0
    %2083 = vmatprep.subr.mxu0 0.0
    %2084 = vmatpush1.xpose.msra.mxu0 0.0
    %2085 = vmatprep.subr.mxu0 0.0
    %2086 = vmatpush1.xpose.msra.mxu0 0.0
    %2087 = vmatprep.subr.mxu0 0.0
    %2088 = vmatpush1.xpose.msra.mxu0 0.0
    %2089 = vmatprep.subr.mxu0 0.0
    %2090 = vmatpush1.xpose.msra.mxu0 0.0
    %2091 = vmatprep.subr.mxu0 0.0
    %2092 = vmatpush1.xpose.msra.mxu0 0.0
    %2093 = vmatprep.subr.mxu0 0.0
    %2094 = vmatpush1.xpose.msra.mxu0 0.0
    %2095 = vmatprep.subr.mxu0 0.0
    %2096 = vmatpush1.xpose.msra.mxu0 0.0
    %2097 = vmatprep.subr.mxu0 0.0
    %2098 = vmatpush1.xpose.msra.mxu0 0.0
    %2099 = vmatprep.subr.mxu0 0.0
    %2100 = vmatpush1.xpose.msra.mxu0 0.0
    %2101 = vmatprep.subr.mxu0 0.0
    %2102 = vmatpush1.xpose.msra.mxu0 0.0
    %2103 = vmatprep.subr.mxu0 0.0
    %2104 = vmatpush1.xpose.msra.mxu0 0.0
    %2105 = vmatprep.subr.mxu0 0.0
    %2106 = vmatpush1.xpose.msra.mxu0 0.0
    %2107 = vmatprep.subr.mxu0 0.0
    %2108 = vmatpush1.xpose.msra.mxu0 0.0
    %2109 = vmatprep.subr.mxu0 0.0
    %2110 = vmatpush1.xpose.msra.mxu0 0.0
    %2111 = vmatprep.subr.mxu0 0.0
    %2112 = vmatpush1.xpose.msra.mxu0 0.0
    %2113 = vmatprep.subr.mxu0 0.0
    %2114 = vmatpush1.xpose.msra.mxu0 0.0
    %2115 = vmatprep.subr.mxu0 0.0
    %2116 = vmatpush1.xpose.msra.mxu0 0.0
    %2117 = vmatprep.subr.mxu0 0.0
    %2118 = vmatpush1.xpose.msra.mxu0 0.0
    %2119 = vmatprep.subr.mxu0 0.0
    %2120 = vmatpush1.xpose.msra.mxu0 0.0
    %2121 = vmatprep.subr.mxu0 0.0
    %2122 = vmatpush1.xpose.msra.mxu0 0.0
    %2123 = vmatprep.mubr.f32.mxu0 0.0
    %2124 = vmatmul.mubr.f32.gmra.mrb[0].mxu0 %v2027
    %v2125 = vpop.f32.mrb[0].mxu0
    %v2126 = vadd.f32 %v1995, %v2125
    %v2127 = vpop.f32.mrb[0].mxu0
    %2128 = vmatprep.mubr.f32.mxu0 0.0
    %2129 = vmatmul.mubr.f32.gmra.mrb[0].mxu0 %v2029
    %v2130 = vpop.f32.mrb[0].mxu0
    %v2131 = vadd.f32 %v1996, %v2130
    %v2132 = vpop.f32.mrb[0].mxu0
    %2133 = vmatprep.mubr.f32.mxu0 0.0
    %2134 = vmatmul.mubr.f32.gmra.mrb[0].mxu0 %v2031
    %v2135 = vpop.f32.mrb[0].mxu0
    %v2136 = vadd.f32 %v1997, %v2135
    %v2137 = vpop.f32.mrb[0].mxu0
    %2138 = vmatprep.mubr.f32.mxu0 0.0
    %2139 = vmatmul.mubr.f32.gmra.mrb[0].mxu0 %v2033
    %v2140 = vpop.f32.mrb[0].mxu0
    %v2141 = vadd.f32 %v1998, %v2140
    %v2142 = vpop.f32.mrb[0].mxu0
    %2143 = vmatprep.mubr.f32.mxu0 0.0
    %2144 = vmatmul.mubr.f32.gmra.mrb[0].mxu0 %v2035
    %v2145 = vpop.f32.mrb[0].mxu0
    %v2146 = vadd.f32 %v1999, %v2145
    %v2147 = vpop.f32.mrb[0].mxu0
    %2148 = vmatprep.mubr.f32.mxu0 0.0
    %2149 = vmatmul.mubr.f32.gmra.mrb[0].mxu0 %v2037
    %v2150 = vpop.f32.mrb[0].mxu0
    %v2151 = vadd.f32 %v2000, %v2150
    %v2152 = vpop.f32.mrb[0].mxu0
    %2153 = vmatprep.mubr.f32.mxu0 0.0
    %2154 = vmatmul.mubr.f32.gmra.mrb[0].mxu0 %v2039
    %v2155 = vpop.f32.mrb[0].mxu0
    %v2156 = vadd.f32 %v2001, %v2155
    %v2157 = vpop.f32.mrb[0].mxu0
    %2158 = vmatprep.mubr.f32.mxu0 0.0
    %2159 = vmatmul.mubr.f32.gmra.mrb[0].mxu0 %v2041
    %v2160 = vpop.f32.mrb[0].mxu0
    %v2161 = vadd.f32 %v2002, %v2160
    %v2162 = vpop.f32.mrb[0].mxu0
    %2163 = vdwg.mxu0
    %v2164 = vsel %vm154, %v2126, -inf
    %2165 = vmax.xlane.f32.xlu0 %v2164
    %v2166 = vpop.xlane.xlu0 %2165
    %v2167 = vsel %vm154, %v2131, -inf
    %2168 = vmax.xlane.f32.xlu0 %v2167
    %v2169 = vpop.xlane.xlu0 %2168
    %v2170 = vsel %vm154, %v2136, -inf
    %2171 = vmax.xlane.f32.xlu0 %v2170
    %v2172 = vpop.xlane.xlu0 %2171
    %v2173 = vsel %vm154, %v2141, -inf
    %2174 = vmax.xlane.f32.xlu0 %v2173
    %v2175 = vpop.xlane.xlu0 %2174
    %v2176 = vsel %vm154, %v2146, -inf
    %2177 = vmax.xlane.f32.xlu0 %v2176
    %v2178 = vpop.xlane.xlu0 %2177
    %v2179 = vsel %vm154, %v2151, -inf
    %2180 = vmax.xlane.f32.xlu0 %v2179
    %v2181 = vpop.xlane.xlu0 %2180
    %v2182 = vsel %vm154, %v2156, -inf
    %2183 = vmax.xlane.f32.xlu0 %v2182
    %v2184 = vpop.xlane.xlu0 %2183
    %v2185 = vsel %vm154, %v2161, -inf
    %2186 = vmax.xlane.f32.xlu0 %v2185
    %v2187 = vpop.xlane.xlu0 %2186
    %v2188 = vsub.f32 %v2126, %v2166
    %v2189 = vsub.f32 %v2131, %v2169
    %v2190 = vsub.f32 %v2136, %v2172
    %v2191 = vsub.f32 %v2141, %v2175
    %v2192 = vsub.f32 %v2146, %v2178
    %v2193 = vsub.f32 %v2151, %v2181
    %v2194 = vsub.f32 %v2156, %v2184
    %v2195 = vsub.f32 %v2161, %v2187
    %v2196 = vmul.f32 %v2188, 1.442695
    %v2197 = vpow.pop %v2196
    %v2198 = vmul.f32 %v2189, 1.442695
    %v2199 = vpow.pop %v2198
    %v2200 = vmul.f32 %v2190, 1.442695
    %v2201 = vpow.pop %v2200
    %v2202 = vmul.f32 %v2191, 1.442695
    %v2203 = vpow.pop %v2202
    %v2204 = vmul.f32 %v2192, 1.442695
    %v2205 = vpow.pop %v2204
    %v2206 = vmul.f32 %v2193, 1.442695
    %v2207 = vpow.pop %v2206
    %v2208 = vmul.f32 %v2194, 1.442695
    %v2209 = vpow.pop %v2208
    %v2210 = vmul.f32 %v2195, 1.442695
    %v2211 = vpow.pop %v2210
    %v2212 = vsel %vm154, %v2197, 0.0
    %2213 = vadd.xlane.f32.xlu0 %v2212
    %v2214 = vpop.xlane.xlu0 %2213
    %v2215 = vsel %vm154, %v2199, 0.0
    %2216 = vadd.xlane.f32.xlu0 %v2215
    %v2217 = vpop.xlane.xlu0 %2216
    %v2218 = vsel %vm154, %v2201, 0.0
    %2219 = vadd.xlane.f32.xlu0 %v2218
    %v2220 = vpop.xlane.xlu0 %2219
    %v2221 = vsel %vm154, %v2203, 0.0
    %2222 = vadd.xlane.f32.xlu0 %v2221
    %v2223 = vpop.xlane.xlu0 %2222
    %v2224 = vsel %vm154, %v2205, 0.0
    %2225 = vadd.xlane.f32.xlu0 %v2224
    %v2226 = vpop.xlane.xlu0 %2225
    %v2227 = vsel %vm154, %v2207, 0.0
    %2228 = vadd.xlane.f32.xlu0 %v2227
    %v2229 = vpop.xlane.xlu0 %2228
    %v2230 = vsel %vm154, %v2209, 0.0
    %2231 = vadd.xlane.f32.xlu0 %v2230
    %v2232 = vpop.xlane.xlu0 %2231
    %v2233 = vsel %vm154, %v2211, 0.0
    %2234 = vadd.xlane.f32.xlu0 %v2233
    %v2235 = vpop.xlane.xlu0 %2234
    %v2236 = vrcp.pop %v2214
    %v2237 = vmul.f32 %v2197, %v2236
    %v2238 = vrcp.pop %v2217
    %v2239 = vmul.f32 %v2199, %v2238
    %v2240 = vrcp.pop %v2220
    %v2241 = vmul.f32 %v2201, %v2240
    %v2242 = vrcp.pop %v2223
    %v2243 = vmul.f32 %v2203, %v2242
    %v2244 = vrcp.pop %v2226
    %v2245 = vmul.f32 %v2205, %v2244
    %v2246 = vrcp.pop %v2229
    %v2247 = vmul.f32 %v2207, %v2246
    %v2248 = vrcp.pop %v2232
    %v2249 = vmul.f32 %v2209, %v2248
    %v2250 = vrcp.pop %v2235
    %v2251 = vmul.f32 %v2211, %v2250
    %2252 = vrot.lane.b32.xlu0 %v1987, 64
    %v2253 = vpop.permute.xlu0 %2252
    %2254 = vrot.lane.b32.xlu0 %v1988, 64
    %v2255 = vpop.permute.xlu0 %2254
    %2256 = vrot.lane.b32.xlu0 %v1989, 64
    %v2257 = vpop.permute.xlu0 %2256
    %2258 = vrot.lane.b32.xlu0 %v1990, 64
    %v2259 = vpop.permute.xlu0 %2258
    %2260 = vrot.lane.b32.xlu0 %v1991, 64
    %v2261 = vpop.permute.xlu0 %2260
    %2262 = vrot.lane.b32.xlu0 %v1992, 64
    %v2263 = vpop.permute.xlu0 %2262
    %2264 = vrot.lane.b32.xlu0 %v1993, 64
    %v2265 = vpop.permute.xlu0 %2264
    %2266 = vrot.lane.b32.xlu0 %v1994, 64
    %v2267 = vpop.permute.xlu0 %2266
    %v2277 = vsel %vm154, %v2237, 0
    %v2280 = vsel %vm154, %v2239, 0
    %v2283 = vsel %vm154, %v2241, 0
    %v2286 = vsel %vm154, %v2243, 0
    %v2289 = vsel %vm154, %v2245, 0
    %v2292 = vsel %vm154, %v2247, 0
    %v2295 = vsel %vm154, %v2249, 0
    %v2298 = vsel %vm154, %v2251, 0
    %2300 = vmatprep.subr.mxu0 0.0
    %2301 = vmatpush1.msra.mxu0 %v2253
    %2302 = vmatprep.subr.mxu0 0.0
    %2303 = vmatpush1.msra.mxu0 %v2255
    %2304 = vmatprep.subr.mxu0 0.0
    %2305 = vmatpush1.msra.mxu0 %v2257
    %2306 = vmatprep.subr.mxu0 0.0
    %2307 = vmatpush1.msra.mxu0 %v2259
    %2308 = vmatprep.subr.mxu0 0.0
    %2309 = vmatpush1.msra.mxu0 %v2261
    %2310 = vmatprep.subr.mxu0 0.0
    %2311 = vmatpush1.msra.mxu0 %v2263
    %2312 = vmatprep.subr.mxu0 0.0
    %2313 = vmatpush1.msra.mxu0 %v2265
    %2314 = vmatprep.subr.mxu0 0.0
    %2315 = vmatpush1.msra.mxu0 %v2267
    %2316 = vmatprep.subr.mxu0 0.0
    %2317 = vmatpush1.msra.mxu0 0.0
    %2318 = vmatprep.subr.mxu0 0.0
    %2319 = vmatpush1.msra.mxu0 0.0
    %2320 = vmatprep.subr.mxu0 0.0
    %2321 = vmatpush1.msra.mxu0 0.0
    %2322 = vmatprep.subr.mxu0 0.0
    %2323 = vmatpush1.msra.mxu0 0.0
    %2324 = vmatprep.subr.mxu0 0.0
    %2325 = vmatpush1.msra.mxu0 0.0
    %2326 = vmatprep.subr.mxu0 0.0
    %2327 = vmatpush1.msra.mxu0 0.0
    %2328 = vmatprep.subr.mxu0 0.0
    %2329 = vmatpush1.msra.mxu0 0.0
    %2330 = vmatprep.subr.mxu0 0.0
    %2331 = vmatpush1.msra.mxu0 0.0
    %2332 = vmatprep.subr.mxu0 0.0
    %2333 = vmatpush1.msra.mxu0 0.0
    %2334 = vmatprep.subr.mxu0 0.0
    %2335 = vmatpush1.msra.mxu0 0.0
    %2336 = vmatprep.subr.mxu0 0.0
    %2337 = vmatpush1.msra.mxu0 0.0
    %2338 = vmatprep.subr.mxu0 0.0
    %2339 = vmatpush1.msra.mxu0 0.0
    %2340 = vmatprep.subr.mxu0 0.0
    %2341 = vmatpush1.msra.mxu0 0.0
    %2342 = vmatprep.subr.mxu0 0.0
    %2343 = vmatpush1.msra.mxu0 0.0
    %2344 = vmatprep.subr.mxu0 0.0
    %2345 = vmatpush1.msra.mxu0 0.0
    %2346 = vmatprep.subr.mxu0 0.0
    %2347 = vmatpush1.msra.mxu0 0.0
    %2348 = vmatprep.subr.mxu0 0.0
    %2349 = vmatpush1.msra.mxu0 0.0
    %2350 = vmatprep.subr.mxu0 0.0
    %2351 = vmatpush1.msra.mxu0 0.0
    %2352 = vmatprep.subr.mxu0 0.0
    %2353 = vmatpush1.msra.mxu0 0.0
    %2354 = vmatprep.subr.mxu0 0.0
    %2355 = vmatpush1.msra.mxu0 0.0
    %2356 = vmatprep.subr.mxu0 0.0
    %2357 = vmatpush1.msra.mxu0 0.0
    %2358 = vmatprep.subr.mxu0 0.0
    %2359 = vmatpush1.msra.mxu0 0.0
    %2360 = vmatprep.subr.mxu0 0.0
    %2361 = vmatpush1.msra.mxu0 0.0
    %2362 = vmatprep.subr.mxu0 0.0
    %2363 = vmatpush1.msra.mxu0 0.0
    %2364 = vmatprep.mubr.f32.mxu0 0.0
    %2365 = vmatmul.mubr.f32.gmra.mrb[0].mxu0 %v2277
    %v2366 = vpop.f32.mrb[0].mxu0
    %v2367 = vadd.f32 0.0, %v2366
    %v2368 = vpop.f32.mrb[0].mxu0
    %2369 = vmatprep.mubr.f32.mxu0 0.0
    %2370 = vmatmul.mubr.f32.gmra.mrb[0].mxu0 %v2280
    %v2371 = vpop.f32.mrb[0].mxu0
    %v2372 = vadd.f32 0.0, %v2371
    %v2373 = vpop.f32.mrb[0].mxu0
    %2374 = vmatprep.mubr.f32.mxu0 0.0
    %2375 = vmatmul.mubr.f32.gmra.mrb[0].mxu0 %v2283
    %v2376 = vpop.f32.mrb[0].mxu0
    %v2377 = vadd.f32 0.0, %v2376
    %v2378 = vpop.f32.mrb[0].mxu0
    %2379 = vmatprep.mubr.f32.mxu0 0.0
    %2380 = vmatmul.mubr.f32.gmra.mrb[0].mxu0 %v2286
    %v2381 = vpop.f32.mrb[0].mxu0
    %v2382 = vadd.f32 0.0, %v2381
    %v2383 = vpop.f32.mrb[0].mxu0
    %2384 = vmatprep.mubr.f32.mxu0 0.0
    %2385 = vmatmul.mubr.f32.gmra.mrb[0].mxu0 %v2289
    %v2386 = vpop.f32.mrb[0].mxu0
    %v2387 = vadd.f32 0.0, %v2386
    %v2388 = vpop.f32.mrb[0].mxu0
    %2389 = vmatprep.mubr.f32.mxu0 0.0
    %2390 = vmatmul.mubr.f32.gmra.mrb[0].mxu0 %v2292
    %v2391 = vpop.f32.mrb[0].mxu0
    %v2392 = vadd.f32 0.0, %v2391
    %v2393 = vpop.f32.mrb[0].mxu0
    %2394 = vmatprep.mubr.f32.mxu0 0.0
    %2395 = vmatmul.mubr.f32.gmra.mrb[0].mxu0 %v2295
    %v2396 = vpop.f32.mrb[0].mxu0
    %v2397 = vadd.f32 0.0, %v2396
    %v2398 = vpop.f32.mrb[0].mxu0
    %2399 = vmatprep.mubr.f32.mxu0 0.0
    %2400 = vmatmul.mubr.f32.gmra.mrb[0].mxu0 %v2298
    %v2401 = vpop.f32.mrb[0].mxu0
    %v2402 = vadd.f32 0.0, %v2401
    %v2403 = vpop.f32.mrb[0].mxu0
    %2404 = vdwg.mxu0
    %s2405 = scalar_lea.vmem %s7, 1
    %v2406 = vld [vmem:[%s2405] sm:$0x1]
    %v2407 = vpack.c.bf16 %v2372, %v2367
    %s2408 = scalar_lea.vmem %s6, 64
    %v2409 = vld [vmem:[%s2408] sm:$0xf]
    %v2410 = vld [vmem:[%s2408 + $0x4] sm:$0xf]
    %v2411 = vld [vmem:[%s2408 + $0x8] sm:$0xf]
    %v2412 = vld [vmem:[%s2408 + $0xc] sm:$0xf]
    %v2417 = vunpack.c.l.b16 %v2409
    %v2418 = vunpack.c.l.b16 %v2410
    %v2419 = vunpack.c.l.b16 %v2411
    %v2420 = vunpack.c.l.b16 %v2412
    %v2421 = vpack.c.b16 %v2418, %v2417
    %v2422 = vpack.c.b16 %v2420, %v2419
    %v2426 = vsel %vm852, %v2407, 0
    %2428 = vmatprep.subr.bf16.mxu0 0
    %2429 = vmatpush1.bf16.msra.mxu0 %v2421
    %2430 = vmatprep.subr.bf16.mxu0 0
    %2431 = vmatpush1.bf16.msra.mxu0 %v2422
    %2432 = vmatprep.subr.bf16.mxu0 0
    %2433 = vmatpush1.bf16.msra.mxu0 0
    %2434 = vmatprep.subr.bf16.mxu0 0
    %2435 = vmatpush1.bf16.msra.mxu0 0
    %2436 = vmatprep.subr.bf16.mxu0 0
    %2437 = vmatpush1.bf16.msra.mxu0 0
    %2438 = vmatprep.subr.bf16.mxu0 0
    %2439 = vmatpush1.bf16.msra.mxu0 0
    %2440 = vmatprep.subr.bf16.mxu0 0
    %2441 = vmatpush1.bf16.msra.mxu0 0
    %2442 = vmatprep.subr.bf16.mxu0 0
    %2443 = vmatpush1.bf16.msra.mxu0 0
    %2444 = vmatprep.subr.bf16.mxu0 0
    %2445 = vmatpush1.bf16.msra.mxu0 0
    %2446 = vmatprep.subr.bf16.mxu0 0
    %2447 = vmatpush1.bf16.msra.mxu0 0
    %2448 = vmatprep.subr.bf16.mxu0 0
    %2449 = vmatpush1.bf16.msra.mxu0 0
    %2450 = vmatprep.subr.bf16.mxu0 0
    %2451 = vmatpush1.bf16.msra.mxu0 0
    %2452 = vmatprep.subr.bf16.mxu0 0
    %2453 = vmatpush1.bf16.msra.mxu0 0
    %2454 = vmatprep.subr.bf16.mxu0 0
    %2455 = vmatpush1.bf16.msra.mxu0 0
    %2456 = vmatprep.subr.bf16.mxu0 0
    %2457 = vmatpush1.bf16.msra.mxu0 0
    %2458 = vmatprep.subr.bf16.mxu0 0
    %2459 = vmatpush1.bf16.msra.mxu0 0
    %2460 = vmatprep.mubr.bf16.mxu0 0
    %2461 = vmatmul.mubr.bf16.gmra.mrb[0].mxu0 %v2426
    %v2462 = vpop.f32.mrb[0].mxu0
    %v2463 = vadd.f32 0.0, %v2462
    %v2464 = vpop.f32.mrb[0].mxu0
    %v2465 = vpop.f32.mrb[0].mxu0
    %v2466 = vadd.f32 0.0, %v2465
    %v2467 = vpop.f32.mrb[0].mxu0
    %2468 = vdwg.mxu0
    %v2470 = vlaneseq
    %v2471 = vshrl.u32 %v2470, 7
    %v2472 = vsub.s32 0, %v2471
    %v2473 = vrot.slane %v2406, %v2472
    %v2475 = vadd.f32 %v2473, %v2463
    %v2476 = vadd.f32 %v2473, %v2466
    %v2477 = vpack.c.bf16 %v2382, %v2377
    %s2478 = scalar_lea.vmem %s6, 80
    %v2479 = vld [vmem:[%s2478] sm:$0xf]
    %v2480 = vld [vmem:[%s2478 + $0x4] sm:$0xf]
    %v2481 = vld [vmem:[%s2478 + $0x8] sm:$0xf]
    %v2482 = vld [vmem:[%s2478 + $0xc] sm:$0xf]
    %v2487 = vunpack.c.l.b16 %v2479
    %v2488 = vunpack.c.l.b16 %v2480
    %v2489 = vunpack.c.l.b16 %v2481
    %v2490 = vunpack.c.l.b16 %v2482
    %v2491 = vpack.c.b16 %v2488, %v2487
    %v2492 = vpack.c.b16 %v2490, %v2489
    %v2496 = vsel %vm852, %v2477, 0
    %2498 = vmatprep.subr.bf16.mxu0 0
    %2499 = vmatpush1.bf16.msra.mxu0 %v2491
    %2500 = vmatprep.subr.bf16.mxu0 0
    %2501 = vmatpush1.bf16.msra.mxu0 %v2492
    %2502 = vmatprep.subr.bf16.mxu0 0
    %2503 = vmatpush1.bf16.msra.mxu0 0
    %2504 = vmatprep.subr.bf16.mxu0 0
    %2505 = vmatpush1.bf16.msra.mxu0 0
    %2506 = vmatprep.subr.bf16.mxu0 0
    %2507 = vmatpush1.bf16.msra.mxu0 0
    %2508 = vmatprep.subr.bf16.mxu0 0
    %2509 = vmatpush1.bf16.msra.mxu0 0
    %2510 = vmatprep.subr.bf16.mxu0 0
    %2511 = vmatpush1.bf16.msra.mxu0 0
    %2512 = vmatprep.subr.bf16.mxu0 0
    %2513 = vmatpush1.bf16.msra.mxu0 0
    %2514 = vmatprep.subr.bf16.mxu0 0
    %2515 = vmatpush1.bf16.msra.mxu0 0
    %2516 = vmatprep.subr.bf16.mxu0 0
    %2517 = vmatpush1.bf16.msra.mxu0 0
    %2518 = vmatprep.subr.bf16.mxu0 0
    %2519 = vmatpush1.bf16.msra.mxu0 0
    %2520 = vmatprep.subr.bf16.mxu0 0
    %2521 = vmatpush1.bf16.msra.mxu0 0
    %2522 = vmatprep.subr.bf16.mxu0 0
    %2523 = vmatpush1.bf16.msra.mxu0 0
    %2524 = vmatprep.subr.bf16.mxu0 0
    %2525 = vmatpush1.bf16.msra.mxu0 0
    %2526 = vmatprep.subr.bf16.mxu0 0
    %2527 = vmatpush1.bf16.msra.mxu0 0
    %2528 = vmatprep.subr.bf16.mxu0 0
    %2529 = vmatpush1.bf16.msra.mxu0 0
    %2530 = vmatprep.mubr.bf16.mxu0 0
    %2531 = vmatmul.mubr.bf16.gmra.mrb[0].mxu0 %v2496
    %v2532 = vpop.f32.mrb[0].mxu0
    %v2533 = vadd.f32 0.0, %v2532
    %v2534 = vpop.f32.mrb[0].mxu0
    %v2535 = vpop.f32.mrb[0].mxu0
    %v2536 = vadd.f32 0.0, %v2535
    %v2537 = vpop.f32.mrb[0].mxu0
    %2538 = vdwg.mxu0
    %v2539 = vadd.f32 %v2475, %v2533
    %v2540 = vadd.f32 %v2476, %v2536
    %v2541 = vpack.c.bf16 %v2392, %v2387
    %s2542 = scalar_lea.vmem %s6, 96
    %v2543 = vld [vmem:[%s2542] sm:$0xf]
    %v2544 = vld [vmem:[%s2542 + $0x4] sm:$0xf]
    %v2545 = vld [vmem:[%s2542 + $0x8] sm:$0xf]
    %v2546 = vld [vmem:[%s2542 + $0xc] sm:$0xf]
    %v2551 = vunpack.c.l.b16 %v2543
    %v2552 = vunpack.c.l.b16 %v2544
    %v2553 = vunpack.c.l.b16 %v2545
    %v2554 = vunpack.c.l.b16 %v2546
    %v2555 = vpack.c.b16 %v2552, %v2551
    %v2556 = vpack.c.b16 %v2554, %v2553
    %v2560 = vsel %vm852, %v2541, 0
    %2562 = vmatprep.subr.bf16.mxu0 0
    %2563 = vmatpush1.bf16.msra.mxu0 %v2555
    %2564 = vmatprep.subr.bf16.mxu0 0
    %2565 = vmatpush1.bf16.msra.mxu0 %v2556
    %2566 = vmatprep.subr.bf16.mxu0 0
    %2567 = vmatpush1.bf16.msra.mxu0 0
    %2568 = vmatprep.subr.bf16.mxu0 0
    %2569 = vmatpush1.bf16.msra.mxu0 0
    %2570 = vmatprep.subr.bf16.mxu0 0
    %2571 = vmatpush1.bf16.msra.mxu0 0
    %2572 = vmatprep.subr.bf16.mxu0 0
    %2573 = vmatpush1.bf16.msra.mxu0 0
    %2574 = vmatprep.subr.bf16.mxu0 0
    %2575 = vmatpush1.bf16.msra.mxu0 0
    %2576 = vmatprep.subr.bf16.mxu0 0
    %2577 = vmatpush1.bf16.msra.mxu0 0
    %2578 = vmatprep.subr.bf16.mxu0 0
    %2579 = vmatpush1.bf16.msra.mxu0 0
    %2580 = vmatprep.subr.bf16.mxu0 0
    %2581 = vmatpush1.bf16.msra.mxu0 0
    %2582 = vmatprep.subr.bf16.mxu0 0
    %2583 = vmatpush1.bf16.msra.mxu0 0
    %2584 = vmatprep.subr.bf16.mxu0 0
    %2585 = vmatpush1.bf16.msra.mxu0 0
    %2586 = vmatprep.subr.bf16.mxu0 0
    %2587 = vmatpush1.bf16.msra.mxu0 0
    %2588 = vmatprep.subr.bf16.mxu0 0
    %2589 = vmatpush1.bf16.msra.mxu0 0
    %2590 = vmatprep.subr.bf16.mxu0 0
    %2591 = vmatpush1.bf16.msra.mxu0 0
    %2592 = vmatprep.subr.bf16.mxu0 0
    %2593 = vmatpush1.bf16.msra.mxu0 0
    %2594 = vmatprep.mubr.bf16.mxu0 0
    %2595 = vmatmul.mubr.bf16.gmra.mrb[0].mxu0 %v2560
    %v2596 = vpop.f32.mrb[0].mxu0
    %v2597 = vadd.f32 0.0, %v2596
    %v2598 = vpop.f32.mrb[0].mxu0
    %v2599 = vpop.f32.mrb[0].mxu0
    %v2600 = vadd.f32 0.0, %v2599
    %v2601 = vpop.f32.mrb[0].mxu0
    %2602 = vdwg.mxu0
    %v2603 = vadd.f32 %v2539, %v2597
    %v2604 = vadd.f32 %v2540, %v2600
    %v2605 = vpack.c.bf16 %v2402, %v2397
    %s2606 = scalar_lea.vmem %s6, 112
    %v2607 = vld [vmem:[%s2606] sm:$0xf]
    %v2608 = vld [vmem:[%s2606 + $0x4] sm:$0xf]
    %v2609 = vld [vmem:[%s2606 + $0x8] sm:$0xf]
    %v2610 = vld [vmem:[%s2606 + $0xc] sm:$0xf]
    %v2615 = vunpack.c.l.b16 %v2607
    %v2616 = vunpack.c.l.b16 %v2608
    %v2617 = vunpack.c.l.b16 %v2609
    %v2618 = vunpack.c.l.b16 %v2610
    %v2619 = vpack.c.b16 %v2616, %v2615
    %v2620 = vpack.c.b16 %v2618, %v2617
    %v2624 = vsel %vm852, %v2605, 0
    %2626 = vmatprep.subr.bf16.mxu0 0
    %2627 = vmatpush1.bf16.msra.mxu0 %v2619
    %2628 = vmatprep.subr.bf16.mxu0 0
    %2629 = vmatpush1.bf16.msra.mxu0 %v2620
    %2630 = vmatprep.subr.bf16.mxu0 0
    %2631 = vmatpush1.bf16.msra.mxu0 0
    %2632 = vmatprep.subr.bf16.mxu0 0
    %2633 = vmatpush1.bf16.msra.mxu0 0
    %2634 = vmatprep.subr.bf16.mxu0 0
    %2635 = vmatpush1.bf16.msra.mxu0 0
    %2636 = vmatprep.subr.bf16.mxu0 0
    %2637 = vmatpush1.bf16.msra.mxu0 0
    %2638 = vmatprep.subr.bf16.mxu0 0
    %2639 = vmatpush1.bf16.msra.mxu0 0
    %2640 = vmatprep.subr.bf16.mxu0 0
    %2641 = vmatpush1.bf16.msra.mxu0 0
    %2642 = vmatprep.subr.bf16.mxu0 0
    %2643 = vmatpush1.bf16.msra.mxu0 0
    %2644 = vmatprep.subr.bf16.mxu0 0
    %2645 = vmatpush1.bf16.msra.mxu0 0
    %2646 = vmatprep.subr.bf16.mxu0 0
    %2647 = vmatpush1.bf16.msra.mxu0 0
    %2648 = vmatprep.subr.bf16.mxu0 0
    %2649 = vmatpush1.bf16.msra.mxu0 0
    %2650 = vmatprep.subr.bf16.mxu0 0
    %2651 = vmatpush1.bf16.msra.mxu0 0
    %2652 = vmatprep.subr.bf16.mxu0 0
    %2653 = vmatpush1.bf16.msra.mxu0 0
    %2654 = vmatprep.subr.bf16.mxu0 0
    %2655 = vmatpush1.bf16.msra.mxu0 0
    %2656 = vmatprep.subr.bf16.mxu0 0
    %2657 = vmatpush1.bf16.msra.mxu0 0
    %2658 = vmatprep.mubr.bf16.mxu0 0
    %2659 = vmatmul.mubr.bf16.gmra.mrb[0].mxu0 %v2624
    %v2660 = vpop.f32.mrb[0].mxu0
    %v2661 = vadd.f32 0.0, %v2660
    %v2662 = vpop.f32.mrb[0].mxu0
    %v2663 = vpop.f32.mrb[0].mxu0
    %v2664 = vadd.f32 0.0, %v2663
    %v2665 = vpop.f32.mrb[0].mxu0
    %2666 = vdwg.mxu0
    %v2667 = vadd.f32 %v2603, %v2661
    %v2668 = vadd.f32 %v2604, %v2664
    %2669 = vrot.lane.b32.xlu0 %v2241, 112
    %v2670 = vpop.permute.xlu0 %2669
    %2671 = vrot.lane.b32.xlu0 %v2243, 112
    %v2672 = vpop.permute.xlu0 %2671
    %v2675 = vadd.f32 %v2237, %v2670
    %v2676 = vadd.f32 %v2239, %v2672
    %2677 = vrot.lane.b32.xlu0 %v2245, 96
    %v2678 = vpop.permute.xlu0 %2677
    %2679 = vrot.lane.b32.xlu0 %v2247, 96
    %v2680 = vpop.permute.xlu0 %2679
    %v2683 = vadd.f32 %v2675, %v2678
    %v2684 = vadd.f32 %v2676, %v2680
    %2685 = vrot.lane.b32.xlu0 %v2249, 80
    %v2686 = vpop.permute.xlu0 %2685
    %2687 = vrot.lane.b32.xlu0 %v2251, 80
    %v2688 = vpop.permute.xlu0 %2687
    %v2691 = vadd.f32 %v2683, %v2686
    %v2692 = vadd.f32 %v2684, %v2688
    %v2693 = vmul.f32 %v2691, 0.25
    %v2694 = vmul.f32 %v2692, 0.25
    %s2695 = scalar_lea.vmem [#allocation4], 16
    %2696 = vst.msk [vmem:[%s2695] sm:$0xff] %vm1519, %v2693
    %2697 = vst.msk [vmem:[%s2695 + $0x8] sm:$0xff] %vm1519, %v2694
    %v2698 = vpack.c.bf16 %v2667, %v2667
    %v2699 = vld [vmem:[%s8] sm:$0xf]
    %v2700 = vld [vmem:[%s8 + $0x4] sm:$0xf]
    %v2701 = vld [vmem:[%s8 + $0x8] sm:$0xf]
    %v2702 = vld [vmem:[%s8 + $0xc] sm:$0xf]
    %v2703 = vld [vmem:[%s8 + $0x10] sm:$0xf]
    %v2704 = vld [vmem:[%s8 + $0x14] sm:$0xf]
    %v2705 = vld [vmem:[%s8 + $0x18] sm:$0xf]
    %v2706 = vld [vmem:[%s8 + $0x1c] sm:$0xf]
    %v2707 = vld [vmem:[%s8 + $0x20] sm:$0xf]
    %v2708 = vld [vmem:[%s8 + $0x24] sm:$0xf]
    %v2709 = vld [vmem:[%s8 + $0x28] sm:$0xf]
    %v2710 = vld [vmem:[%s8 + $0x2c] sm:$0xf]
    %v2711 = vld [vmem:[%s8 + $0x30] sm:$0xf]
    %v2712 = vld [vmem:[%s8 + $0x34] sm:$0xf]
    %v2713 = vld [vmem:[%s8 + $0x38] sm:$0xf]
    %v2714 = vld [vmem:[%s8 + $0x3c] sm:$0xf]
    %v2715 = vpack.c.bf16 %v2668, %v2668
    %s2716 = scalar_lea.vmem %s8, 64
    %v2717 = vld [vmem:[%s2716] sm:$0xf]
    %v2718 = vld [vmem:[%s2716 + $0x4] sm:$0xf]
    %v2719 = vld [vmem:[%s2716 + $0x8] sm:$0xf]
    %v2720 = vld [vmem:[%s2716 + $0xc] sm:$0xf]
    %v2721 = vld [vmem:[%s2716 + $0x10] sm:$0xf]
    %v2722 = vld [vmem:[%s2716 + $0x14] sm:$0xf]
    %v2723 = vld [vmem:[%s2716 + $0x18] sm:$0xf]
    %v2724 = vld [vmem:[%s2716 + $0x1c] sm:$0xf]
    %v2725 = vld [vmem:[%s2716 + $0x20] sm:$0xf]
    %v2726 = vld [vmem:[%s2716 + $0x24] sm:$0xf]
    %v2727 = vld [vmem:[%s2716 + $0x28] sm:$0xf]
    %v2728 = vld [vmem:[%s2716 + $0x2c] sm:$0xf]
    %v2729 = vld [vmem:[%s2716 + $0x30] sm:$0xf]
    %v2730 = vld [vmem:[%s2716 + $0x34] sm:$0xf]
    %v2731 = vld [vmem:[%s2716 + $0x38] sm:$0xf]
    %v2732 = vld [vmem:[%s2716 + $0x3c] sm:$0xf]
    %v2749 = vunpack.c.l.b16 %v2717
    %v2750 = vunpack.c.l.b16 %v2718
    %v2751 = vunpack.c.l.b16 %v2719
    %v2752 = vunpack.c.l.b16 %v2720
    %v2753 = vunpack.c.l.b16 %v2721
    %v2754 = vunpack.c.l.b16 %v2722
    %v2755 = vunpack.c.l.b16 %v2723
    %v2756 = vunpack.c.l.b16 %v2724
    %v2757 = vunpack.c.l.b16 %v2725
    %v2758 = vunpack.c.l.b16 %v2726
    %v2759 = vunpack.c.l.b16 %v2727
    %v2760 = vunpack.c.l.b16 %v2728
    %v2761 = vunpack.c.l.b16 %v2729
    %v2762 = vunpack.c.l.b16 %v2730
    %v2763 = vunpack.c.l.b16 %v2731
    %v2764 = vunpack.c.l.b16 %v2732
    %v2765 = vpack.c.b16 %v2750, %v2749
    %v2766 = vpack.c.b16 %v2752, %v2751
    %v2767 = vpack.c.b16 %v2754, %v2753
    %v2768 = vpack.c.b16 %v2756, %v2755
    %v2769 = vpack.c.b16 %v2758, %v2757
    %v2770 = vpack.c.b16 %v2760, %v2759
    %v2771 = vpack.c.b16 %v2762, %v2761
    %v2772 = vpack.c.b16 %v2764, %v2763
    %2781 = vmatprep.subr.bf16.mxu0 0
    %2782 = vmatpush1.bf16.msra.mxu0 %v2765
    %2783 = vmatprep.subr.bf16.mxu0 0
    %2784 = vmatpush1.bf16.msra.mxu0 %v2766
    %2785 = vmatprep.subr.bf16.mxu0 0
    %2786 = vmatpush1.bf16.msra.mxu0 %v2767
    %2787 = vmatprep.subr.bf16.mxu0 0
    %2788 = vmatpush1.bf16.msra.mxu0 %v2768
    %2789 = vmatprep.subr.bf16.mxu0 0
    %2790 = vmatpush1.bf16.msra.mxu0 %v2769
    %2791 = vmatprep.subr.bf16.mxu0 0
    %2792 = vmatpush1.bf16.msra.mxu0 %v2770
    %2793 = vmatprep.subr.bf16.mxu0 0
    %2794 = vmatpush1.bf16.msra.mxu0 %v2771
    %2795 = vmatprep.subr.bf16.mxu0 0
    %2796 = vmatpush1.bf16.msra.mxu0 %v2772
    %2797 = vmatprep.subr.bf16.mxu0 0
    %2798 = vmatpush1.bf16.msra.mxu0 0
    %2799 = vmatprep.subr.bf16.mxu0 0
    %2800 = vmatpush1.bf16.msra.mxu0 0
    %2801 = vmatprep.subr.bf16.mxu0 0
    %2802 = vmatpush1.bf16.msra.mxu0 0
    %2803 = vmatprep.subr.bf16.mxu0 0
    %2804 = vmatpush1.bf16.msra.mxu0 0
    %2805 = vmatprep.subr.bf16.mxu0 0
    %2806 = vmatpush1.bf16.msra.mxu0 0
    %2807 = vmatprep.subr.bf16.mxu0 0
    %2808 = vmatpush1.bf16.msra.mxu0 0
    %2809 = vmatprep.subr.bf16.mxu0 0
    %2810 = vmatpush1.bf16.msra.mxu0 0
    %2811 = vmatprep.subr.bf16.mxu0 0
    %2812 = vmatpush1.bf16.msra.mxu0 0
    %2813 = vmatprep.mubr.bf16.mxu0 0
    %2814 = vmatmul.mubr.bf16.gmra.mrb[0].mxu0 %v2715
    %v2815 = vpop.f32.mrb[0].mxu0
    %v2816 = vadd.f32 0.0, %v2815
    %v2817 = vpop.f32.mrb[0].mxu0
    %v2818 = vpop.f32.mrb[0].mxu0
    %v2819 = vpop.f32.mrb[0].mxu0
    %2820 = vdwg.mxu0
    %v2837 = vunpack.c.l.b16 %v2699
    %v2838 = vunpack.c.l.b16 %v2700
    %v2839 = vunpack.c.l.b16 %v2701
    %v2840 = vunpack.c.l.b16 %v2702
    %v2841 = vunpack.c.l.b16 %v2703
    %v2842 = vunpack.c.l.b16 %v2704
    %v2843 = vunpack.c.l.b16 %v2705
    %v2844 = vunpack.c.l.b16 %v2706
    %v2845 = vunpack.c.l.b16 %v2707
    %v2846 = vunpack.c.l.b16 %v2708
    %v2847 = vunpack.c.l.b16 %v2709
    %v2848 = vunpack.c.l.b16 %v2710
    %v2849 = vunpack.c.l.b16 %v2711
    %v2850 = vunpack.c.l.b16 %v2712
    %v2851 = vunpack.c.l.b16 %v2713
    %v2852 = vunpack.c.l.b16 %v2714
    %v2853 = vpack.c.b16 %v2838, %v2837
    %v2854 = vpack.c.b16 %v2840, %v2839
    %v2855 = vpack.c.b16 %v2842, %v2841
    %v2856 = vpack.c.b16 %v2844, %v2843
    %v2857 = vpack.c.b16 %v2846, %v2845
    %v2858 = vpack.c.b16 %v2848, %v2847
    %v2859 = vpack.c.b16 %v2850, %v2849
    %v2860 = vpack.c.b16 %v2852, %v2851
    %2869 = vmatprep.subr.bf16.mxu0 0
    %2870 = vmatpush1.bf16.msra.mxu0 %v2853
    %2871 = vmatprep.subr.bf16.mxu0 0
    %2872 = vmatpush1.bf16.msra.mxu0 %v2854
    %2873 = vmatprep.subr.bf16.mxu0 0
    %2874 = vmatpush1.bf16.msra.mxu0 %v2855
    %2875 = vmatprep.subr.bf16.mxu0 0
    %2876 = vmatpush1.bf16.msra.mxu0 %v2856
    %2877 = vmatprep.subr.bf16.mxu0 0
    %2878 = vmatpush1.bf16.msra.mxu0 %v2857
    %2879 = vmatprep.subr.bf16.mxu0 0
    %2880 = vmatpush1.bf16.msra.mxu0 %v2858
    %2881 = vmatprep.subr.bf16.mxu0 0
    %2882 = vmatpush1.bf16.msra.mxu0 %v2859
    %2883 = vmatprep.subr.bf16.mxu0 0
    %2884 = vmatpush1.bf16.msra.mxu0 %v2860
    %2885 = vmatprep.subr.bf16.mxu0 0
    %2886 = vmatpush1.bf16.msra.mxu0 0
    %2887 = vmatprep.subr.bf16.mxu0 0
    %2888 = vmatpush1.bf16.msra.mxu0 0
    %2889 = vmatprep.subr.bf16.mxu0 0
    %2890 = vmatpush1.bf16.msra.mxu0 0
    %2891 = vmatprep.subr.bf16.mxu0 0
    %2892 = vmatpush1.bf16.msra.mxu0 0
    %2893 = vmatprep.subr.bf16.mxu0 0
    %2894 = vmatpush1.bf16.msra.mxu0 0
    %2895 = vmatprep.subr.bf16.mxu0 0
    %2896 = vmatpush1.bf16.msra.mxu0 0
    %2897 = vmatprep.subr.bf16.mxu0 0
    %2898 = vmatpush1.bf16.msra.mxu0 0
    %2899 = vmatprep.subr.bf16.mxu0 0
    %2900 = vmatpush1.bf16.msra.mxu0 0
    %2901 = vmatprep.mubr.bf16.mxu0 0
    %2902 = vmatmul.mubr.bf16.gmra.mrb[0].mxu0 %v2698
    %v2903 = vpop.f32.mrb[0].mxu0
    %v2904 = vadd.f32 %v2816, %v2903
    %v2905 = vpop.f32.mrb[0].mxu0
    %v2906 = vpop.f32.mrb[0].mxu0
    %v2907 = vpop.f32.mrb[0].mxu0
    %2908 = vdwg.mxu0
    %v2909 = vld [vmem:[%s12] sm:$0x3]
    %v2910 = vld [vmem:[%s9] sm:$0x1]
    %v2912 = vlaneseq
    %v2913 = vshrl.u32 %v2912, 7
    %v2914 = vsub.s32 0, %v2913
    %v2915 = vrot.slane %v2910, %v2914
    %vm2917 = vcmask 64512
    %v2919 = vsel %vm2917, %v2909, 0
    %2921 = vmatprep.subr.mxu0 0.0
    %2922 = vmatpush1.msra.mxu0 %v2904
    %2923 = vmatprep.subr.mxu0 0.0
    %2924 = vmatpush1.msra.mxu0 0.0
    %2925 = vmatprep.subr.mxu0 0.0
    %2926 = vmatpush1.msra.mxu0 0.0
    %2927 = vmatprep.subr.mxu0 0.0
    %2928 = vmatpush1.msra.mxu0 0.0
    %2929 = vmatprep.subr.mxu0 0.0
    %2930 = vmatpush1.msra.mxu0 0.0
    %2931 = vmatprep.subr.mxu0 0.0
    %2932 = vmatpush1.msra.mxu0 0.0
    %2933 = vmatprep.subr.mxu0 0.0
    %2934 = vmatpush1.msra.mxu0 0.0
    %2935 = vmatprep.subr.mxu0 0.0
    %2936 = vmatpush1.msra.mxu0 0.0
    %2937 = vmatprep.subr.mxu0 0.0
    %2938 = vmatpush1.msra.mxu0 0.0
    %2939 = vmatprep.subr.mxu0 0.0
    %2940 = vmatpush1.msra.mxu0 0.0
    %2941 = vmatprep.subr.mxu0 0.0
    %2942 = vmatpush1.msra.mxu0 0.0
    %2943 = vmatprep.subr.mxu0 0.0
    %2944 = vmatpush1.msra.mxu0 0.0
    %2945 = vmatprep.subr.mxu0 0.0
    %2946 = vmatpush1.msra.mxu0 0.0
    %2947 = vmatprep.subr.mxu0 0.0
    %2948 = vmatpush1.msra.mxu0 0.0
    %2949 = vmatprep.subr.mxu0 0.0
    %2950 = vmatpush1.msra.mxu0 0.0
    %2951 = vmatprep.subr.mxu0 0.0
    %2952 = vmatpush1.msra.mxu0 0.0
    %2953 = vmatprep.subr.mxu0 0.0
    %2954 = vmatpush1.msra.mxu0 0.0
    %2955 = vmatprep.subr.mxu0 0.0
    %2956 = vmatpush1.msra.mxu0 0.0
    %2957 = vmatprep.subr.mxu0 0.0
    %2958 = vmatpush1.msra.mxu0 0.0
    %2959 = vmatprep.subr.mxu0 0.0
    %2960 = vmatpush1.msra.mxu0 0.0
    %2961 = vmatprep.subr.mxu0 0.0
    %2962 = vmatpush1.msra.mxu0 0.0
    %2963 = vmatprep.subr.mxu0 0.0
    %2964 = vmatpush1.msra.mxu0 0.0
    %2965 = vmatprep.subr.mxu0 0.0
    %2966 = vmatpush1.msra.mxu0 0.0
    %2967 = vmatprep.subr.mxu0 0.0
    %2968 = vmatpush1.msra.mxu0 0.0
    %2969 = vmatprep.subr.mxu0 0.0
    %2970 = vmatpush1.msra.mxu0 0.0
    %2971 = vmatprep.subr.mxu0 0.0
    %2972 = vmatpush1.msra.mxu0 0.0
    %2973 = vmatprep.subr.mxu0 0.0
    %2974 = vmatpush1.msra.mxu0 0.0
    %2975 = vmatprep.subr.mxu0 0.0
    %2976 = vmatpush1.msra.mxu0 0.0
    %2977 = vmatprep.subr.mxu0 0.0
    %2978 = vmatpush1.msra.mxu0 0.0
    %2979 = vmatprep.subr.mxu0 0.0
    %2980 = vmatpush1.msra.mxu0 0.0
    %2981 = vmatprep.subr.mxu0 0.0
    %2982 = vmatpush1.msra.mxu0 0.0
    %2983 = vmatprep.subr.mxu0 0.0
    %2984 = vmatpush1.msra.mxu0 0.0
    %2985 = vmatprep.mubr.f32.mxu0 0.0
    %2986 = vmatmul.mubr.f32.gmra.mrb[0].mxu0 %v2919
    %v2987 = vpop.f32.mrb[0].mxu0
    %v2988 = vadd.f32 %v2915, %v2987
    %v2989 = vpop.f32.mrb[0].mxu0
    %2990 = vdwg.mxu0
    %v2991 = vmax.f32 %v2988, 0.0
    %v2992 = vld [vmem:[%s10] sm:$0x1]
    %v2994 = vlaneseq
    %v2995 = vshrl.u32 %v2994, 7
    %v2996 = vsub.s32 0, %v2995
    %v2997 = vrot.slane %v2992, %v2996
    %v2999 = vmul.f32 %v2991, %v2997
    %vm3000 = vcmask 1041408
    %v3001 = vsel %vm3000, %v2999, 0.0
    %3002 = vadd.xlane.f32.xlu0 %v3001
    %v3003 = vpop.xlane.xlu0 %3002
    %v3004 = vld [vmem:[#allocation3] sm:$0x1]
    %v3006 = vlaneseq
    %v3007 = vshrl.u32 %v3006, 7
    %v3008 = vsub.s32 0, %v3007
    %v3009 = vrot.slane %v3004, %v3008
    %v3011 = vadd.f32 %v3003, %v3009
    %vm3012 = vcmask 1024
    %3013 = vst.msk [vmem:[%s13] sm:$0x3] %vm3012, %v3011
    // Predicated region
    $region54: #{_vit_forward_device.1} parent=1 // pred_check
      _
    $region55: #{_vit_forward_device.1} parent=1 // pred_check_branch
      %3015 = sbr.rel (0) target = $region57
    $region56: #{_vit_forward_device.1} parent=1 // pred_region
      _
    $region57: #{_vit_forward_device.1} parent=1 // pred_fallthru
      _
    // Predicated region
    $region58: #{_vit_forward_device.1} parent=1 // pred_check
      _
    $region59: #{_vit_forward_device.1} parent=1 // pred_check_branch
      %3017 = sbr.rel (0) target = $region61
    $region60: #{_vit_forward_device.1} parent=1 // pred_region
      %s3019 = ssub.s32 512, 512
      %3020 = vsyncadd [#allocation5], %s3019
      %s3021 = sshll.u32 [#allocation4], 4
      %s3022 = int_to_ptr.vmem [resolvable:$true] %s3021
      %3027 = dma.vmem_to_hbm [thread:$0]  %s3022, 512, %s14, [#allocation5], 128, 128, 8
    $region61: #{_vit_forward_device.1} parent=1 // pred_fallthru
      _
    // Predicated region
    $region62: #{_vit_forward_device.1} parent=1 // pred_check
      _
    $region63: #{_vit_forward_device.1} parent=1 // pred_check_branch
      %3029 = sbr.rel (0) target = $region65
    $region64: #{_vit_forward_device.1} parent=1 // pred_region
      _
    $region65: #{_vit_forward_device.1} parent=1 // pred_fallthru
      _
    // Predicated region
    $region66: #{_vit_forward_device.1} parent=1 // pred_check
      _
    $region67: #{_vit_forward_device.1} parent=1 // pred_check_branch
      %3031 = sbr.rel (0) target = $region69
    $region68: #{_vit_forward_device.1} parent=1 // pred_region
      %3032 = dma.done [#allocation5], 512
    $region69: #{_vit_forward_device.1} parent=1 // pred_fallthru
      _
    %3033 = vsyncpa [#allocation5], 1

</llo_original>
